<compile_context>
chip_gen: v6e
topology: v6e:2x2x1
jax: 0.10.0
libtpu: 0.0.40
codegen_flags: <defaults>
</compile_context>

<pallas_src>
import math
import functools

import jax
import jax.numpy as jnp
from jax.experimental import pallas as pl
from jax.experimental.pallas import tpu as pltpu


# ---------------------------------------------------------------------------
# Pallas kernel: the full decoder stack.  One grid point = (batch row, layer).
# ---------------------------------------------------------------------------
def decoder_stack_kernel(
    x_ref, enc_ref, la_bias_ref, pad_bias_ref,
    wq1_ref, wk1_ref, wv1_ref, wo1_ref,
    wq2_ref, wk2_ref, wv2_ref, wo2_ref,
    ffw1_ref, ffb1_ref, ffw2_ref, ffb2_ref,
    g1_ref, b1_ref, g2_ref, b2_ref, g3_ref, b3_ref,
    out_ref,
    *, num_heads,
):
    layer = pl.program_id(1)

    # Seed the resident activation (the output block is the layer carry).
    @pl.when(layer == 0)
    def _():
        out_ref[...] = x_ref[...]

    x = out_ref[...]                    # (S, D)  fp32 carried activation
    enc = enc_ref[...]                  # (Se, D) fp32
    la_bias = la_bias_ref[...]          # (S, S)  additive bias (0 / -1e9)
    pad_bias = pad_bias_ref[...]        # (S, Se)

    S, D = x.shape
    Se = enc.shape[0]
    H = num_heads
    dk = D // H
    inv_sqrt_dk = 1.0 / math.sqrt(dk)

    def layernorm(y, g_ref, b_ref):
        # fp32 statistics (PyTorch nn.LayerNorm, eps=1e-5, biased variance).
        mu = jnp.mean(y, axis=-1, keepdims=True)
        var = jnp.mean(jnp.square(y - mu), axis=-1, keepdims=True)
        return (y - mu) * jax.lax.rsqrt(var + 1e-5) * g_ref[...] + b_ref[...]

    def split_heads(t):
        # (s_len, D) -> (H, s_len, dk): static lane slices + leading-dim stack.
        return jnp.stack([t[:, h * dk:(h + 1) * dk] for h in range(H)], axis=0)

    def mha(q_in, kv_in, wq_ref, wk_ref, wv_ref, wo_ref, bias):
        q_b = q_in.astype(jnp.bfloat16)
        kv_b = kv_in.astype(jnp.bfloat16)
        # QKV projections: bf16 operands, fp32 accumulation on the MXU.
        q = jnp.dot(q_b, wq_ref[...], preferred_element_type=jnp.float32)
        k = jnp.dot(kv_b, wk_ref[...], preferred_element_type=jnp.float32)
        v = jnp.dot(kv_b, wv_ref[...], preferred_element_type=jnp.float32)

        qh = split_heads(q).astype(jnp.bfloat16)    # (H, S,  dk)
        kh = split_heads(k).astype(jnp.bfloat16)    # (H, Sk, dk)
        vh = split_heads(v).astype(jnp.bfloat16)    # (H, Sk, dk)

        # One batched score matmul over all heads.
        scores = jnp.einsum('hqd,hkd->hqk', qh, kh,
                            preferred_element_type=jnp.float32) * inv_sqrt_dk
        scores = scores + bias[None, :, :]          # single hoisted broadcast
        # Numerically-stable softmax, fp32 (v5e-safe), EUP reciprocal.
        scores = scores - jnp.max(scores, axis=-1, keepdims=True)
        p = jnp.exp(scores)
        denom = jnp.sum(p, axis=-1, keepdims=True)
        p = p * pl.reciprocal(denom, approx=True)

        # One batched PV matmul over all heads.
        o = jnp.einsum('hqk,hkd->hqd', p.astype(jnp.bfloat16), vh,
                       preferred_element_type=jnp.float32)   # (H, S, dk)
        o = jnp.concatenate([o[h] for h in range(H)], axis=-1)  # (S, D)
        # Single output projection.
        return jnp.dot(o.astype(jnp.bfloat16), wo_ref[...],
                       preferred_element_type=jnp.float32)

    # --- masked self-attention + residual + LN1 ---
    attn1 = mha(x, x, wq1_ref, wk1_ref, wv1_ref, wo1_ref, la_bias)
    out1 = layernorm(x + attn1, g1_ref, b1_ref)

    # --- encoder-decoder attention + residual + LN2 ---
    attn2 = mha(out1, enc, wq2_ref, wk2_ref, wv2_ref, wo2_ref, pad_bias)
    out2 = layernorm(out1 + attn2, g2_ref, b2_ref)

    # --- position-wise feed-forward + residual + LN3 ---
    h1 = jnp.dot(out2.astype(jnp.bfloat16), ffw1_ref[...],
                 preferred_element_type=jnp.float32) + ffb1_ref[...]
    h1 = jnp.maximum(h1, 0.0)
    ffn = jnp.dot(h1.astype(jnp.bfloat16), ffw2_ref[...],
                  preferred_element_type=jnp.float32) + ffb2_ref[...]
    out3 = layernorm(out2 + ffn, g3_ref, b3_ref)

    # Write the carry back; DMA'd to HBM only when the batch block changes.
    out_ref[...] = out3.astype(out_ref.dtype)


# Names of the stacked per-layer parameters, in kernel argument order.
_PARAM_NAMES = ["wq1", "wk1", "wv1", "wo1", "wq2", "wk2", "wv2", "wo2",
                "ffw1", "ffb1", "ffw2", "ffb2",
                "g1", "b1", "g2", "b2", "g3", "b3"]


def decoder_stack_pallas(x, enc, la_bias, pad_bias, params, num_heads):
    """x: (B, S, D) fp32; enc: (B, Se, D) fp32; biases additive (S,S)/(S,Se)."""
    B, S, D = x.shape
    Se = enc.shape[1]
    L = params["wq1"].shape[0]

    # Activation / encoder-output / output: block index depends only on b, so
    # they stay VMEM-resident across the whole layer axis.
    act_spec = pl.BlockSpec((None, S, D), lambda b, l: (b, 0, 0))
    enc_spec = pl.BlockSpec((None, Se, D), lambda b, l: (b, 0, 0))
    la_spec = pl.BlockSpec((S, S), lambda b, l: (0, 0))
    pad_spec = pl.BlockSpec((S, Se), lambda b, l: (0, 0))

    def weight_spec(arr):
        _, r, c = arr.shape
        return pl.BlockSpec((None, r, c), lambda b, l: (l, 0, 0))

    weight_arrays = [params[n] for n in _PARAM_NAMES]
    weight_specs = [weight_spec(a) for a in weight_arrays]

    kernel = functools.partial(decoder_stack_kernel, num_heads=num_heads)
    return pl.pallas_call(
        kernel,
        out_shape=jax.ShapeDtypeStruct((B, S, D), jnp.float32),
        grid=(B, L),
        in_specs=[act_spec, enc_spec, la_spec, pad_spec] + weight_specs,
        out_specs=pl.BlockSpec((None, S, D), lambda b, l: (b, 0, 0)),
        compiler_params=pltpu.CompilerParams(
            # batch axis can split across TensorCores (v7x); layer axis is a
            # sequential carry.  NOTE: at realistic sizes budget VMEM against
            # 64 MiB (v7x) via vmem_limit_bytes; trivially small here.
            dimension_semantics=("parallel", "arbitrary")),
    )(x, enc, la_bias, pad_bias, *weight_arrays)


# ---------------------------------------------------------------------------
# Plain-JAX glue: parameters, embedding, positional encoding
# ---------------------------------------------------------------------------
def make_positional_encoding(max_length, d_model):
    pos = jnp.arange(max_length, dtype=jnp.float32)[:, None]
    div = jnp.exp(jnp.arange(0, d_model, 2, dtype=jnp.float32)
                  * (-math.log(10000.0) / d_model))
    ang = pos * div
    pe = jnp.zeros((max_length, d_model), jnp.float32)
    pe = pe.at[:, 0::2].set(jnp.sin(ang))
    pe = pe.at[:, 1::2].set(jnp.cos(ang))
    return pe


def init_decoder_params(key, num_layers, d_model, dff):
    """Per-layer weights stacked along a leading L axis.

    Linear weights stored as (in_features, out_features): y = x @ W + b
    (equivalent to nn.Linear with a transposed, synthetic init).
    MXU weight operands are cast to bf16 once here (fp32 accumulation in-kernel).
    """
    ks = jax.random.split(key, 10)
    w = lambda k, sh: jax.random.normal(k, sh, jnp.float32) * 0.05
    L = num_layers
    p = {
        "wq1": w(ks[0], (L, d_model, d_model)),
        "wk1": w(ks[1], (L, d_model, d_model)),
        "wv1": w(ks[2], (L, d_model, d_model)),
        "wo1": w(ks[3], (L, d_model, d_model)),
        "wq2": w(ks[4], (L, d_model, d_model)),
        "wk2": w(ks[5], (L, d_model, d_model)),
        "wv2": w(ks[6], (L, d_model, d_model)),
        "wo2": w(ks[7], (L, d_model, d_model)),
        "ffw1": w(ks[8], (L, d_model, dff)),
        "ffb1": jnp.zeros((L, 1, dff), jnp.float32),
        "ffw2": w(ks[9], (L, dff, d_model)),
        "ffb2": jnp.zeros((L, 1, d_model), jnp.float32),
        "g1": jnp.ones((L, 1, d_model), jnp.float32),
        "b1": jnp.zeros((L, 1, d_model), jnp.float32),
        "g2": jnp.ones((L, 1, d_model), jnp.float32),
        "b2": jnp.zeros((L, 1, d_model), jnp.float32),
        "g3": jnp.ones((L, 1, d_model), jnp.float32),
        "b3": jnp.zeros((L, 1, d_model), jnp.float32),
    }
    for n in ["wq1", "wk1", "wv1", "wo1", "wq2", "wk2", "wv2", "wo2",
              "ffw1", "ffw2"]:
        p[n] = p[n].astype(jnp.bfloat16)
    return p


def decoder_forward(tokens, enc_output, embedding, pe, params,
                    look_ahead_mask, padding_mask, *, num_heads):
    d_model = embedding.shape[1]
    seq_len = tokens.shape[1]
    x = embedding[tokens] * math.sqrt(d_model)          # (B, S, D)
    x = x + pe[:seq_len][None, :, :]                    # positional encoding
    # dropout: identity in eval mode
    # Convert 1/0 keep-masks to additive biases once (0 keep, -1e9 masked).
    la_bias = (look_ahead_mask - 1.0) * 1e9
    pad_bias = (padding_mask - 1.0) * 1e9
    return decoder_stack_pallas(x, enc_output, la_bias, pad_bias,
                                params, num_heads)


# ---------------------------------------------------------------------------
if __name__ == "__main__":
    vocab_size = 50
    d_model = 32
    num_layers = 2
    num_heads = 4
    dff = 64
    max_length = 64
    B, S_dec, S_enc = 2, 8, 8

    key = jax.random.PRNGKey(0)
    k_emb, k_tok, k_enc, k_layers = jax.random.split(key, 4)

    embedding = jax.random.normal(k_emb, (vocab_size, d_model), jnp.float32) * 0.05
    pe = make_positional_encoding(max_length, d_model)
    params = init_decoder_params(k_layers, num_layers, d_model, dff)

    tokens = jax.random.randint(k_tok, (B, S_dec), 0, vocab_size, dtype=jnp.int32)
    enc_output = jax.random.normal(k_enc, (B, S_enc, d_model), jnp.float32)

    # masks: causal look-ahead mask (1 = keep, 0 = mask), all-ones padding mask
    look_ahead_mask = jnp.tril(jnp.ones((S_dec, S_dec), jnp.float32))
    padding_mask = jnp.ones((S_dec, S_enc), jnp.float32)

    fwd = jax.jit(functools.partial(decoder_forward, num_heads=num_heads))
    out = fwd(tokens, enc_output, embedding, pe, params,
              look_ahead_mask, padding_mask)
    out = jax.block_until_ready(out)
    assert out.shape == (B, S_dec, d_model)
    assert bool(jnp.all(jnp.isfinite(out)))
    print("KERNEL_OK")
</pallas_src>

<mosaic_0001>
module attributes {stable_mosaic.version = 11 : i64} {
  func.func @decoder_stack_kernel(%arg0: i32, %arg1: i32, %arg2: memref<1x8x32xf32, #tpu.memory_space<vmem>>, %arg3: memref<1x8x32xf32, #tpu.memory_space<vmem>>, %arg4: memref<8x8xf32, #tpu.memory_space<vmem>>, %arg5: memref<8x8xf32, #tpu.memory_space<vmem>>, %arg6: memref<1x32x32xbf16, #tpu.memory_space<vmem>>, %arg7: memref<1x32x32xbf16, #tpu.memory_space<vmem>>, %arg8: memref<1x32x32xbf16, #tpu.memory_space<vmem>>, %arg9: memref<1x32x32xbf16, #tpu.memory_space<vmem>>, %arg10: memref<1x32x32xbf16, #tpu.memory_space<vmem>>, %arg11: memref<1x32x32xbf16, #tpu.memory_space<vmem>>, %arg12: memref<1x32x32xbf16, #tpu.memory_space<vmem>>, %arg13: memref<1x32x32xbf16, #tpu.memory_space<vmem>>, %arg14: memref<1x32x64xbf16, #tpu.memory_space<vmem>>, %arg15: memref<1x1x64xf32, #tpu.memory_space<vmem>>, %arg16: memref<1x64x32xbf16, #tpu.memory_space<vmem>>, %arg17: memref<1x1x32xf32, #tpu.memory_space<vmem>>, %arg18: memref<1x1x32xf32, #tpu.memory_space<vmem>>, %arg19: memref<1x1x32xf32, #tpu.memory_space<vmem>>, %arg20: memref<1x1x32xf32, #tpu.memory_space<vmem>>, %arg21: memref<1x1x32xf32, #tpu.memory_space<vmem>>, %arg22: memref<1x1x32xf32, #tpu.memory_space<vmem>>, %arg23: memref<1x1x32xf32, #tpu.memory_space<vmem>>, %arg24: memref<1x8x32xf32, #tpu.memory_space<vmem>>) attributes {dimension_semantics = [#tpu.dimension_semantics<parallel>, #tpu.dimension_semantics<arbitrary>], iteration_bounds = array<i64: 2, 2>, scalar_prefetch = 0 : i64, scratch_operands = 0 : i64, tpu.core_type = #tpu.core_type<tc>, window_params = [{transform_indices = @transform_0, window_bounds = array<i64: 1, 8, 32>}, {transform_indices = @transform_1, window_bounds = array<i64: 1, 8, 32>}, {pipeline_mode = #tpu.pipeline_mode<synchronous>, transform_indices = @transform_2, window_bounds = array<i64: 8, 8>}, {pipeline_mode = #tpu.pipeline_mode<synchronous>, transform_indices = @transform_3, window_bounds = array<i64: 8, 8>}, {transform_indices = @transform_4, window_bounds = array<i64: 1, 32, 32>}, {transform_indices = @transform_5, window_bounds = array<i64: 1, 32, 32>}, {transform_indices = @transform_6, window_bounds = array<i64: 1, 32, 32>}, {transform_indices = @transform_7, window_bounds = array<i64: 1, 32, 32>}, {transform_indices = @transform_8, window_bounds = array<i64: 1, 32, 32>}, {transform_indices = @transform_9, window_bounds = array<i64: 1, 32, 32>}, {transform_indices = @transform_10, window_bounds = array<i64: 1, 32, 32>}, {transform_indices = @transform_11, window_bounds = array<i64: 1, 32, 32>}, {transform_indices = @transform_12, window_bounds = array<i64: 1, 32, 64>}, {transform_indices = @transform_13, window_bounds = array<i64: 1, 1, 64>}, {transform_indices = @transform_14, window_bounds = array<i64: 1, 64, 32>}, {transform_indices = @transform_15, window_bounds = array<i64: 1, 1, 32>}, {transform_indices = @transform_16, window_bounds = array<i64: 1, 1, 32>}, {transform_indices = @transform_17, window_bounds = array<i64: 1, 1, 32>}, {transform_indices = @transform_18, window_bounds = array<i64: 1, 1, 32>}, {transform_indices = @transform_19, window_bounds = array<i64: 1, 1, 32>}, {transform_indices = @transform_20, window_bounds = array<i64: 1, 1, 32>}, {transform_indices = @transform_21, window_bounds = array<i64: 1, 1, 32>}, {transform_indices = @transform_22, window_bounds = array<i64: 1, 8, 32>}]} {
    %c0_i32 = arith.constant 0 : i32
    %0 = arith.cmpi eq, %arg1, %c0_i32 : i32
    %1 = arith.extui %0 : i1 to i32
    %c0_i32_0 = arith.constant 0 : i32
    %2 = arith.cmpi ne, %1, %c0_i32_0 : i32
    scf.if %2 {
      %c0_102 = arith.constant 0 : index
      %c0_103 = arith.constant 0 : index
      %c0_104 = arith.constant 0 : index
      %255 = vector.load %arg2[%c0_102, %c0_103, %c0_104] : memref<1x8x32xf32, #tpu.memory_space<vmem>>, vector<1x8x32xf32>
      %256 = vector.shape_cast %255 : vector<1x8x32xf32> to vector<8x32xf32>
      %c0_105 = arith.constant 0 : index
      %c0_106 = arith.constant 0 : index
      %c0_107 = arith.constant 0 : index
      %257 = vector.load %arg24[%c0_105, %c0_106, %c0_107] : memref<1x8x32xf32, #tpu.memory_space<vmem>>, vector<1x8x32xf32>
      %258 = vector.shape_cast %257 : vector<1x8x32xf32> to vector<8x32xf32>
      %259 = vector.shape_cast %256 : vector<8x32xf32> to vector<1x8x32xf32>
      tpu.vector_store %arg24[%c0_105, %c0_106, %c0_107], %259 {strides = array<i32>} : memref<1x8x32xf32, #tpu.memory_space<vmem>>, vector<1x8x32xf32>,
    } else {
    }
    %c0 = arith.constant 0 : index
    %c0_1 = arith.constant 0 : index
    %c0_2 = arith.constant 0 : index
    %3 = vector.load %arg24[%c0, %c0_1, %c0_2] : memref<1x8x32xf32, #tpu.memory_space<vmem>>, vector<1x8x32xf32>
    %4 = vector.shape_cast %3 : vector<1x8x32xf32> to vector<8x32xf32>
    %c0_3 = arith.constant 0 : index
    %c0_4 = arith.constant 0 : index
    %c0_5 = arith.constant 0 : index
    %5 = vector.load %arg3[%c0_3, %c0_4, %c0_5] : memref<1x8x32xf32, #tpu.memory_space<vmem>>, vector<1x8x32xf32>
    %6 = vector.shape_cast %5 : vector<1x8x32xf32> to vector<8x32xf32>
    %c0_6 = arith.constant 0 : index
    %c0_7 = arith.constant 0 : index
    %7 = vector.load %arg4[%c0_6, %c0_7] : memref<8x8xf32, #tpu.memory_space<vmem>>, vector<8x8xf32>
    %c0_8 = arith.constant 0 : index
    %c0_9 = arith.constant 0 : index
    %8 = vector.load %arg5[%c0_8, %c0_9] : memref<8x8xf32, #tpu.memory_space<vmem>>, vector<8x8xf32>
    %9 = arith.truncf %4 : vector<8x32xf32> to vector<8x32xbf16>
    %10 = arith.truncf %4 : vector<8x32xf32> to vector<8x32xbf16>
    %c0_10 = arith.constant 0 : index
    %c0_11 = arith.constant 0 : index
    %c0_12 = arith.constant 0 : index
    %11 = vector.load %arg6[%c0_10, %c0_11, %c0_12] : memref<1x32x32xbf16, #tpu.memory_space<vmem>>, vector<1x32x32xbf16>
    %12 = vector.shape_cast %11 : vector<1x32x32xbf16> to vector<32x32xbf16>
    %cst = arith.constant dense<0.000000e+00> : vector<8x32xf32>
    %13 = tpu.matmul %9, %12, %cst {dimension_numbers = #tpu.dot_dimension_numbers<[1], [0], [0], [1], [0, 0, 1, 1], [], []>} : vector<8x32xbf16>, vector<32x32xbf16>, vector<8x32xf32> -> vector<8x32xf32>
    %c0_13 = arith.constant 0 : index
    %c0_14 = arith.constant 0 : index
    %c0_15 = arith.constant 0 : index
    %14 = vector.load %arg7[%c0_13, %c0_14, %c0_15] : memref<1x32x32xbf16, #tpu.memory_space<vmem>>, vector<1x32x32xbf16>
    %15 = vector.shape_cast %14 : vector<1x32x32xbf16> to vector<32x32xbf16>
    %cst_16 = arith.constant dense<0.000000e+00> : vector<8x32xf32>
    %16 = tpu.matmul %10, %15, %cst_16 {dimension_numbers = #tpu.dot_dimension_numbers<[1], [0], [0], [1], [0, 0, 1, 1], [], []>} : vector<8x32xbf16>, vector<32x32xbf16>, vector<8x32xf32> -> vector<8x32xf32>
    %c0_17 = arith.constant 0 : index
    %c0_18 = arith.constant 0 : index
    %c0_19 = arith.constant 0 : index
    %17 = vector.load %arg8[%c0_17, %c0_18, %c0_19] : memref<1x32x32xbf16, #tpu.memory_space<vmem>>, vector<1x32x32xbf16>
    %18 = vector.shape_cast %17 : vector<1x32x32xbf16> to vector<32x32xbf16>
    %cst_20 = arith.constant dense<0.000000e+00> : vector<8x32xf32>
    %19 = tpu.matmul %10, %18, %cst_20 {dimension_numbers = #tpu.dot_dimension_numbers<[1], [0], [0], [1], [0, 0, 1, 1], [], []>} : vector<8x32xbf16>, vector<32x32xbf16>, vector<8x32xf32> -> vector<8x32xf32>
    %20 = vector.extract_strided_slice %13 {offsets = [0, 0], sizes = [8, 8], strides = [1, 1]} : vector<8x32xf32> to vector<8x8xf32>
    %21 = vector.extract_strided_slice %13 {offsets = [0, 8], sizes = [8, 8], strides = [1, 1]} : vector<8x32xf32> to vector<8x8xf32>
    %22 = vector.extract_strided_slice %13 {offsets = [0, 16], sizes = [8, 8], strides = [1, 1]} : vector<8x32xf32> to vector<8x8xf32>
    %23 = vector.extract_strided_slice %13 {offsets = [0, 24], sizes = [8, 8], strides = [1, 1]} : vector<8x32xf32> to vector<8x8xf32>
    %24 = vector.shape_cast %20 : vector<8x8xf32> to vector<1x8x8xf32>
    %25 = vector.shape_cast %21 : vector<8x8xf32> to vector<1x8x8xf32>
    %26 = vector.shape_cast %22 : vector<8x8xf32> to vector<1x8x8xf32>
    %27 = vector.shape_cast %23 : vector<8x8xf32> to vector<1x8x8xf32>
    %28 = tpu.concatenate %24, %25, %26, %27 in 0 : vector<1x8x8xf32>, vector<1x8x8xf32>, vector<1x8x8xf32>, vector<1x8x8xf32> -> vector<4x8x8xf32>
    %29 = arith.truncf %28 : vector<4x8x8xf32> to vector<4x8x8xbf16>
    %30 = vector.extract_strided_slice %16 {offsets = [0, 0], sizes = [8, 8], strides = [1, 1]} : vector<8x32xf32> to vector<8x8xf32>
    %31 = vector.extract_strided_slice %16 {offsets = [0, 8], sizes = [8, 8], strides = [1, 1]} : vector<8x32xf32> to vector<8x8xf32>
    %32 = vector.extract_strided_slice %16 {offsets = [0, 16], sizes = [8, 8], strides = [1, 1]} : vector<8x32xf32> to vector<8x8xf32>
    %33 = vector.extract_strided_slice %16 {offsets = [0, 24], sizes = [8, 8], strides = [1, 1]} : vector<8x32xf32> to vector<8x8xf32>
    %34 = vector.shape_cast %30 : vector<8x8xf32> to vector<1x8x8xf32>
    %35 = vector.shape_cast %31 : vector<8x8xf32> to vector<1x8x8xf32>
    %36 = vector.shape_cast %32 : vector<8x8xf32> to vector<1x8x8xf32>
    %37 = vector.shape_cast %33 : vector<8x8xf32> to vector<1x8x8xf32>
    %38 = tpu.concatenate %34, %35, %36, %37 in 0 : vector<1x8x8xf32>, vector<1x8x8xf32>, vector<1x8x8xf32>, vector<1x8x8xf32> -> vector<4x8x8xf32>
    %39 = arith.truncf %38 : vector<4x8x8xf32> to vector<4x8x8xbf16>
    %40 = vector.extract_strided_slice %19 {offsets = [0, 0], sizes = [8, 8], strides = [1, 1]} : vector<8x32xf32> to vector<8x8xf32>
    %41 = vector.extract_strided_slice %19 {offsets = [0, 8], sizes = [8, 8], strides = [1, 1]} : vector<8x32xf32> to vector<8x8xf32>
    %42 = vector.extract_strided_slice %19 {offsets = [0, 16], sizes = [8, 8], strides = [1, 1]} : vector<8x32xf32> to vector<8x8xf32>
    %43 = vector.extract_strided_slice %19 {offsets = [0, 24], sizes = [8, 8], strides = [1, 1]} : vector<8x32xf32> to vector<8x8xf32>
    %44 = vector.shape_cast %40 : vector<8x8xf32> to vector<1x8x8xf32>
    %45 = vector.shape_cast %41 : vector<8x8xf32> to vector<1x8x8xf32>
    %46 = vector.shape_cast %42 : vector<8x8xf32> to vector<1x8x8xf32>
    %47 = vector.shape_cast %43 : vector<8x8xf32> to vector<1x8x8xf32>
    %48 = tpu.concatenate %44, %45, %46, %47 in 0 : vector<1x8x8xf32>, vector<1x8x8xf32>, vector<1x8x8xf32>, vector<1x8x8xf32> -> vector<4x8x8xf32>
    %49 = arith.truncf %48 : vector<4x8x8xf32> to vector<4x8x8xbf16>
    "tpu.trace_start"() <{level = 10 : i32, message = "hqd,hkd->hqk"}> : () -> ()
    %cst_21 = arith.constant dense<0.000000e+00> : vector<4x8x8xf32>
    %50 = tpu.matmul %29, %39, %cst_21 {dimension_numbers = #tpu.dot_dimension_numbers<[2], [2], [1], [1], [0, 0, 0, 1, 1, 1], [0], [0]>} : vector<4x8x8xbf16>, vector<4x8x8xbf16>, vector<4x8x8xf32> -> vector<4x8x8xf32>
    "tpu.trace_stop"() : () -> ()
    %cst_22 = arith.constant 0.353553385 : f32
    %51 = vector.broadcast %cst_22 : f32 to vector<4x8x8xf32>
    %52 = arith.mulf %50, %51 : vector<4x8x8xf32>
    %53 = vector.shape_cast %7 : vector<8x8xf32> to vector<1x8x8xf32>
    %54 = vector.broadcast %53 : vector<1x8x8xf32> to vector<4x8x8xf32>
    %55 = arith.addf %52, %54 : vector<4x8x8xf32>
    %cst_23 = arith.constant dense<0xFF800000> : vector<4x8xf32>
    %56 = vector.multi_reduction <maximumf>, %55, %cst_23 [2] : vector<4x8x8xf32> to vector<4x8xf32>
    %57 = vector.shape_cast %56 : vector<4x8xf32> to vector<4x8x1xf32>
    %58 = vector.broadcast %57 : vector<4x8x1xf32> to vector<4x8x8xf32>
    %59 = arith.subf %55, %58 : vector<4x8x8xf32>
    %60 = math.exp %59 : vector<4x8x8xf32>
    %cst_24 = arith.constant dense<0.000000e+00> : vector<4x8xf32>
    %61 = vector.multi_reduction <add>, %60, %cst_24 [2] : vector<4x8x8xf32> to vector<4x8xf32>
    %62 = vector.shape_cast %61 : vector<4x8xf32> to vector<4x8x1xf32>
    %63 = tpu.reciprocal %62 {approx = true} : vector<4x8x1xf32> -> vector<4x8x1xf32>
    %64 = vector.broadcast %63 : vector<4x8x1xf32> to vector<4x8x8xf32>
    %65 = arith.mulf %60, %64 : vector<4x8x8xf32>
    %66 = arith.truncf %65 : vector<4x8x8xf32> to vector<4x8x8xbf16>
    "tpu.trace_start"() <{level = 10 : i32, message = "hqk,hkd->hqd"}> : () -> ()
    %cst_25 = arith.constant dense<0.000000e+00> : vector<4x8x8xf32>
    %67 = tpu.matmul %66, %49, %cst_25 {dimension_numbers = #tpu.dot_dimension_numbers<[2], [1], [1], [2], [0, 0, 0, 1, 1, 2], [0], [0]>} : vector<4x8x8xbf16>, vector<4x8x8xbf16>, vector<4x8x8xf32> -> vector<4x8x8xf32>
    "tpu.trace_stop"() : () -> ()
    %68 = vector.extract_strided_slice %67 {offsets = [0, 0, 0], sizes = [1, 8, 8], strides = [1, 1, 1]} : vector<4x8x8xf32> to vector<1x8x8xf32>
    %69 = vector.shape_cast %68 : vector<1x8x8xf32> to vector<8x8xf32>
    %70 = vector.extract_strided_slice %67 {offsets = [1, 0, 0], sizes = [1, 8, 8], strides = [1, 1, 1]} : vector<4x8x8xf32> to vector<1x8x8xf32>
    %71 = vector.shape_cast %70 : vector<1x8x8xf32> to vector<8x8xf32>
    %72 = vector.extract_strided_slice %67 {offsets = [2, 0, 0], sizes = [1, 8, 8], strides = [1, 1, 1]} : vector<4x8x8xf32> to vector<1x8x8xf32>
    %73 = vector.shape_cast %72 : vector<1x8x8xf32> to vector<8x8xf32>
    %74 = vector.extract_strided_slice %67 {offsets = [3, 0, 0], sizes = [1, 8, 8], strides = [1, 1, 1]} : vector<4x8x8xf32> to vector<1x8x8xf32>
    %75 = vector.shape_cast %74 : vector<1x8x8xf32> to vector<8x8xf32>
    %76 = tpu.concatenate %69, %71, %73, %75 in 1 : vector<8x8xf32>, vector<8x8xf32>, vector<8x8xf32>, vector<8x8xf32> -> vector<8x32xf32>
    %77 = arith.truncf %76 : vector<8x32xf32> to vector<8x32xbf16>
    %c0_26 = arith.constant 0 : index
    %c0_27 = arith.constant 0 : index
    %c0_28 = arith.constant 0 : index
    %78 = vector.load %arg9[%c0_26, %c0_27, %c0_28] : memref<1x32x32xbf16, #tpu.memory_space<vmem>>, vector<1x32x32xbf16>
    %79 = vector.shape_cast %78 : vector<1x32x32xbf16> to vector<32x32xbf16>
    %cst_29 = arith.constant dense<0.000000e+00> : vector<8x32xf32>
    %80 = tpu.matmul %77, %79, %cst_29 {dimension_numbers = #tpu.dot_dimension_numbers<[1], [0], [0], [1], [0, 0, 1, 1], [], []>} : vector<8x32xbf16>, vector<32x32xbf16>, vector<8x32xf32> -> vector<8x32xf32>
    %81 = arith.addf %4, %80 : vector<8x32xf32>
    %cst_30 = arith.constant dense<0.000000e+00> : vector<8xf32>
    %82 = vector.multi_reduction <add>, %81, %cst_30 [1] : vector<8x32xf32> to vector<8xf32>
    %83 = vector.shape_cast %82 : vector<8xf32> to vector<8x1xf32>
    %cst_31 = arith.constant 3.200000e+01 : f32
    %84 = vector.broadcast %cst_31 : f32 to vector<8x1xf32>
    %85 = arith.divf %83, %84 : vector<8x1xf32>
    %86 = vector.broadcast %85 : vector<8x1xf32> to vector<8x32xf32>
    %87 = arith.subf %81, %86 : vector<8x32xf32>
    %88 = arith.mulf %87, %87 : vector<8x32xf32>
    %cst_32 = arith.constant dense<0.000000e+00> : vector<8xf32>
    %89 = vector.multi_reduction <add>, %88, %cst_32 [1] : vector<8x32xf32> to vector<8xf32>
    %90 = vector.shape_cast %89 : vector<8xf32> to vector<8x1xf32>
    %cst_33 = arith.constant 3.200000e+01 : f32
    %91 = vector.broadcast %cst_33 : f32 to vector<8x1xf32>
    %92 = arith.divf %90, %91 : vector<8x1xf32>
    %93 = vector.broadcast %85 : vector<8x1xf32> to vector<8x32xf32>
    %94 = arith.subf %81, %93 : vector<8x32xf32>
    %cst_34 = arith.constant 9.99999974E-6 : f32
    %95 = vector.broadcast %cst_34 : f32 to vector<8x1xf32>
    %96 = arith.addf %92, %95 : vector<8x1xf32>
    %97 = math.rsqrt %96 : vector<8x1xf32>
    %98 = vector.broadcast %97 : vector<8x1xf32> to vector<8x32xf32>
    %99 = arith.mulf %94, %98 : vector<8x32xf32>
    %c0_35 = arith.constant 0 : index
    %c0_36 = arith.constant 0 : index
    %c0_37 = arith.constant 0 : index
    %100 = vector.load %arg18[%c0_35, %c0_36, %c0_37] : memref<1x1x32xf32, #tpu.memory_space<vmem>>, vector<1x1x32xf32>
    %101 = vector.shape_cast %100 : vector<1x1x32xf32> to vector<1x32xf32>
    %102 = vector.broadcast %101 : vector<1x32xf32> to vector<8x32xf32>
    %103 = arith.mulf %99, %102 : vector<8x32xf32>
    %c0_38 = arith.constant 0 : index
    %c0_39 = arith.constant 0 : index
    %c0_40 = arith.constant 0 : index
    %104 = vector.load %arg19[%c0_38, %c0_39, %c0_40] : memref<1x1x32xf32, #tpu.memory_space<vmem>>, vector<1x1x32xf32>
    %105 = vector.shape_cast %104 : vector<1x1x32xf32> to vector<1x32xf32>
    %106 = vector.broadcast %105 : vector<1x32xf32> to vector<8x32xf32>
    %107 = arith.addf %103, %106 : vector<8x32xf32>
    %108 = arith.truncf %107 : vector<8x32xf32> to vector<8x32xbf16>
    %109 = arith.truncf %6 : vector<8x32xf32> to vector<8x32xbf16>
    %c0_41 = arith.constant 0 : index
    %c0_42 = arith.constant 0 : index
    %c0_43 = arith.constant 0 : index
    %110 = vector.load %arg10[%c0_41, %c0_42, %c0_43] : memref<1x32x32xbf16, #tpu.memory_space<vmem>>, vector<1x32x32xbf16>
    %111 = vector.shape_cast %110 : vector<1x32x32xbf16> to vector<32x32xbf16>
    %cst_44 = arith.constant dense<0.000000e+00> : vector<8x32xf32>
    %112 = tpu.matmul %108, %111, %cst_44 {dimension_numbers = #tpu.dot_dimension_numbers<[1], [0], [0], [1], [0, 0, 1, 1], [], []>} : vector<8x32xbf16>, vector<32x32xbf16>, vector<8x32xf32> -> vector<8x32xf32>
    %c0_45 = arith.constant 0 : index
    %c0_46 = arith.constant 0 : index
    %c0_47 = arith.constant 0 : index
    %113 = vector.load %arg11[%c0_45, %c0_46, %c0_47] : memref<1x32x32xbf16, #tpu.memory_space<vmem>>, vector<1x32x32xbf16>
    %114 = vector.shape_cast %113 : vector<1x32x32xbf16> to vector<32x32xbf16>
    %cst_48 = arith.constant dense<0.000000e+00> : vector<8x32xf32>
    %115 = tpu.matmul %109, %114, %cst_48 {dimension_numbers = #tpu.dot_dimension_numbers<[1], [0], [0], [1], [0, 0, 1, 1], [], []>} : vector<8x32xbf16>, vector<32x32xbf16>, vector<8x32xf32> -> vector<8x32xf32>
    %c0_49 = arith.constant 0 : index
    %c0_50 = arith.constant 0 : index
    %c0_51 = arith.constant 0 : index
    %116 = vector.load %arg12[%c0_49, %c0_50, %c0_51] : memref<1x32x32xbf16, #tpu.memory_space<vmem>>, vector<1x32x32xbf16>
    %117 = vector.shape_cast %116 : vector<1x32x32xbf16> to vector<32x32xbf16>
    %cst_52 = arith.constant dense<0.000000e+00> : vector<8x32xf32>
    %118 = tpu.matmul %109, %117, %cst_52 {dimension_numbers = #tpu.dot_dimension_numbers<[1], [0], [0], [1], [0, 0, 1, 1], [], []>} : vector<8x32xbf16>, vector<32x32xbf16>, vector<8x32xf32> -> vector<8x32xf32>
    %119 = vector.extract_strided_slice %112 {offsets = [0, 0], sizes = [8, 8], strides = [1, 1]} : vector<8x32xf32> to vector<8x8xf32>
    %120 = vector.extract_strided_slice %112 {offsets = [0, 8], sizes = [8, 8], strides = [1, 1]} : vector<8x32xf32> to vector<8x8xf32>
    %121 = vector.extract_strided_slice %112 {offsets = [0, 16], sizes = [8, 8], strides = [1, 1]} : vector<8x32xf32> to vector<8x8xf32>
    %122 = vector.extract_strided_slice %112 {offsets = [0, 24], sizes = [8, 8], strides = [1, 1]} : vector<8x32xf32> to vector<8x8xf32>
    %123 = vector.shape_cast %119 : vector<8x8xf32> to vector<1x8x8xf32>
    %124 = vector.shape_cast %120 : vector<8x8xf32> to vector<1x8x8xf32>
    %125 = vector.shape_cast %121 : vector<8x8xf32> to vector<1x8x8xf32>
    %126 = vector.shape_cast %122 : vector<8x8xf32> to vector<1x8x8xf32>
    %127 = tpu.concatenate %123, %124, %125, %126 in 0 : vector<1x8x8xf32>, vector<1x8x8xf32>, vector<1x8x8xf32>, vector<1x8x8xf32> -> vector<4x8x8xf32>
    %128 = arith.truncf %127 : vector<4x8x8xf32> to vector<4x8x8xbf16>
    %129 = vector.extract_strided_slice %115 {offsets = [0, 0], sizes = [8, 8], strides = [1, 1]} : vector<8x32xf32> to vector<8x8xf32>
    %130 = vector.extract_strided_slice %115 {offsets = [0, 8], sizes = [8, 8], strides = [1, 1]} : vector<8x32xf32> to vector<8x8xf32>
    %131 = vector.extract_strided_slice %115 {offsets = [0, 16], sizes = [8, 8], strides = [1, 1]} : vector<8x32xf32> to vector<8x8xf32>
    %132 = vector.extract_strided_slice %115 {offsets = [0, 24], sizes = [8, 8], strides = [1, 1]} : vector<8x32xf32> to vector<8x8xf32>
    %133 = vector.shape_cast %129 : vector<8x8xf32> to vector<1x8x8xf32>
    %134 = vector.shape_cast %130 : vector<8x8xf32> to vector<1x8x8xf32>
    %135 = vector.shape_cast %131 : vector<8x8xf32> to vector<1x8x8xf32>
    %136 = vector.shape_cast %132 : vector<8x8xf32> to vector<1x8x8xf32>
    %137 = tpu.concatenate %133, %134, %135, %136 in 0 : vector<1x8x8xf32>, vector<1x8x8xf32>, vector<1x8x8xf32>, vector<1x8x8xf32> -> vector<4x8x8xf32>
    %138 = arith.truncf %137 : vector<4x8x8xf32> to vector<4x8x8xbf16>
    %139 = vector.extract_strided_slice %118 {offsets = [0, 0], sizes = [8, 8], strides = [1, 1]} : vector<8x32xf32> to vector<8x8xf32>
    %140 = vector.extract_strided_slice %118 {offsets = [0, 8], sizes = [8, 8], strides = [1, 1]} : vector<8x32xf32> to vector<8x8xf32>
    %141 = vector.extract_strided_slice %118 {offsets = [0, 16], sizes = [8, 8], strides = [1, 1]} : vector<8x32xf32> to vector<8x8xf32>
    %142 = vector.extract_strided_slice %118 {offsets = [0, 24], sizes = [8, 8], strides = [1, 1]} : vector<8x32xf32> to vector<8x8xf32>
    %143 = vector.shape_cast %139 : vector<8x8xf32> to vector<1x8x8xf32>
    %144 = vector.shape_cast %140 : vector<8x8xf32> to vector<1x8x8xf32>
    %145 = vector.shape_cast %141 : vector<8x8xf32> to vector<1x8x8xf32>
    %146 = vector.shape_cast %142 : vector<8x8xf32> to vector<1x8x8xf32>
    %147 = tpu.concatenate %143, %144, %145, %146 in 0 : vector<1x8x8xf32>, vector<1x8x8xf32>, vector<1x8x8xf32>, vector<1x8x8xf32> -> vector<4x8x8xf32>
    %148 = arith.truncf %147 : vector<4x8x8xf32> to vector<4x8x8xbf16>
    "tpu.trace_start"() <{level = 10 : i32, message = "hqd,hkd->hqk"}> : () -> ()
    %cst_53 = arith.constant dense<0.000000e+00> : vector<4x8x8xf32>
    %149 = tpu.matmul %128, %138, %cst_53 {dimension_numbers = #tpu.dot_dimension_numbers<[2], [2], [1], [1], [0, 0, 0, 1, 1, 1], [0], [0]>} : vector<4x8x8xbf16>, vector<4x8x8xbf16>, vector<4x8x8xf32> -> vector<4x8x8xf32>
    "tpu.trace_stop"() : () -> ()
    %cst_54 = arith.constant 0.353553385 : f32
    %150 = vector.broadcast %cst_54 : f32 to vector<4x8x8xf32>
    %151 = arith.mulf %149, %150 : vector<4x8x8xf32>
    %152 = vector.shape_cast %8 : vector<8x8xf32> to vector<1x8x8xf32>
    %153 = vector.broadcast %152 : vector<1x8x8xf32> to vector<4x8x8xf32>
    %154 = arith.addf %151, %153 : vector<4x8x8xf32>
    %cst_55 = arith.constant dense<0xFF800000> : vector<4x8xf32>
    %155 = vector.multi_reduction <maximumf>, %154, %cst_55 [2] : vector<4x8x8xf32> to vector<4x8xf32>
    %156 = vector.shape_cast %155 : vector<4x8xf32> to vector<4x8x1xf32>
    %157 = vector.broadcast %156 : vector<4x8x1xf32> to vector<4x8x8xf32>
    %158 = arith.subf %154, %157 : vector<4x8x8xf32>
    %159 = math.exp %158 : vector<4x8x8xf32>
    %cst_56 = arith.constant dense<0.000000e+00> : vector<4x8xf32>
    %160 = vector.multi_reduction <add>, %159, %cst_56 [2] : vector<4x8x8xf32> to vector<4x8xf32>
    %161 = vector.shape_cast %160 : vector<4x8xf32> to vector<4x8x1xf32>
    %162 = tpu.reciprocal %161 {approx = true} : vector<4x8x1xf32> -> vector<4x8x1xf32>
    %163 = vector.broadcast %162 : vector<4x8x1xf32> to vector<4x8x8xf32>
    %164 = arith.mulf %159, %163 : vector<4x8x8xf32>
    %165 = arith.truncf %164 : vector<4x8x8xf32> to vector<4x8x8xbf16>
    "tpu.trace_start"() <{level = 10 : i32, message = "hqk,hkd->hqd"}> : () -> ()
    %cst_57 = arith.constant dense<0.000000e+00> : vector<4x8x8xf32>
    %166 = tpu.matmul %165, %148, %cst_57 {dimension_numbers = #tpu.dot_dimension_numbers<[2], [1], [1], [2], [0, 0, 0, 1, 1, 2], [0], [0]>} : vector<4x8x8xbf16>, vector<4x8x8xbf16>, vector<4x8x8xf32> -> vector<4x8x8xf32>
    "tpu.trace_stop"() : () -> ()
    %167 = vector.extract_strided_slice %166 {offsets = [0, 0, 0], sizes = [1, 8, 8], strides = [1, 1, 1]} : vector<4x8x8xf32> to vector<1x8x8xf32>
    %168 = vector.shape_cast %167 : vector<1x8x8xf32> to vector<8x8xf32>
    %169 = vector.extract_strided_slice %166 {offsets = [1, 0, 0], sizes = [1, 8, 8], strides = [1, 1, 1]} : vector<4x8x8xf32> to vector<1x8x8xf32>
    %170 = vector.shape_cast %169 : vector<1x8x8xf32> to vector<8x8xf32>
    %171 = vector.extract_strided_slice %166 {offsets = [2, 0, 0], sizes = [1, 8, 8], strides = [1, 1, 1]} : vector<4x8x8xf32> to vector<1x8x8xf32>
    %172 = vector.shape_cast %171 : vector<1x8x8xf32> to vector<8x8xf32>
    %173 = vector.extract_strided_slice %166 {offsets = [3, 0, 0], sizes = [1, 8, 8], strides = [1, 1, 1]} : vector<4x8x8xf32> to vector<1x8x8xf32>
    %174 = vector.shape_cast %173 : vector<1x8x8xf32> to vector<8x8xf32>
    %175 = tpu.concatenate %168, %170, %172, %174 in 1 : vector<8x8xf32>, vector<8x8xf32>, vector<8x8xf32>, vector<8x8xf32> -> vector<8x32xf32>
    %176 = arith.truncf %175 : vector<8x32xf32> to vector<8x32xbf16>
    %c0_58 = arith.constant 0 : index
    %c0_59 = arith.constant 0 : index
    %c0_60 = arith.constant 0 : index
    %177 = vector.load %arg13[%c0_58, %c0_59, %c0_60] : memref<1x32x32xbf16, #tpu.memory_space<vmem>>, vector<1x32x32xbf16>
    %178 = vector.shape_cast %177 : vector<1x32x32xbf16> to vector<32x32xbf16>
    %cst_61 = arith.constant dense<0.000000e+00> : vector<8x32xf32>
    %179 = tpu.matmul %176, %178, %cst_61 {dimension_numbers = #tpu.dot_dimension_numbers<[1], [0], [0], [1], [0, 0, 1, 1], [], []>} : vector<8x32xbf16>, vector<32x32xbf16>, vector<8x32xf32> -> vector<8x32xf32>
    %180 = arith.addf %107, %179 : vector<8x32xf32>
    %cst_62 = arith.constant dense<0.000000e+00> : vector<8xf32>
    %181 = vector.multi_reduction <add>, %180, %cst_62 [1] : vector<8x32xf32> to vector<8xf32>
    %182 = vector.shape_cast %181 : vector<8xf32> to vector<8x1xf32>
    %cst_63 = arith.constant 3.200000e+01 : f32
    %183 = vector.broadcast %cst_63 : f32 to vector<8x1xf32>
    %184 = arith.divf %182, %183 : vector<8x1xf32>
    %185 = vector.broadcast %184 : vector<8x1xf32> to vector<8x32xf32>
    %186 = arith.subf %180, %185 : vector<8x32xf32>
    %187 = arith.mulf %186, %186 : vector<8x32xf32>
    %cst_64 = arith.constant dense<0.000000e+00> : vector<8xf32>
    %188 = vector.multi_reduction <add>, %187, %cst_64 [1] : vector<8x32xf32> to vector<8xf32>
    %189 = vector.shape_cast %188 : vector<8xf32> to vector<8x1xf32>
    %cst_65 = arith.constant 3.200000e+01 : f32
    %190 = vector.broadcast %cst_65 : f32 to vector<8x1xf32>
    %191 = arith.divf %189, %190 : vector<8x1xf32>
    %192 = vector.broadcast %184 : vector<8x1xf32> to vector<8x32xf32>
    %193 = arith.subf %180, %192 : vector<8x32xf32>
    %cst_66 = arith.constant 9.99999974E-6 : f32
    %194 = vector.broadcast %cst_66 : f32 to vector<8x1xf32>
    %195 = arith.addf %191, %194 : vector<8x1xf32>
    %196 = math.rsqrt %195 : vector<8x1xf32>
    %197 = vector.broadcast %196 : vector<8x1xf32> to vector<8x32xf32>
    %198 = arith.mulf %193, %197 : vector<8x32xf32>
    %c0_67 = arith.constant 0 : index
    %c0_68 = arith.constant 0 : index
    %c0_69 = arith.constant 0 : index
    %199 = vector.load %arg20[%c0_67, %c0_68, %c0_69] : memref<1x1x32xf32, #tpu.memory_space<vmem>>, vector<1x1x32xf32>
    %200 = vector.shape_cast %199 : vector<1x1x32xf32> to vector<1x32xf32>
    %201 = vector.broadcast %200 : vector<1x32xf32> to vector<8x32xf32>
    %202 = arith.mulf %198, %201 : vector<8x32xf32>
    %c0_70 = arith.constant 0 : index
    %c0_71 = arith.constant 0 : index
    %c0_72 = arith.constant 0 : index
    %203 = vector.load %arg21[%c0_70, %c0_71, %c0_72] : memref<1x1x32xf32, #tpu.memory_space<vmem>>, vector<1x1x32xf32>
    %204 = vector.shape_cast %203 : vector<1x1x32xf32> to vector<1x32xf32>
    %205 = vector.broadcast %204 : vector<1x32xf32> to vector<8x32xf32>
    %206 = arith.addf %202, %205 : vector<8x32xf32>
    %207 = arith.truncf %206 : vector<8x32xf32> to vector<8x32xbf16>
    %c0_73 = arith.constant 0 : index
    %c0_74 = arith.constant 0 : index
    %c0_75 = arith.constant 0 : index
    %208 = vector.load %arg14[%c0_73, %c0_74, %c0_75] : memref<1x32x64xbf16, #tpu.memory_space<vmem>>, vector<1x32x64xbf16>
    %209 = vector.shape_cast %208 : vector<1x32x64xbf16> to vector<32x64xbf16>
    %cst_76 = arith.constant dense<0.000000e+00> : vector<8x64xf32>
    %210 = tpu.matmul %207, %209, %cst_76 {dimension_numbers = #tpu.dot_dimension_numbers<[1], [0], [0], [1], [0, 0, 1, 1], [], []>} : vector<8x32xbf16>, vector<32x64xbf16>, vector<8x64xf32> -> vector<8x64xf32>
    %c0_77 = arith.constant 0 : index
    %c0_78 = arith.constant 0 : index
    %c0_79 = arith.constant 0 : index
    %211 = vector.load %arg15[%c0_77, %c0_78, %c0_79] : memref<1x1x64xf32, #tpu.memory_space<vmem>>, vector<1x1x64xf32>
    %212 = vector.shape_cast %211 : vector<1x1x64xf32> to vector<1x64xf32>
    %213 = vector.broadcast %212 : vector<1x64xf32> to vector<8x64xf32>
    %214 = arith.addf %210, %213 : vector<8x64xf32>
    %cst_80 = arith.constant 0.000000e+00 : f32
    %215 = vector.broadcast %cst_80 : f32 to vector<8x64xf32>
    %216 = arith.maximumf %214, %215 : vector<8x64xf32>
    %217 = arith.truncf %216 : vector<8x64xf32> to vector<8x64xbf16>
    %c0_81 = arith.constant 0 : index
    %c0_82 = arith.constant 0 : index
    %c0_83 = arith.constant 0 : index
    %218 = vector.load %arg16[%c0_81, %c0_82, %c0_83] : memref<1x64x32xbf16, #tpu.memory_space<vmem>>, vector<1x64x32xbf16>
    %219 = vector.shape_cast %218 : vector<1x64x32xbf16> to vector<64x32xbf16>
    %cst_84 = arith.constant dense<0.000000e+00> : vector<8x32xf32>
    %220 = tpu.matmul %217, %219, %cst_84 {dimension_numbers = #tpu.dot_dimension_numbers<[1], [0], [0], [1], [0, 0, 1, 1], [], []>} : vector<8x64xbf16>, vector<64x32xbf16>, vector<8x32xf32> -> vector<8x32xf32>
    %c0_85 = arith.constant 0 : index
    %c0_86 = arith.constant 0 : index
    %c0_87 = arith.constant 0 : index
    %221 = vector.load %arg17[%c0_85, %c0_86, %c0_87] : memref<1x1x32xf32, #tpu.memory_space<vmem>>, vector<1x1x32xf32>
    %222 = vector.shape_cast %221 : vector<1x1x32xf32> to vector<1x32xf32>
    %223 = vector.broadcast %222 : vector<1x32xf32> to vector<8x32xf32>
    %224 = arith.addf %220, %223 : vector<8x32xf32>
    %225 = arith.addf %206, %224 : vector<8x32xf32>
    %cst_88 = arith.constant dense<0.000000e+00> : vector<8xf32>
    %226 = vector.multi_reduction <add>, %225, %cst_88 [1] : vector<8x32xf32> to vector<8xf32>
    %227 = vector.shape_cast %226 : vector<8xf32> to vector<8x1xf32>
    %cst_89 = arith.constant 3.200000e+01 : f32
    %228 = vector.broadcast %cst_89 : f32 to vector<8x1xf32>
    %229 = arith.divf %227, %228 : vector<8x1xf32>
    %230 = vector.broadcast %229 : vector<8x1xf32> to vector<8x32xf32>
    %231 = arith.subf %225, %230 : vector<8x32xf32>
    %232 = arith.mulf %231, %231 : vector<8x32xf32>
    %cst_90 = arith.constant dense<0.000000e+00> : vector<8xf32>
    %233 = vector.multi_reduction <add>, %232, %cst_90 [1] : vector<8x32xf32> to vector<8xf32>
    %234 = vector.shape_cast %233 : vector<8xf32> to vector<8x1xf32>
    %cst_91 = arith.constant 3.200000e+01 : f32
    %235 = vector.broadcast %cst_91 : f32 to vector<8x1xf32>
    %236 = arith.divf %234, %235 : vector<8x1xf32>
    %237 = vector.broadcast %229 : vector<8x1xf32> to vector<8x32xf32>
    %238 = arith.subf %225, %237 : vector<8x32xf32>
    %cst_92 = arith.constant 9.99999974E-6 : f32
    %239 = vector.broadcast %cst_92 : f32 to vector<8x1xf32>
    %240 = arith.addf %236, %239 : vector<8x1xf32>
    %241 = math.rsqrt %240 : vector<8x1xf32>
    %242 = vector.broadcast %241 : vector<8x1xf32> to vector<8x32xf32>
    %243 = arith.mulf %238, %242 : vector<8x32xf32>
    %c0_93 = arith.constant 0 : index
    %c0_94 = arith.constant 0 : index
    %c0_95 = arith.constant 0 : index
    %244 = vector.load %arg22[%c0_93, %c0_94, %c0_95] : memref<1x1x32xf32, #tpu.memory_space<vmem>>, vector<1x1x32xf32>
    %245 = vector.shape_cast %244 : vector<1x1x32xf32> to vector<1x32xf32>
    %246 = vector.broadcast %245 : vector<1x32xf32> to vector<8x32xf32>
    %247 = arith.mulf %243, %246 : vector<8x32xf32>
    %c0_96 = arith.constant 0 : index
    %c0_97 = arith.constant 0 : index
    %c0_98 = arith.constant 0 : index
    %248 = vector.load %arg23[%c0_96, %c0_97, %c0_98] : memref<1x1x32xf32, #tpu.memory_space<vmem>>, vector<1x1x32xf32>
    %249 = vector.shape_cast %248 : vector<1x1x32xf32> to vector<1x32xf32>
    %250 = vector.broadcast %249 : vector<1x32xf32> to vector<8x32xf32>
    %251 = arith.addf %247, %250 : vector<8x32xf32>
    %c0_99 = arith.constant 0 : index
    %c0_100 = arith.constant 0 : index
    %c0_101 = arith.constant 0 : index
    %252 = vector.load %arg24[%c0_99, %c0_100, %c0_101] : memref<1x8x32xf32, #tpu.memory_space<vmem>>, vector<1x8x32xf32>
    %253 = vector.shape_cast %252 : vector<1x8x32xf32> to vector<8x32xf32>
    %254 = vector.shape_cast %251 : vector<8x32xf32> to vector<1x8x32xf32>
    tpu.vector_store %arg24[%c0_99, %c0_100, %c0_101], %254 {strides = array<i32>} : memref<1x8x32xf32, #tpu.memory_space<vmem>>, vector<1x8x32xf32>,
    return
  }
  func.func @transform_0(%arg0: i32, %arg1: i32) -> (i32, i32, i32) {
    %c0_i32 = arith.constant 0 : i32
    %c0_i32_0 = arith.constant 0 : i32
    %c0_i32_1 = arith.constant 0 : i32
    return %arg0, %c0_i32, %c0_i32_0 : i32, i32, i32
  }
  func.func @transform_1(%arg0: i32, %arg1: i32) -> (i32, i32, i32) {
    %c0_i32 = arith.constant 0 : i32
    %c0_i32_0 = arith.constant 0 : i32
    %c0_i32_1 = arith.constant 0 : i32
    return %arg0, %c0_i32, %c0_i32_0 : i32, i32, i32
  }
  func.func @transform_2(%arg0: i32, %arg1: i32) -> (i32, i32) {
    %c0_i32 = arith.constant 0 : i32
    %c0_i32_0 = arith.constant 0 : i32
    %c0_i32_1 = arith.constant 0 : i32
    return %c0_i32, %c0_i32_0 : i32, i32
  }
  func.func @transform_3(%arg0: i32, %arg1: i32) -> (i32, i32) {
    %c0_i32 = arith.constant 0 : i32
    %c0_i32_0 = arith.constant 0 : i32
    %c0_i32_1 = arith.constant 0 : i32
    return %c0_i32, %c0_i32_0 : i32, i32
  }
  func.func @transform_4(%arg0: i32, %arg1: i32) -> (i32, i32, i32) {
    %c0_i32 = arith.constant 0 : i32
    %c0_i32_0 = arith.constant 0 : i32
    %c0_i32_1 = arith.constant 0 : i32
    return %arg1, %c0_i32, %c0_i32_0 : i32, i32, i32
  }
  func.func @transform_5(%arg0: i32, %arg1: i32) -> (i32, i32, i32) {
    %c0_i32 = arith.constant 0 : i32
    %c0_i32_0 = arith.constant 0 : i32
    %c0_i32_1 = arith.constant 0 : i32
    return %arg1, %c0_i32, %c0_i32_0 : i32, i32, i32
  }
  func.func @transform_6(%arg0: i32, %arg1: i32) -> (i32, i32, i32) {
    %c0_i32 = arith.constant 0 : i32
    %c0_i32_0 = arith.constant 0 : i32
    %c0_i32_1 = arith.constant 0 : i32
    return %arg1, %c0_i32, %c0_i32_0 : i32, i32, i32
  }
  func.func @transform_7(%arg0: i32, %arg1: i32) -> (i32, i32, i32) {
    %c0_i32 = arith.constant 0 : i32
    %c0_i32_0 = arith.constant 0 : i32
    %c0_i32_1 = arith.constant 0 : i32
    return %arg1, %c0_i32, %c0_i32_0 : i32, i32, i32
  }
  func.func @transform_8(%arg0: i32, %arg1: i32) -> (i32, i32, i32) {
    %c0_i32 = arith.constant 0 : i32
    %c0_i32_0 = arith.constant 0 : i32
    %c0_i32_1 = arith.constant 0 : i32
    return %arg1, %c0_i32, %c0_i32_0 : i32, i32, i32
  }
  func.func @transform_9(%arg0: i32, %arg1: i32) -> (i32, i32, i32) {
    %c0_i32 = arith.constant 0 : i32
    %c0_i32_0 = arith.constant 0 : i32
    %c0_i32_1 = arith.constant 0 : i32
    return %arg1, %c0_i32, %c0_i32_0 : i32, i32, i32
  }
  func.func @transform_10(%arg0: i32, %arg1: i32) -> (i32, i32, i32) {
    %c0_i32 = arith.constant 0 : i32
    %c0_i32_0 = arith.constant 0 : i32
    %c0_i32_1 = arith.constant 0 : i32
    return %arg1, %c0_i32, %c0_i32_0 : i32, i32, i32
  }
  func.func @transform_11(%arg0: i32, %arg1: i32) -> (i32, i32, i32) {
    %c0_i32 = arith.constant 0 : i32
    %c0_i32_0 = arith.constant 0 : i32
    %c0_i32_1 = arith.constant 0 : i32
    return %arg1, %c0_i32, %c0_i32_0 : i32, i32, i32
  }
  func.func @transform_12(%arg0: i32, %arg1: i32) -> (i32, i32, i32) {
    %c0_i32 = arith.constant 0 : i32
    %c0_i32_0 = arith.constant 0 : i32
    %c0_i32_1 = arith.constant 0 : i32
    return %arg1, %c0_i32, %c0_i32_0 : i32, i32, i32
  }
  func.func @transform_13(%arg0: i32, %arg1: i32) -> (i32, i32, i32) {
    %c0_i32 = arith.constant 0 : i32
    %c0_i32_0 = arith.constant 0 : i32
    %c0_i32_1 = arith.constant 0 : i32
    return %arg1, %c0_i32, %c0_i32_0 : i32, i32, i32
  }
  func.func @transform_14(%arg0: i32, %arg1: i32) -> (i32, i32, i32) {
    %c0_i32 = arith.constant 0 : i32
    %c0_i32_0 = arith.constant 0 : i32
    %c0_i32_1 = arith.constant 0 : i32
    return %arg1, %c0_i32, %c0_i32_0 : i32, i32, i32
  }
  func.func @transform_15(%arg0: i32, %arg1: i32) -> (i32, i32, i32) {
    %c0_i32 = arith.constant 0 : i32
    %c0_i32_0 = arith.constant 0 : i32
    %c0_i32_1 = arith.constant 0 : i32
    return %arg1, %c0_i32, %c0_i32_0 : i32, i32, i32
  }
  func.func @transform_16(%arg0: i32, %arg1: i32) -> (i32, i32, i32) {
    %c0_i32 = arith.constant 0 : i32
    %c0_i32_0 = arith.constant 0 : i32
    %c0_i32_1 = arith.constant 0 : i32
    return %arg1, %c0_i32, %c0_i32_0 : i32, i32, i32
  }
  func.func @transform_17(%arg0: i32, %arg1: i32) -> (i32, i32, i32) {
    %c0_i32 = arith.constant 0 : i32
    %c0_i32_0 = arith.constant 0 : i32
    %c0_i32_1 = arith.constant 0 : i32
    return %arg1, %c0_i32, %c0_i32_0 : i32, i32, i32
  }
  func.func @transform_18(%arg0: i32, %arg1: i32) -> (i32, i32, i32) {
    %c0_i32 = arith.constant 0 : i32
    %c0_i32_0 = arith.constant 0 : i32
    %c0_i32_1 = arith.constant 0 : i32
    return %arg1, %c0_i32, %c0_i32_0 : i32, i32, i32
  }
  func.func @transform_19(%arg0: i32, %arg1: i32) -> (i32, i32, i32) {
    %c0_i32 = arith.constant 0 : i32
    %c0_i32_0 = arith.constant 0 : i32
    %c0_i32_1 = arith.constant 0 : i32
    return %arg1, %c0_i32, %c0_i32_0 : i32, i32, i32
  }
  func.func @transform_20(%arg0: i32, %arg1: i32) -> (i32, i32, i32) {
    %c0_i32 = arith.constant 0 : i32
    %c0_i32_0 = arith.constant 0 : i32
    %c0_i32_1 = arith.constant 0 : i32
    return %arg1, %c0_i32, %c0_i32_0 : i32, i32, i32
  }
  func.func @transform_21(%arg0: i32, %arg1: i32) -> (i32, i32, i32) {
    %c0_i32 = arith.constant 0 : i32
    %c0_i32_0 = arith.constant 0 : i32
    %c0_i32_1 = arith.constant 0 : i32
    return %arg1, %c0_i32, %c0_i32_0 : i32, i32, i32
  }
  func.func @transform_22(%arg0: i32, %arg1: i32) -> (i32, i32, i32) {
    %c0_i32 = arith.constant 0 : i32
    %c0_i32_0 = arith.constant 0 : i32
    %c0_i32_1 = arith.constant 0 : i32
    return %arg0, %c0_i32, %c0_i32_0 : i32, i32, i32
  }
}

</mosaic_0001>

<llo_original>
// kernel: decoder_forward.1
$region0: #{decoder_forward.1}
  #allocation0 [shape = 'u32[]', space=smem, size = 0x4, offset = 0x4, fixed_abs, tag = 'smem constant byte address 0x4 - core index']
  #allocation1 [shape = 'u32[144,128]{1,0:T(1,128)}', space=vmem, size = 0x12000, scoped, tag = 'internal scratch']
  %s0 = inlined_call_operand.vmem [shape: f32[2,8,32], index: 0, kind: input, shape index: {}]
  %s1 = inlined_call_operand.vmem [shape: f32[2,8,32], index: 1, kind: input, shape index: {}]
  %s2 = inlined_call_operand.vmem [shape: f32[8,8], index: 2, kind: input, shape index: {}]
  %s3 = inlined_call_operand.vmem [shape: f32[8,8], index: 3, kind: input, shape index: {}]
  %s4 = inlined_call_operand.vmem [shape: bf16[2,32,32], index: 4, kind: input, shape index: {}]
  %s5 = inlined_call_operand.vmem [shape: bf16[2,32,32], index: 5, kind: input, shape index: {}]
  %s6 = inlined_call_operand.vmem [shape: bf16[2,32,32], index: 6, kind: input, shape index: {}]
  %s7 = inlined_call_operand.vmem [shape: bf16[2,32,32], index: 7, kind: input, shape index: {}]
  %s8 = inlined_call_operand.vmem [shape: bf16[2,32,32], index: 8, kind: input, shape index: {}]
  %s9 = inlined_call_operand.vmem [shape: bf16[2,32,32], index: 9, kind: input, shape index: {}]
  %s10 = inlined_call_operand.vmem [shape: bf16[2,32,32], index: 10, kind: input, shape index: {}]
  %s11 = inlined_call_operand.vmem [shape: bf16[2,32,32], index: 11, kind: input, shape index: {}]
  %s12 = inlined_call_operand.vmem [shape: bf16[2,32,64], index: 12, kind: input, shape index: {}]
  %s13 = inlined_call_operand.vmem [shape: f32[2,1,64], index: 13, kind: input, shape index: {}]
  %s14 = inlined_call_operand.vmem [shape: bf16[2,64,32], index: 14, kind: input, shape index: {}]
  %s15 = inlined_call_operand.vmem [shape: f32[2,1,32], index: 15, kind: input, shape index: {}]
  %s16 = inlined_call_operand.vmem [shape: f32[2,1,32], index: 16, kind: input, shape index: {}]
  %s17 = inlined_call_operand.vmem [shape: f32[2,1,32], index: 17, kind: input, shape index: {}]
  %s18 = inlined_call_operand.vmem [shape: f32[2,1,32], index: 18, kind: input, shape index: {}]
  %s19 = inlined_call_operand.vmem [shape: f32[2,1,32], index: 19, kind: input, shape index: {}]
  %s20 = inlined_call_operand.vmem [shape: f32[2,1,32], index: 20, kind: input, shape index: {}]
  %s21 = inlined_call_operand.vmem [shape: f32[2,1,32], index: 21, kind: input, shape index: {}]
  %s22 = inlined_call_operand.hbm [shape: f32[2,8,32], index: 22, kind: output, shape index: {}]
  %s23 = sld [smem:[#allocation0]]
  $region125: #{decoder_forward.1} parent=0
    _
  %s25 = ssub.s32 1, %s23
  %s26 = scalar_select 0, %s25, %s23
  $region1: #{decoder_forward.1} parent=0
    #allocation2 [shape = 'u8[8192]{0}', space=vmem, size = 0x2000, scoped, tag = 'output window, operand 0']
    #allocation3 [shape = 's32[2]{0}', space=sflag, size = 0x8, scoped, tag = 'scoped memory for decoder_forward.1']
    %27 = vsyncpa [#allocation3], 0
    %s28 = scalar_lea.sflag [#allocation3], 1
    %29 = vsyncpa %s28, 0
    loop: start=0, step=1, limit=6
    $region2: #{decoder_forward.1} parent=1 // loop_pre_header
      _
    $region3: #{decoder_forward.1} parent=1 // loop_header
      %s31 = sphi 0, %s35
      %p32 = scmp.ge.s32.totalorder %s31, 6
      %s38 = sphi 0, %s50
      %s39 = sphi 0, %s46
      %s40 = sphi 0, %s38
      %s41 = sphi 0, %s39
      %s42 = sphi 0, %s40
      %s43 = sphi 0, %s41
      %s53 = sphi 0, %s55
      %s56 = sphi 0, %s53
      %s57 = sphi 0, %s56
      %s73 = sphi 0, %s57
      %s79 = sphi 0, %s81
      %s82 = sphi 0, %s79
      %s83 = sphi 0, %s82
      %s99 = sphi 0, %s83
      %s103 = sphi 0, %s103
      %s105 = sphi 0, %s103
      %s106 = sphi 0, %s105
      %s120 = sphi 0, %s106
      %s124 = sphi 0, %s124
      %s126 = sphi 0, %s124
      %s127 = sphi 0, %s126
      %s141 = sphi 0, %s127
      %s147 = sphi 0, %s149
      %s150 = sphi 0, %s147
      %s151 = sphi 0, %s150
      %s167 = sphi 0, %s151
      %s173 = sphi 0, %s175
      %s176 = sphi 0, %s173
      %s177 = sphi 0, %s176
      %s193 = sphi 0, %s177
      %s199 = sphi 0, %s201
      %s202 = sphi 0, %s199
      %s203 = sphi 0, %s202
      %s219 = sphi 0, %s203
      %s225 = sphi 0, %s227
      %s228 = sphi 0, %s225
      %s229 = sphi 0, %s228
      %s245 = sphi 0, %s229
      %s251 = sphi 0, %s253
      %s254 = sphi 0, %s251
      %s255 = sphi 0, %s254
      %s271 = sphi 0, %s255
      %s277 = sphi 0, %s279
      %s280 = sphi 0, %s277
      %s281 = sphi 0, %s280
      %s297 = sphi 0, %s281
      %s303 = sphi 0, %s305
      %s306 = sphi 0, %s303
      %s307 = sphi 0, %s306
      %s323 = sphi 0, %s307
      %s329 = sphi 0, %s331
      %s332 = sphi 0, %s329
      %s333 = sphi 0, %s332
      %s349 = sphi 0, %s333
      %s355 = sphi 0, %s357
      %s358 = sphi 0, %s355
      %s359 = sphi 0, %s358
      %s375 = sphi 0, %s359
      %s381 = sphi 0, %s383
      %s384 = sphi 0, %s381
      %s385 = sphi 0, %s384
      %s401 = sphi 0, %s385
      %s407 = sphi 0, %s409
      %s410 = sphi 0, %s407
      %s411 = sphi 0, %s410
      %s427 = sphi 0, %s411
      %s433 = sphi 0, %s435
      %s436 = sphi 0, %s433
      %s437 = sphi 0, %s436
      %s453 = sphi 0, %s437
      %s459 = sphi 0, %s461
      %s462 = sphi 0, %s459
      %s463 = sphi 0, %s462
      %s479 = sphi 0, %s463
      %s485 = sphi 0, %s487
      %s488 = sphi 0, %s485
      %s489 = sphi 0, %s488
      %s505 = sphi 0, %s489
      %s511 = sphi 0, %s513
      %s514 = sphi 0, %s511
      %s515 = sphi 0, %s514
      %s531 = sphi 0, %s515
      %s537 = sphi 0, %s539
      %s540 = sphi 0, %s537
      %s541 = sphi 0, %s540
      %s557 = sphi 0, %s541
      %s563 = sphi 0, %s565
      %s566 = sphi 0, %s563
      %s567 = sphi 0, %s566
      %s583 = sphi 0, %s567
      %s589 = sphi 0, %s591
      %s592 = sphi 0, %s589
      %s593 = sphi 0, %s592
      %s609 = sphi 0, %s593
      %s615 = sphi 0, %s617
      %s618 = sphi 0, %s615
      %s619 = sphi 0, %s618
      %s635 = sphi 0, %s619
    $region4: #{decoder_forward.1} parent=1 // loop_header_branch
      %34 = sbr.rel (%p32) target = $region8
    $region5: #{decoder_forward.1} parent=1 // loop_body
      %s36 = ssub.s32 %s31, 1
      %s37 = ssub.s32 %s31, 2
      %s44 = sadd.s32 1, %s39
      %p45 = scmp.ge.s32.totalorder %s44, 2
      %s46 = scalar_select %p45, 0, %s44
      %s47 = sadd.s32 1, %s38
      %s48 = scalar_select %p45, %s47, %s38
      %p49 = scmp.ge.s32.totalorder %s48, 2
      %s50 = scalar_select %p49, 0, %s48
      %s51 = ssub.s32 %s38, %s50
      %p52 = scmp.eq.s32.totalorder %s51, 0
      %s54 = sadd.s32 %s53, 1
      %s55 = scalar_select %p52, %s53, %s54
      %p58 = pneg %p52
      %p59 = scmp.eq.s32.totalorder %s31, 3
      %p60 = por %p58, %p59
      %p61 = scmp.ne.s32.totalorder %s53, %s56
      %p62 = scmp.eq.s32.totalorder %s31, 0
      %p63 = por %p61, %p62
      %p64 = scmp.ne.s32.totalorder %s53, %s56
      %p65 = scmp.eq.s32.totalorder %s36, 3
      %p66 = por %p64, %p65
      %p67 = scmp.ne.s32.totalorder %s56, %s57
      %p68 = scmp.eq.s32.totalorder %s36, 0
      %p69 = por %p67, %p68
      %p70 = scmp.ne.s32.totalorder %s56, %s57
      %p71 = scmp.eq.s32.totalorder %s37, 3
      %p72 = por %p70, %p71
      %p74 = scmp.ne.s32.totalorder %s57, %s73
      %p75 = scmp.eq.s32.totalorder %s37, 0
      %p76 = por %p74, %p75
      %s77 = ssub.s32 %s38, %s50
      %p78 = scmp.eq.s32.totalorder %s77, 0
      %s80 = sadd.s32 %s79, 1
      %s81 = scalar_select %p78, %s79, %s80
      %p84 = pneg %p78
      %p85 = scmp.eq.s32.totalorder %s31, 3
      %p86 = por %p84, %p85
      %p87 = scmp.ne.s32.totalorder %s79, %s82
      %p88 = scmp.eq.s32.totalorder %s31, 0
      %p89 = por %p87, %p88
      %p90 = scmp.ne.s32.totalorder %s79, %s82
      %p91 = scmp.eq.s32.totalorder %s36, 3
      %p92 = por %p90, %p91
      %p93 = scmp.ne.s32.totalorder %s82, %s83
      %p94 = scmp.eq.s32.totalorder %s36, 0
      %p95 = por %p93, %p94
      %p96 = scmp.ne.s32.totalorder %s82, %s83
      %p97 = scmp.eq.s32.totalorder %s37, 3
      %p98 = por %p96, %p97
      %p100 = scmp.ne.s32.totalorder %s83, %s99
      %p101 = scmp.eq.s32.totalorder %s37, 0
      %p102 = por %p100, %p101
      %s104 = sadd.s32 %s103, 1
      %p107 = scmp.eq.s32.totalorder %s31, 3
      %p108 = scmp.ne.s32.totalorder %s103, %s105
      %p109 = scmp.eq.s32.totalorder %s31, 0
      %p110 = por %p108, %p109
      %p111 = scmp.ne.s32.totalorder %s103, %s105
      %p112 = scmp.eq.s32.totalorder %s36, 3
      %p113 = por %p111, %p112
      %p114 = scmp.ne.s32.totalorder %s105, %s106
      %p115 = scmp.eq.s32.totalorder %s36, 0
      %p116 = por %p114, %p115
      %p117 = scmp.ne.s32.totalorder %s105, %s106
      %p118 = scmp.eq.s32.totalorder %s37, 3
      %p119 = por %p117, %p118
      %p121 = scmp.ne.s32.totalorder %s106, %s120
      %p122 = scmp.eq.s32.totalorder %s37, 0
      %p123 = por %p121, %p122
      %s125 = sadd.s32 %s124, 1
      %p128 = scmp.eq.s32.totalorder %s31, 3
      %p129 = scmp.ne.s32.totalorder %s124, %s126
      %p130 = scmp.eq.s32.totalorder %s31, 0
      %p131 = por %p129, %p130
      %p132 = scmp.ne.s32.totalorder %s124, %s126
      %p133 = scmp.eq.s32.totalorder %s36, 3
      %p134 = por %p132, %p133
      %p135 = scmp.ne.s32.totalorder %s126, %s127
      %p136 = scmp.eq.s32.totalorder %s36, 0
      %p137 = por %p135, %p136
      %p138 = scmp.ne.s32.totalorder %s126, %s127
      %p139 = scmp.eq.s32.totalorder %s37, 3
      %p140 = por %p138, %p139
      %p142 = scmp.ne.s32.totalorder %s127, %s141
      %p143 = scmp.eq.s32.totalorder %s37, 0
      %p144 = por %p142, %p143
      %s145 = ssub.s32 %s39, %s46
      %p146 = scmp.eq.s32.totalorder %s145, 0
      %s148 = sadd.s32 %s147, 1
      %s149 = scalar_select %p146, %s147, %s148
      %p152 = pneg %p146
      %p153 = scmp.eq.s32.totalorder %s31, 3
      %p154 = por %p152, %p153
      %p155 = scmp.ne.s32.totalorder %s147, %s150
      %p156 = scmp.eq.s32.totalorder %s31, 0
      %p157 = por %p155, %p156
      %p158 = scmp.ne.s32.totalorder %s147, %s150
      %p159 = scmp.eq.s32.totalorder %s36, 3
      %p160 = por %p158, %p159
      %p161 = scmp.ne.s32.totalorder %s150, %s151
      %p162 = scmp.eq.s32.totalorder %s36, 0
      %p163 = por %p161, %p162
      %p164 = scmp.ne.s32.totalorder %s150, %s151
      %p165 = scmp.eq.s32.totalorder %s37, 3
      %p166 = por %p164, %p165
      %p168 = scmp.ne.s32.totalorder %s151, %s167
      %p169 = scmp.eq.s32.totalorder %s37, 0
      %p170 = por %p168, %p169
      %s171 = ssub.s32 %s39, %s46
      %p172 = scmp.eq.s32.totalorder %s171, 0
      %s174 = sadd.s32 %s173, 1
      %s175 = scalar_select %p172, %s173, %s174
      %p178 = pneg %p172
      %p179 = scmp.eq.s32.totalorder %s31, 3
      %p180 = por %p178, %p179
      %p181 = scmp.ne.s32.totalorder %s173, %s176
      %p182 = scmp.eq.s32.totalorder %s31, 0
      %p183 = por %p181, %p182
      %p184 = scmp.ne.s32.totalorder %s173, %s176
      %p185 = scmp.eq.s32.totalorder %s36, 3
      %p186 = por %p184, %p185
      %p187 = scmp.ne.s32.totalorder %s176, %s177
      %p188 = scmp.eq.s32.totalorder %s36, 0
      %p189 = por %p187, %p188
      %p190 = scmp.ne.s32.totalorder %s176, %s177
      %p191 = scmp.eq.s32.totalorder %s37, 3
      %p192 = por %p190, %p191
      %p194 = scmp.ne.s32.totalorder %s177, %s193
      %p195 = scmp.eq.s32.totalorder %s37, 0
      %p196 = por %p194, %p195
      %s197 = ssub.s32 %s39, %s46
      %p198 = scmp.eq.s32.totalorder %s197, 0
      %s200 = sadd.s32 %s199, 1
      %s201 = scalar_select %p198, %s199, %s200
      %p204 = pneg %p198
      %p205 = scmp.eq.s32.totalorder %s31, 3
      %p206 = por %p204, %p205
      %p207 = scmp.ne.s32.totalorder %s199, %s202
      %p208 = scmp.eq.s32.totalorder %s31, 0
      %p209 = por %p207, %p208
      %p210 = scmp.ne.s32.totalorder %s199, %s202
      %p211 = scmp.eq.s32.totalorder %s36, 3
      %p212 = por %p210, %p211
      %p213 = scmp.ne.s32.totalorder %s202, %s203
      %p214 = scmp.eq.s32.totalorder %s36, 0
      %p215 = por %p213, %p214
      %p216 = scmp.ne.s32.totalorder %s202, %s203
      %p217 = scmp.eq.s32.totalorder %s37, 3
      %p218 = por %p216, %p217
      %p220 = scmp.ne.s32.totalorder %s203, %s219
      %p221 = scmp.eq.s32.totalorder %s37, 0
      %p222 = por %p220, %p221
      %s223 = ssub.s32 %s39, %s46
      %p224 = scmp.eq.s32.totalorder %s223, 0
      %s226 = sadd.s32 %s225, 1
      %s227 = scalar_select %p224, %s225, %s226
      %p230 = pneg %p224
      %p231 = scmp.eq.s32.totalorder %s31, 3
      %p232 = por %p230, %p231
      %p233 = scmp.ne.s32.totalorder %s225, %s228
      %p234 = scmp.eq.s32.totalorder %s31, 0
      %p235 = por %p233, %p234
      %p236 = scmp.ne.s32.totalorder %s225, %s228
      %p237 = scmp.eq.s32.totalorder %s36, 3
      %p238 = por %p236, %p237
      %p239 = scmp.ne.s32.totalorder %s228, %s229
      %p240 = scmp.eq.s32.totalorder %s36, 0
      %p241 = por %p239, %p240
      %p242 = scmp.ne.s32.totalorder %s228, %s229
      %p243 = scmp.eq.s32.totalorder %s37, 3
      %p244 = por %p242, %p243
      %p246 = scmp.ne.s32.totalorder %s229, %s245
      %p247 = scmp.eq.s32.totalorder %s37, 0
      %p248 = por %p246, %p247
      %s249 = ssub.s32 %s39, %s46
      %p250 = scmp.eq.s32.totalorder %s249, 0
      %s252 = sadd.s32 %s251, 1
      %s253 = scalar_select %p250, %s251, %s252
      %p256 = pneg %p250
      %p257 = scmp.eq.s32.totalorder %s31, 3
      %p258 = por %p256, %p257
      %p259 = scmp.ne.s32.totalorder %s251, %s254
      %p260 = scmp.eq.s32.totalorder %s31, 0
      %p261 = por %p259, %p260
      %p262 = scmp.ne.s32.totalorder %s251, %s254
      %p263 = scmp.eq.s32.totalorder %s36, 3
      %p264 = por %p262, %p263
      %p265 = scmp.ne.s32.totalorder %s254, %s255
      %p266 = scmp.eq.s32.totalorder %s36, 0
      %p267 = por %p265, %p266
      %p268 = scmp.ne.s32.totalorder %s254, %s255
      %p269 = scmp.eq.s32.totalorder %s37, 3
      %p270 = por %p268, %p269
      %p272 = scmp.ne.s32.totalorder %s255, %s271
      %p273 = scmp.eq.s32.totalorder %s37, 0
      %p274 = por %p272, %p273
      %s275 = ssub.s32 %s39, %s46
      %p276 = scmp.eq.s32.totalorder %s275, 0
      %s278 = sadd.s32 %s277, 1
      %s279 = scalar_select %p276, %s277, %s278
      %p282 = pneg %p276
      %p283 = scmp.eq.s32.totalorder %s31, 3
      %p284 = por %p282, %p283
      %p285 = scmp.ne.s32.totalorder %s277, %s280
      %p286 = scmp.eq.s32.totalorder %s31, 0
      %p287 = por %p285, %p286
      %p288 = scmp.ne.s32.totalorder %s277, %s280
      %p289 = scmp.eq.s32.totalorder %s36, 3
      %p290 = por %p288, %p289
      %p291 = scmp.ne.s32.totalorder %s280, %s281
      %p292 = scmp.eq.s32.totalorder %s36, 0
      %p293 = por %p291, %p292
      %p294 = scmp.ne.s32.totalorder %s280, %s281
      %p295 = scmp.eq.s32.totalorder %s37, 3
      %p296 = por %p294, %p295
      %p298 = scmp.ne.s32.totalorder %s281, %s297
      %p299 = scmp.eq.s32.totalorder %s37, 0
      %p300 = por %p298, %p299
      %s301 = ssub.s32 %s39, %s46
      %p302 = scmp.eq.s32.totalorder %s301, 0
      %s304 = sadd.s32 %s303, 1
      %s305 = scalar_select %p302, %s303, %s304
      %p308 = pneg %p302
      %p309 = scmp.eq.s32.totalorder %s31, 3
      %p310 = por %p308, %p309
      %p311 = scmp.ne.s32.totalorder %s303, %s306
      %p312 = scmp.eq.s32.totalorder %s31, 0
      %p313 = por %p311, %p312
      %p314 = scmp.ne.s32.totalorder %s303, %s306
      %p315 = scmp.eq.s32.totalorder %s36, 3
      %p316 = por %p314, %p315
      %p317 = scmp.ne.s32.totalorder %s306, %s307
      %p318 = scmp.eq.s32.totalorder %s36, 0
      %p319 = por %p317, %p318
      %p320 = scmp.ne.s32.totalorder %s306, %s307
      %p321 = scmp.eq.s32.totalorder %s37, 3
      %p322 = por %p320, %p321
      %p324 = scmp.ne.s32.totalorder %s307, %s323
      %p325 = scmp.eq.s32.totalorder %s37, 0
      %p326 = por %p324, %p325
      %s327 = ssub.s32 %s39, %s46
      %p328 = scmp.eq.s32.totalorder %s327, 0
      %s330 = sadd.s32 %s329, 1
      %s331 = scalar_select %p328, %s329, %s330
      %p334 = pneg %p328
      %p335 = scmp.eq.s32.totalorder %s31, 3
      %p336 = por %p334, %p335
      %p337 = scmp.ne.s32.totalorder %s329, %s332
      %p338 = scmp.eq.s32.totalorder %s31, 0
      %p339 = por %p337, %p338
      %p340 = scmp.ne.s32.totalorder %s329, %s332
      %p341 = scmp.eq.s32.totalorder %s36, 3
      %p342 = por %p340, %p341
      %p343 = scmp.ne.s32.totalorder %s332, %s333
      %p344 = scmp.eq.s32.totalorder %s36, 0
      %p345 = por %p343, %p344
      %p346 = scmp.ne.s32.totalorder %s332, %s333
      %p347 = scmp.eq.s32.totalorder %s37, 3
      %p348 = por %p346, %p347
      %p350 = scmp.ne.s32.totalorder %s333, %s349
      %p351 = scmp.eq.s32.totalorder %s37, 0
      %p352 = por %p350, %p351
      %s353 = ssub.s32 %s39, %s46
      %p354 = scmp.eq.s32.totalorder %s353, 0
      %s356 = sadd.s32 %s355, 1
      %s357 = scalar_select %p354, %s355, %s356
      %p360 = pneg %p354
      %p361 = scmp.eq.s32.totalorder %s31, 3
      %p362 = por %p360, %p361
      %p363 = scmp.ne.s32.totalorder %s355, %s358
      %p364 = scmp.eq.s32.totalorder %s31, 0
      %p365 = por %p363, %p364
      %p366 = scmp.ne.s32.totalorder %s355, %s358
      %p367 = scmp.eq.s32.totalorder %s36, 3
      %p368 = por %p366, %p367
      %p369 = scmp.ne.s32.totalorder %s358, %s359
      %p370 = scmp.eq.s32.totalorder %s36, 0
      %p371 = por %p369, %p370
      %p372 = scmp.ne.s32.totalorder %s358, %s359
      %p373 = scmp.eq.s32.totalorder %s37, 3
      %p374 = por %p372, %p373
      %p376 = scmp.ne.s32.totalorder %s359, %s375
      %p377 = scmp.eq.s32.totalorder %s37, 0
      %p378 = por %p376, %p377
      %s379 = ssub.s32 %s39, %s46
      %p380 = scmp.eq.s32.totalorder %s379, 0
      %s382 = sadd.s32 %s381, 1
      %s383 = scalar_select %p380, %s381, %s382
      %p386 = pneg %p380
      %p387 = scmp.eq.s32.totalorder %s31, 3
      %p388 = por %p386, %p387
      %p389 = scmp.ne.s32.totalorder %s381, %s384
      %p390 = scmp.eq.s32.totalorder %s31, 0
      %p391 = por %p389, %p390
      %p392 = scmp.ne.s32.totalorder %s381, %s384
      %p393 = scmp.eq.s32.totalorder %s36, 3
      %p394 = por %p392, %p393
      %p395 = scmp.ne.s32.totalorder %s384, %s385
      %p396 = scmp.eq.s32.totalorder %s36, 0
      %p397 = por %p395, %p396
      %p398 = scmp.ne.s32.totalorder %s384, %s385
      %p399 = scmp.eq.s32.totalorder %s37, 3
      %p400 = por %p398, %p399
      %p402 = scmp.ne.s32.totalorder %s385, %s401
      %p403 = scmp.eq.s32.totalorder %s37, 0
      %p404 = por %p402, %p403
      %s405 = ssub.s32 %s39, %s46
      %p406 = scmp.eq.s32.totalorder %s405, 0
      %s408 = sadd.s32 %s407, 1
      %s409 = scalar_select %p406, %s407, %s408
      %p412 = pneg %p406
      %p413 = scmp.eq.s32.totalorder %s31, 3
      %p414 = por %p412, %p413
      %p415 = scmp.ne.s32.totalorder %s407, %s410
      %p416 = scmp.eq.s32.totalorder %s31, 0
      %p417 = por %p415, %p416
      %p418 = scmp.ne.s32.totalorder %s407, %s410
      %p419 = scmp.eq.s32.totalorder %s36, 3
      %p420 = por %p418, %p419
      %p421 = scmp.ne.s32.totalorder %s410, %s411
      %p422 = scmp.eq.s32.totalorder %s36, 0
      %p423 = por %p421, %p422
      %p424 = scmp.ne.s32.totalorder %s410, %s411
      %p425 = scmp.eq.s32.totalorder %s37, 3
      %p426 = por %p424, %p425
      %p428 = scmp.ne.s32.totalorder %s411, %s427
      %p429 = scmp.eq.s32.totalorder %s37, 0
      %p430 = por %p428, %p429
      %s431 = ssub.s32 %s39, %s46
      %p432 = scmp.eq.s32.totalorder %s431, 0
      %s434 = sadd.s32 %s433, 1
      %s435 = scalar_select %p432, %s433, %s434
      %p438 = pneg %p432
      %p439 = scmp.eq.s32.totalorder %s31, 3
      %p440 = por %p438, %p439
      %p441 = scmp.ne.s32.totalorder %s433, %s436
      %p442 = scmp.eq.s32.totalorder %s31, 0
      %p443 = por %p441, %p442
      %p444 = scmp.ne.s32.totalorder %s433, %s436
      %p445 = scmp.eq.s32.totalorder %s36, 3
      %p446 = por %p444, %p445
      %p447 = scmp.ne.s32.totalorder %s436, %s437
      %p448 = scmp.eq.s32.totalorder %s36, 0
      %p449 = por %p447, %p448
      %p450 = scmp.ne.s32.totalorder %s436, %s437
      %p451 = scmp.eq.s32.totalorder %s37, 3
      %p452 = por %p450, %p451
      %p454 = scmp.ne.s32.totalorder %s437, %s453
      %p455 = scmp.eq.s32.totalorder %s37, 0
      %p456 = por %p454, %p455
      %s457 = ssub.s32 %s39, %s46
      %p458 = scmp.eq.s32.totalorder %s457, 0
      %s460 = sadd.s32 %s459, 1
      %s461 = scalar_select %p458, %s459, %s460
      %p464 = pneg %p458
      %p465 = scmp.eq.s32.totalorder %s31, 3
      %p466 = por %p464, %p465
      %p467 = scmp.ne.s32.totalorder %s459, %s462
      %p468 = scmp.eq.s32.totalorder %s31, 0
      %p469 = por %p467, %p468
      %p470 = scmp.ne.s32.totalorder %s459, %s462
      %p471 = scmp.eq.s32.totalorder %s36, 3
      %p472 = por %p470, %p471
      %p473 = scmp.ne.s32.totalorder %s462, %s463
      %p474 = scmp.eq.s32.totalorder %s36, 0
      %p475 = por %p473, %p474
      %p476 = scmp.ne.s32.totalorder %s462, %s463
      %p477 = scmp.eq.s32.totalorder %s37, 3
      %p478 = por %p476, %p477
      %p480 = scmp.ne.s32.totalorder %s463, %s479
      %p481 = scmp.eq.s32.totalorder %s37, 0
      %p482 = por %p480, %p481
      %s483 = ssub.s32 %s39, %s46
      %p484 = scmp.eq.s32.totalorder %s483, 0
      %s486 = sadd.s32 %s485, 1
      %s487 = scalar_select %p484, %s485, %s486
      %p490 = pneg %p484
      %p491 = scmp.eq.s32.totalorder %s31, 3
      %p492 = por %p490, %p491
      %p493 = scmp.ne.s32.totalorder %s485, %s488
      %p494 = scmp.eq.s32.totalorder %s31, 0
      %p495 = por %p493, %p494
      %p496 = scmp.ne.s32.totalorder %s485, %s488
      %p497 = scmp.eq.s32.totalorder %s36, 3
      %p498 = por %p496, %p497
      %p499 = scmp.ne.s32.totalorder %s488, %s489
      %p500 = scmp.eq.s32.totalorder %s36, 0
      %p501 = por %p499, %p500
      %p502 = scmp.ne.s32.totalorder %s488, %s489
      %p503 = scmp.eq.s32.totalorder %s37, 3
      %p504 = por %p502, %p503
      %p506 = scmp.ne.s32.totalorder %s489, %s505
      %p507 = scmp.eq.s32.totalorder %s37, 0
      %p508 = por %p506, %p507
      %s509 = ssub.s32 %s39, %s46
      %p510 = scmp.eq.s32.totalorder %s509, 0
      %s512 = sadd.s32 %s511, 1
      %s513 = scalar_select %p510, %s511, %s512
      %p516 = pneg %p510
      %p517 = scmp.eq.s32.totalorder %s31, 3
      %p518 = por %p516, %p517
      %p519 = scmp.ne.s32.totalorder %s511, %s514
      %p520 = scmp.eq.s32.totalorder %s31, 0
      %p521 = por %p519, %p520
      %p522 = scmp.ne.s32.totalorder %s511, %s514
      %p523 = scmp.eq.s32.totalorder %s36, 3
      %p524 = por %p522, %p523
      %p525 = scmp.ne.s32.totalorder %s514, %s515
      %p526 = scmp.eq.s32.totalorder %s36, 0
      %p527 = por %p525, %p526
      %p528 = scmp.ne.s32.totalorder %s514, %s515
      %p529 = scmp.eq.s32.totalorder %s37, 3
      %p530 = por %p528, %p529
      %p532 = scmp.ne.s32.totalorder %s515, %s531
      %p533 = scmp.eq.s32.totalorder %s37, 0
      %p534 = por %p532, %p533
      %s535 = ssub.s32 %s39, %s46
      %p536 = scmp.eq.s32.totalorder %s535, 0
      %s538 = sadd.s32 %s537, 1
      %s539 = scalar_select %p536, %s537, %s538
      %p542 = pneg %p536
      %p543 = scmp.eq.s32.totalorder %s31, 3
      %p544 = por %p542, %p543
      %p545 = scmp.ne.s32.totalorder %s537, %s540
      %p546 = scmp.eq.s32.totalorder %s31, 0
      %p547 = por %p545, %p546
      %p548 = scmp.ne.s32.totalorder %s537, %s540
      %p549 = scmp.eq.s32.totalorder %s36, 3
      %p550 = por %p548, %p549
      %p551 = scmp.ne.s32.totalorder %s540, %s541
      %p552 = scmp.eq.s32.totalorder %s36, 0
      %p553 = por %p551, %p552
      %p554 = scmp.ne.s32.totalorder %s540, %s541
      %p555 = scmp.eq.s32.totalorder %s37, 3
      %p556 = por %p554, %p555
      %p558 = scmp.ne.s32.totalorder %s541, %s557
      %p559 = scmp.eq.s32.totalorder %s37, 0
      %p560 = por %p558, %p559
      %s561 = ssub.s32 %s39, %s46
      %p562 = scmp.eq.s32.totalorder %s561, 0
      %s564 = sadd.s32 %s563, 1
      %s565 = scalar_select %p562, %s563, %s564
      %p568 = pneg %p562
      %p569 = scmp.eq.s32.totalorder %s31, 3
      %p570 = por %p568, %p569
      %p571 = scmp.ne.s32.totalorder %s563, %s566
      %p572 = scmp.eq.s32.totalorder %s31, 0
      %p573 = por %p571, %p572
      %p574 = scmp.ne.s32.totalorder %s563, %s566
      %p575 = scmp.eq.s32.totalorder %s36, 3
      %p576 = por %p574, %p575
      %p577 = scmp.ne.s32.totalorder %s566, %s567
      %p578 = scmp.eq.s32.totalorder %s36, 0
      %p579 = por %p577, %p578
      %p580 = scmp.ne.s32.totalorder %s566, %s567
      %p581 = scmp.eq.s32.totalorder %s37, 3
      %p582 = por %p580, %p581
      %p584 = scmp.ne.s32.totalorder %s567, %s583
      %p585 = scmp.eq.s32.totalorder %s37, 0
      %p586 = por %p584, %p585
      %s587 = ssub.s32 %s39, %s46
      %p588 = scmp.eq.s32.totalorder %s587, 0
      %s590 = sadd.s32 %s589, 1
      %s591 = scalar_select %p588, %s589, %s590
      %p594 = pneg %p588
      %p595 = scmp.eq.s32.totalorder %s31, 3
      %p596 = por %p594, %p595
      %p597 = scmp.ne.s32.totalorder %s589, %s592
      %p598 = scmp.eq.s32.totalorder %s31, 0
      %p599 = por %p597, %p598
      %p600 = scmp.ne.s32.totalorder %s589, %s592
      %p601 = scmp.eq.s32.totalorder %s36, 3
      %p602 = por %p600, %p601
      %p603 = scmp.ne.s32.totalorder %s592, %s593
      %p604 = scmp.eq.s32.totalorder %s36, 0
      %p605 = por %p603, %p604
      %p606 = scmp.ne.s32.totalorder %s592, %s593
      %p607 = scmp.eq.s32.totalorder %s37, 3
      %p608 = por %p606, %p607
      %p610 = scmp.ne.s32.totalorder %s593, %s609
      %p611 = scmp.eq.s32.totalorder %s37, 0
      %p612 = por %p610, %p611
      %s613 = ssub.s32 %s38, %s50
      %p614 = scmp.eq.s32.totalorder %s613, 0
      %s616 = sadd.s32 %s615, 1
      %s617 = scalar_select %p614, %s615, %s616
      %p620 = pneg %p614
      %p621 = scmp.eq.s32.totalorder %s31, 3
      %p622 = por %p620, %p621
      %p623 = scmp.ne.s32.totalorder %s615, %s618
      %p624 = scmp.eq.s32.totalorder %s31, 0
      %p625 = por %p623, %p624
      %p626 = scmp.ne.s32.totalorder %s615, %s618
      %p627 = scmp.eq.s32.totalorder %s36, 3
      %p628 = por %p626, %p627
      %p629 = scmp.ne.s32.totalorder %s618, %s619
      %p630 = scmp.eq.s32.totalorder %s36, 0
      %p631 = por %p629, %p630
      %p632 = scmp.ne.s32.totalorder %s618, %s619
      %p633 = scmp.eq.s32.totalorder %s37, 3
      %p634 = por %p632, %p633
      %p636 = scmp.ne.s32.totalorder %s619, %s635
      %p637 = scmp.eq.s32.totalorder %s37, 0
      %p638 = por %p636, %p637
      %p639 = scmp.le.s32.totalorder 1, %s31
      %p640 = scmp.lt.s32.totalorder %s31, 5
      %p641 = pnand %p639, %p640
      %p642 = pneg %p641
      // Predicated region
      $region9: #{decoder_forward.1} parent=5 // pred_check
        _
      $region10: #{decoder_forward.1} parent=5 // pred_check_branch
        %644 = sbr.rel (%p641) target = $region12
      $region11: #{decoder_forward.1} parent=5 // pred_region
        %s645 = ssub.s32 %s31, 1
        // Predicated region
        $region13: #{decoder_forward.1} parent=11 // pred_check
          %p646 = pneg %p116
        $region14: #{decoder_forward.1} parent=11 // pred_check_branch
          %648 = sbr.rel (%p646) target = $region16
        $region15: #{decoder_forward.1} parent=11 // pred_region
          _
        $region16: #{decoder_forward.1} parent=11 // pred_fallthru
          _
        // Predicated region
        $region17: #{decoder_forward.1} parent=11 // pred_check
          %p649 = pneg %p137
        $region18: #{decoder_forward.1} parent=11 // pred_check_branch
          %651 = sbr.rel (%p649) target = $region20
        $region19: #{decoder_forward.1} parent=11 // pred_region
          _
        $region20: #{decoder_forward.1} parent=11 // pred_fallthru
          _
      $region12: #{decoder_forward.1} parent=5 // pred_fallthru
        _
      %p652 = scmp.lt.s32.totalorder %s31, 4
      // Predicated region
      $region21: #{decoder_forward.1} parent=5 // pred_check
        %p653 = pneg %p652
      $region22: #{decoder_forward.1} parent=5 // pred_check_branch
        %655 = sbr.rel (%p653) target = $region24
      $region23: #{decoder_forward.1} parent=5 // pred_region
        // Predicated region
        $region25: #{decoder_forward.1} parent=23 // pred_check
          %p656 = pneg %p63
        $region26: #{decoder_forward.1} parent=23 // pred_check_branch
          %658 = sbr.rel (%p656) target = $region28
        $region27: #{decoder_forward.1} parent=23 // pred_region
          %p659 = scmp.lt.s32.totalorder %s38, 1
          %s660 = scalar_select %p659, %s38, 1
          %s661 = smul.addr %s660, 8
          %s662 = scalar_lea.vmem %s0, %s661
        $region28: #{decoder_forward.1} parent=23 // pred_fallthru
          _
        // Predicated region
        $region29: #{decoder_forward.1} parent=23 // pred_check
          %p663 = pneg %p89
        $region30: #{decoder_forward.1} parent=23 // pred_check_branch
          %665 = sbr.rel (%p663) target = $region32
        $region31: #{decoder_forward.1} parent=23 // pred_region
          %p666 = scmp.lt.s32.totalorder %s38, 1
          %s667 = scalar_select %p666, %s38, 1
          %s668 = smul.addr %s667, 8
          %s669 = scalar_lea.vmem %s1, %s668
        $region32: #{decoder_forward.1} parent=23 // pred_fallthru
          _
        // Predicated region
        $region33: #{decoder_forward.1} parent=23 // pred_check
          %p670 = pneg %p157
        $region34: #{decoder_forward.1} parent=23 // pred_check_branch
          %672 = sbr.rel (%p670) target = $region36
        $region35: #{decoder_forward.1} parent=23 // pred_region
          %p673 = scmp.lt.s32.totalorder %s39, 1
          %s674 = scalar_select %p673, %s39, 1
          %s675 = smul.addr %s674, 4
          %s676 = smul.addr %s675, 4
          %s677 = scalar_lea.vmem %s4, %s676
        $region36: #{decoder_forward.1} parent=23 // pred_fallthru
          _
        // Predicated region
        $region37: #{decoder_forward.1} parent=23 // pred_check
          %p678 = pneg %p183
        $region38: #{decoder_forward.1} parent=23 // pred_check_branch
          %680 = sbr.rel (%p678) target = $region40
        $region39: #{decoder_forward.1} parent=23 // pred_region
          %p681 = scmp.lt.s32.totalorder %s39, 1
          %s682 = scalar_select %p681, %s39, 1
          %s683 = smul.addr %s682, 4
          %s684 = smul.addr %s683, 4
          %s685 = scalar_lea.vmem %s5, %s684
        $region40: #{decoder_forward.1} parent=23 // pred_fallthru
          _
        // Predicated region
        $region41: #{decoder_forward.1} parent=23 // pred_check
          %p686 = pneg %p209
        $region42: #{decoder_forward.1} parent=23 // pred_check_branch
          %688 = sbr.rel (%p686) target = $region44
        $region43: #{decoder_forward.1} parent=23 // pred_region
          %p689 = scmp.lt.s32.totalorder %s39, 1
          %s690 = scalar_select %p689, %s39, 1
          %s691 = smul.addr %s690, 4
          %s692 = smul.addr %s691, 4
          %s693 = scalar_lea.vmem %s6, %s692
        $region44: #{decoder_forward.1} parent=23 // pred_fallthru
          _
        // Predicated region
        $region45: #{decoder_forward.1} parent=23 // pred_check
          %p694 = pneg %p235
        $region46: #{decoder_forward.1} parent=23 // pred_check_branch
          %696 = sbr.rel (%p694) target = $region48
        $region47: #{decoder_forward.1} parent=23 // pred_region
          %p697 = scmp.lt.s32.totalorder %s39, 1
          %s698 = scalar_select %p697, %s39, 1
          %s699 = smul.addr %s698, 4
          %s700 = smul.addr %s699, 4
          %s701 = scalar_lea.vmem %s7, %s700
        $region48: #{decoder_forward.1} parent=23 // pred_fallthru
          _
        // Predicated region
        $region49: #{decoder_forward.1} parent=23 // pred_check
          %p702 = pneg %p261
        $region50: #{decoder_forward.1} parent=23 // pred_check_branch
          %704 = sbr.rel (%p702) target = $region52
        $region51: #{decoder_forward.1} parent=23 // pred_region
          %p705 = scmp.lt.s32.totalorder %s39, 1
          %s706 = scalar_select %p705, %s39, 1
          %s707 = smul.addr %s706, 4
          %s708 = smul.addr %s707, 4
          %s709 = scalar_lea.vmem %s8, %s708
        $region52: #{decoder_forward.1} parent=23 // pred_fallthru
          _
        // Predicated region
        $region53: #{decoder_forward.1} parent=23 // pred_check
          %p710 = pneg %p287
        $region54: #{decoder_forward.1} parent=23 // pred_check_branch
          %712 = sbr.rel (%p710) target = $region56
        $region55: #{decoder_forward.1} parent=23 // pred_region
          %p713 = scmp.lt.s32.totalorder %s39, 1
          %s714 = scalar_select %p713, %s39, 1
          %s715 = smul.addr %s714, 4
          %s716 = smul.addr %s715, 4
          %s717 = scalar_lea.vmem %s9, %s716
        $region56: #{decoder_forward.1} parent=23 // pred_fallthru
          _
        // Predicated region
        $region57: #{decoder_forward.1} parent=23 // pred_check
          %p718 = pneg %p313
        $region58: #{decoder_forward.1} parent=23 // pred_check_branch
          %720 = sbr.rel (%p718) target = $region60
        $region59: #{decoder_forward.1} parent=23 // pred_region
          %p721 = scmp.lt.s32.totalorder %s39, 1
          %s722 = scalar_select %p721, %s39, 1
          %s723 = smul.addr %s722, 4
          %s724 = smul.addr %s723, 4
          %s725 = scalar_lea.vmem %s10, %s724
        $region60: #{decoder_forward.1} parent=23 // pred_fallthru
          _
        // Predicated region
        $region61: #{decoder_forward.1} parent=23 // pred_check
          %p726 = pneg %p339
        $region62: #{decoder_forward.1} parent=23 // pred_check_branch
          %728 = sbr.rel (%p726) target = $region64
        $region63: #{decoder_forward.1} parent=23 // pred_region
          %p729 = scmp.lt.s32.totalorder %s39, 1
          %s730 = scalar_select %p729, %s39, 1
          %s731 = smul.addr %s730, 4
          %s732 = smul.addr %s731, 4
          %s733 = scalar_lea.vmem %s11, %s732
        $region64: #{decoder_forward.1} parent=23 // pred_fallthru
          _
        // Predicated region
        $region65: #{decoder_forward.1} parent=23 // pred_check
          %p734 = pneg %p365
        $region66: #{decoder_forward.1} parent=23 // pred_check_branch
          %736 = sbr.rel (%p734) target = $region68
        $region67: #{decoder_forward.1} parent=23 // pred_region
          %p737 = scmp.lt.s32.totalorder %s39, 1
          %s738 = scalar_select %p737, %s39, 1
          %s739 = smul.addr %s738, 4
          %s740 = smul.addr %s739, 4
          %s741 = scalar_lea.vmem %s12, %s740
        $region68: #{decoder_forward.1} parent=23 // pred_fallthru
          _
        // Predicated region
        $region69: #{decoder_forward.1} parent=23 // pred_check
          %p742 = pneg %p391
        $region70: #{decoder_forward.1} parent=23 // pred_check_branch
          %744 = sbr.rel (%p742) target = $region72
        $region71: #{decoder_forward.1} parent=23 // pred_region
          %p745 = scmp.lt.s32.totalorder %s39, 1
          %s746 = scalar_select %p745, %s39, 1
          %s747 = scalar_lea.vmem %s13, %s746
        $region72: #{decoder_forward.1} parent=23 // pred_fallthru
          _
        // Predicated region
        $region73: #{decoder_forward.1} parent=23 // pred_check
          %p748 = pneg %p417
        $region74: #{decoder_forward.1} parent=23 // pred_check_branch
          %750 = sbr.rel (%p748) target = $region76
        $region75: #{decoder_forward.1} parent=23 // pred_region
          %p751 = scmp.lt.s32.totalorder %s39, 1
          %s752 = scalar_select %p751, %s39, 1
          %s753 = smul.addr %s752, 8
          %s754 = smul.addr %s753, 4
          %s755 = scalar_lea.vmem %s14, %s754
        $region76: #{decoder_forward.1} parent=23 // pred_fallthru
          _
        // Predicated region
        $region77: #{decoder_forward.1} parent=23 // pred_check
          %p756 = pneg %p443
        $region78: #{decoder_forward.1} parent=23 // pred_check_branch
          %758 = sbr.rel (%p756) target = $region80
        $region79: #{decoder_forward.1} parent=23 // pred_region
          %p759 = scmp.lt.s32.totalorder %s39, 1
          %s760 = scalar_select %p759, %s39, 1
          %s761 = scalar_lea.vmem %s15, %s760
        $region80: #{decoder_forward.1} parent=23 // pred_fallthru
          _
        // Predicated region
        $region81: #{decoder_forward.1} parent=23 // pred_check
          %p762 = pneg %p469
        $region82: #{decoder_forward.1} parent=23 // pred_check_branch
          %764 = sbr.rel (%p762) target = $region84
        $region83: #{decoder_forward.1} parent=23 // pred_region
          %p765 = scmp.lt.s32.totalorder %s39, 1
          %s766 = scalar_select %p765, %s39, 1
          %s767 = scalar_lea.vmem %s16, %s766
        $region84: #{decoder_forward.1} parent=23 // pred_fallthru
          _
        // Predicated region
        $region85: #{decoder_forward.1} parent=23 // pred_check
          %p768 = pneg %p495
        $region86: #{decoder_forward.1} parent=23 // pred_check_branch
          %770 = sbr.rel (%p768) target = $region88
        $region87: #{decoder_forward.1} parent=23 // pred_region
          %p771 = scmp.lt.s32.totalorder %s39, 1
          %s772 = scalar_select %p771, %s39, 1
          %s773 = scalar_lea.vmem %s17, %s772
        $region88: #{decoder_forward.1} parent=23 // pred_fallthru
          _
        // Predicated region
        $region89: #{decoder_forward.1} parent=23 // pred_check
          %p774 = pneg %p521
        $region90: #{decoder_forward.1} parent=23 // pred_check_branch
          %776 = sbr.rel (%p774) target = $region92
        $region91: #{decoder_forward.1} parent=23 // pred_region
          %p777 = scmp.lt.s32.totalorder %s39, 1
          %s778 = scalar_select %p777, %s39, 1
          %s779 = scalar_lea.vmem %s18, %s778
        $region92: #{decoder_forward.1} parent=23 // pred_fallthru
          _
        // Predicated region
        $region93: #{decoder_forward.1} parent=23 // pred_check
          %p780 = pneg %p547
        $region94: #{decoder_forward.1} parent=23 // pred_check_branch
          %782 = sbr.rel (%p780) target = $region96
        $region95: #{decoder_forward.1} parent=23 // pred_region
          %p783 = scmp.lt.s32.totalorder %s39, 1
          %s784 = scalar_select %p783, %s39, 1
          %s785 = scalar_lea.vmem %s19, %s784
        $region96: #{decoder_forward.1} parent=23 // pred_fallthru
          _
        // Predicated region
        $region97: #{decoder_forward.1} parent=23 // pred_check
          %p786 = pneg %p573
        $region98: #{decoder_forward.1} parent=23 // pred_check_branch
          %788 = sbr.rel (%p786) target = $region100
        $region99: #{decoder_forward.1} parent=23 // pred_region
          %p789 = scmp.lt.s32.totalorder %s39, 1
          %s790 = scalar_select %p789, %s39, 1
          %s791 = scalar_lea.vmem %s20, %s790
        $region100: #{decoder_forward.1} parent=23 // pred_fallthru
          _
        // Predicated region
        $region101: #{decoder_forward.1} parent=23 // pred_check
          %p792 = pneg %p599
        $region102: #{decoder_forward.1} parent=23 // pred_check_branch
          %794 = sbr.rel (%p792) target = $region104
        $region103: #{decoder_forward.1} parent=23 // pred_region
          %p795 = scmp.lt.s32.totalorder %s39, 1
          %s796 = scalar_select %p795, %s39, 1
          %s797 = scalar_lea.vmem %s21, %s796
        $region104: #{decoder_forward.1} parent=23 // pred_fallthru
          _
      $region24: #{decoder_forward.1} parent=5 // pred_fallthru
        _
      %p798 = scmp.le.s32.totalorder 1, %s31
      %p799 = scmp.lt.s32.totalorder %s31, 5
      %p800 = pnand %p798, %p799
      %p801 = pneg %p800
      // Predicated region
      $region105: #{decoder_forward.1} parent=5 // pred_check
        _
      $region106: #{decoder_forward.1} parent=5 // pred_check_branch
        %803 = sbr.rel (%p800) target = $region108
      $region107: #{decoder_forward.1} parent=5 // pred_region
        %s804 = ssub.s32 %s31, 1
        %p805 = scmp.lt.s32.totalorder %s40, 1
        %s806 = scalar_select %p805, %s40, 1
        %s807 = smul.addr %s806, 8
        %s808 = scalar_lea.vmem %s0, %s807
        %p809 = pneg %p69
        %p810 = pneg %p66
        %p811 = scmp.lt.s32.totalorder %s40, 1
        %s812 = scalar_select %p811, %s40, 1
        %s813 = smul.addr %s812, 8
        %s814 = scalar_lea.vmem %s1, %s813
        %p815 = pneg %p95
        %p816 = pneg %p92
        %p817 = pneg %p116
        %p818 = pneg %p113
        %p819 = pneg %p137
        %p820 = pneg %p134
        %p821 = scmp.lt.s32.totalorder %s41, 1
        %s822 = scalar_select %p821, %s41, 1
        %s823 = smul.addr %s822, 4
        %s824 = smul.addr %s823, 4
        %s825 = scalar_lea.vmem %s4, %s824
        %p826 = pneg %p163
        %p827 = pneg %p160
        %p828 = scmp.lt.s32.totalorder %s41, 1
        %s829 = scalar_select %p828, %s41, 1
        %s830 = smul.addr %s829, 4
        %s831 = smul.addr %s830, 4
        %s832 = scalar_lea.vmem %s5, %s831
        %p833 = pneg %p189
        %p834 = pneg %p186
        %p835 = scmp.lt.s32.totalorder %s41, 1
        %s836 = scalar_select %p835, %s41, 1
        %s837 = smul.addr %s836, 4
        %s838 = smul.addr %s837, 4
        %s839 = scalar_lea.vmem %s6, %s838
        %p840 = pneg %p215
        %p841 = pneg %p212
        %p842 = scmp.lt.s32.totalorder %s41, 1
        %s843 = scalar_select %p842, %s41, 1
        %s844 = smul.addr %s843, 4
        %s845 = smul.addr %s844, 4
        %s846 = scalar_lea.vmem %s7, %s845
        %p847 = pneg %p241
        %p848 = pneg %p238
        %p849 = scmp.lt.s32.totalorder %s41, 1
        %s850 = scalar_select %p849, %s41, 1
        %s851 = smul.addr %s850, 4
        %s852 = smul.addr %s851, 4
        %s853 = scalar_lea.vmem %s8, %s852
        %p854 = pneg %p267
        %p855 = pneg %p264
        %p856 = scmp.lt.s32.totalorder %s41, 1
        %s857 = scalar_select %p856, %s41, 1
        %s858 = smul.addr %s857, 4
        %s859 = smul.addr %s858, 4
        %s860 = scalar_lea.vmem %s9, %s859
        %p861 = pneg %p293
        %p862 = pneg %p290
        %p863 = scmp.lt.s32.totalorder %s41, 1
        %s864 = scalar_select %p863, %s41, 1
        %s865 = smul.addr %s864, 4
        %s866 = smul.addr %s865, 4
        %s867 = scalar_lea.vmem %s10, %s866
        %p868 = pneg %p319
        %p869 = pneg %p316
        %p870 = scmp.lt.s32.totalorder %s41, 1
        %s871 = scalar_select %p870, %s41, 1
        %s872 = smul.addr %s871, 4
        %s873 = smul.addr %s872, 4
        %s874 = scalar_lea.vmem %s11, %s873
        %p875 = pneg %p345
        %p876 = pneg %p342
        %p877 = scmp.lt.s32.totalorder %s41, 1
        %s878 = scalar_select %p877, %s41, 1
        %s879 = smul.addr %s878, 4
        %s880 = smul.addr %s879, 4
        %s881 = scalar_lea.vmem %s12, %s880
        %p882 = pneg %p371
        %p883 = pneg %p368
        %p884 = scmp.lt.s32.totalorder %s41, 1
        %s885 = scalar_select %p884, %s41, 1
        %s886 = scalar_lea.vmem %s13, %s885
        %p887 = pneg %p397
        %p888 = pneg %p394
        %p889 = scmp.lt.s32.totalorder %s41, 1
        %s890 = scalar_select %p889, %s41, 1
        %s891 = smul.addr %s890, 8
        %s892 = smul.addr %s891, 4
        %s893 = scalar_lea.vmem %s14, %s892
        %p894 = pneg %p423
        %p895 = pneg %p420
        %p896 = scmp.lt.s32.totalorder %s41, 1
        %s897 = scalar_select %p896, %s41, 1
        %s898 = scalar_lea.vmem %s15, %s897
        %p899 = pneg %p449
        %p900 = pneg %p446
        %p901 = scmp.lt.s32.totalorder %s41, 1
        %s902 = scalar_select %p901, %s41, 1
        %s903 = scalar_lea.vmem %s16, %s902
        %p904 = pneg %p475
        %p905 = pneg %p472
        %p906 = scmp.lt.s32.totalorder %s41, 1
        %s907 = scalar_select %p906, %s41, 1
        %s908 = scalar_lea.vmem %s17, %s907
        %p909 = pneg %p501
        %p910 = pneg %p498
        %p911 = scmp.lt.s32.totalorder %s41, 1
        %s912 = scalar_select %p911, %s41, 1
        %s913 = scalar_lea.vmem %s18, %s912
        %p914 = pneg %p527
        %p915 = pneg %p524
        %p916 = scmp.lt.s32.totalorder %s41, 1
        %s917 = scalar_select %p916, %s41, 1
        %s918 = scalar_lea.vmem %s19, %s917
        %p919 = pneg %p553
        %p920 = pneg %p550
        %p921 = scmp.lt.s32.totalorder %s41, 1
        %s922 = scalar_select %p921, %s41, 1
        %s923 = scalar_lea.vmem %s20, %s922
        %p924 = pneg %p579
        %p925 = pneg %p576
        %p926 = scmp.lt.s32.totalorder %s41, 1
        %s927 = scalar_select %p926, %s41, 1
        %s928 = scalar_lea.vmem %s21, %s927
        %p929 = pneg %p605
        %p930 = pneg %p602
        %p931 = pneg %p631
        %p932 = pneg %p628
        %s933 = sand.u32 %s618, 1
        %s934 = scalar_lea.sflag [#allocation3], %s933
        %s935 = sand.u32 %s618, 1
        %s936 = smul.addr %s935, 8
        %s937 = scalar_lea.vmem [#allocation2], %s936
        %p938 = scmp.lt.s32.totalorder %s40, 1
        %s939 = scalar_select %p938, %s40, 1
        %s940 = smul.addr %s939, 8
        %s941 = scalar_lea.vmem %s0, %s940
        %p942 = scmp.lt.s32.totalorder %s40, 1
        %s943 = scalar_select %p942, %s40, 1
        %s944 = smul.addr %s943, 8
        %s945 = scalar_lea.vmem %s1, %s944
        %p946 = scmp.lt.s32.totalorder %s41, 1
        %s947 = scalar_select %p946, %s41, 1
        %s948 = smul.addr %s947, 4
        %s949 = smul.addr %s948, 4
        %s950 = scalar_lea.vmem %s4, %s949
        %p951 = scmp.lt.s32.totalorder %s41, 1
        %s952 = scalar_select %p951, %s41, 1
        %s953 = smul.addr %s952, 4
        %s954 = smul.addr %s953, 4
        %s955 = scalar_lea.vmem %s5, %s954
        %p956 = scmp.lt.s32.totalorder %s41, 1
        %s957 = scalar_select %p956, %s41, 1
        %s958 = smul.addr %s957, 4
        %s959 = smul.addr %s958, 4
        %s960 = scalar_lea.vmem %s6, %s959
        %p961 = scmp.lt.s32.totalorder %s41, 1
        %s962 = scalar_select %p961, %s41, 1
        %s963 = smul.addr %s962, 4
        %s964 = smul.addr %s963, 4
        %s965 = scalar_lea.vmem %s7, %s964
        %p966 = scmp.lt.s32.totalorder %s41, 1
        %s967 = scalar_select %p966, %s41, 1
        %s968 = smul.addr %s967, 4
        %s969 = smul.addr %s968, 4
        %s970 = scalar_lea.vmem %s8, %s969
        %p971 = scmp.lt.s32.totalorder %s41, 1
        %s972 = scalar_select %p971, %s41, 1
        %s973 = smul.addr %s972, 4
        %s974 = smul.addr %s973, 4
        %s975 = scalar_lea.vmem %s9, %s974
        %p976 = scmp.lt.s32.totalorder %s41, 1
        %s977 = scalar_select %p976, %s41, 1
        %s978 = smul.addr %s977, 4
        %s979 = smul.addr %s978, 4
        %s980 = scalar_lea.vmem %s10, %s979
        %p981 = scmp.lt.s32.totalorder %s41, 1
        %s982 = scalar_select %p981, %s41, 1
        %s983 = smul.addr %s982, 4
        %s984 = smul.addr %s983, 4
        %s985 = scalar_lea.vmem %s11, %s984
        %p986 = scmp.lt.s32.totalorder %s41, 1
        %s987 = scalar_select %p986, %s41, 1
        %s988 = smul.addr %s987, 4
        %s989 = smul.addr %s988, 4
        %s990 = scalar_lea.vmem %s12, %s989
        %p991 = scmp.lt.s32.totalorder %s41, 1
        %s992 = scalar_select %p991, %s41, 1
        %s993 = scalar_lea.vmem %s13, %s992
        %p994 = scmp.lt.s32.totalorder %s41, 1
        %s995 = scalar_select %p994, %s41, 1
        %s996 = smul.addr %s995, 8
        %s997 = smul.addr %s996, 4
        %s998 = scalar_lea.vmem %s14, %s997
        %p999 = scmp.lt.s32.totalorder %s41, 1
        %s1000 = scalar_select %p999, %s41, 1
        %s1001 = scalar_lea.vmem %s15, %s1000
        %p1002 = scmp.lt.s32.totalorder %s41, 1
        %s1003 = scalar_select %p1002, %s41, 1
        %s1004 = scalar_lea.vmem %s16, %s1003
        %p1005 = scmp.lt.s32.totalorder %s41, 1
        %s1006 = scalar_select %p1005, %s41, 1
        %s1007 = scalar_lea.vmem %s17, %s1006
        %p1008 = scmp.lt.s32.totalorder %s41, 1
        %s1009 = scalar_select %p1008, %s41, 1
        %s1010 = scalar_lea.vmem %s18, %s1009
        %p1011 = scmp.lt.s32.totalorder %s41, 1
        %s1012 = scalar_select %p1011, %s41, 1
        %s1013 = scalar_lea.vmem %s19, %s1012
        %p1014 = scmp.lt.s32.totalorder %s41, 1
        %s1015 = scalar_select %p1014, %s41, 1
        %s1016 = scalar_lea.vmem %s20, %s1015
        %p1017 = scmp.lt.s32.totalorder %s41, 1
        %s1018 = scalar_select %p1017, %s41, 1
        %s1019 = scalar_lea.vmem %s21, %s1018
        %p1021 = scmp.eq.s32.totalorder %s41, 0
        // Predicated region
        $region109: #{decoder_forward.1} parent=107 // pred_check
          %p1022 = pneg %p1021
        $region110: #{decoder_forward.1} parent=107 // pred_check_branch
          %1024 = sbr.rel (%p1022) target = $region112
        $region111: #{decoder_forward.1} parent=107 // pred_region
          %v1025 = vld [vmem:[%s941] sm:$0xff]
          %vm1026 = vcmask 261120
          %1027 = vst.msk [vmem:[%s937] sm:$0xff] %vm1026, %v1025
        $region112: #{decoder_forward.1} parent=107 // pred_fallthru
          _
        %v1028 = vld [vmem:[%s937] sm:$0xff]
        %v1029 = vld [vmem:[%s945] sm:$0xff]
        %v1030 = vld [vmem:[%s2] sm:$0xff]
        %v1031 = vld [vmem:[%s3] sm:$0xff]
        %v1032 = vpack.c.bf16 %v1028, %v1028
        %v1033 = vld [vmem:[%s950] sm:$0xf]
        %v1034 = vld [vmem:[%s950 + $0x4] sm:$0xf]
        %v1035 = vld [vmem:[%s950 + $0x8] sm:$0xf]
        %v1036 = vld [vmem:[%s950 + $0xc] sm:$0xf]
        %v1041 = vunpack.c.l.b16 %v1033
        %v1042 = vunpack.c.l.b16 %v1034
        %v1043 = vunpack.c.l.b16 %v1035
        %v1044 = vunpack.c.l.b16 %v1036
        %v1045 = vpack.c.b16 %v1042, %v1041
        %v1046 = vpack.c.b16 %v1044, %v1043
        %vm1049 = vcmask 261120
        %v1051 = vsel %vm1049, %v1032, 0
        %1053 = vmatprep.subr.bf16.mxu0 0
        %1054 = vmatpush1.bf16.msra.mxu0 0
        %1055 = vmatprep.subr.bf16.mxu0 0
        %1056 = vmatpush1.bf16.msra.mxu0 0
        %1057 = vmatprep.subr.bf16.mxu0 0
        %1058 = vmatpush1.bf16.msra.mxu0 0
        %1059 = vmatprep.subr.bf16.mxu0 0
        %1060 = vmatpush1.bf16.msra.mxu0 0
        %1061 = vmatprep.subr.bf16.mxu0 0
        %1062 = vmatpush1.bf16.msra.mxu0 0
        %1063 = vmatprep.subr.bf16.mxu0 0
        %1064 = vmatpush1.bf16.msra.mxu0 0
        %1065 = vmatprep.subr.bf16.mxu0 0
        %1066 = vmatpush1.bf16.msra.mxu0 %v1046
        %1067 = vmatprep.subr.bf16.mxu0 0
        %1068 = vmatpush1.bf16.msra.mxu0 %v1045
        %1069 = vmatprep.subr.bf16.mxu0 0
        %1070 = vmatpush2.bf16.msra.mxu0 0
        %1071 = vmatprep.subr.bf16.mxu0 0
        %1072 = vmatpush2.bf16.msra.mxu0 0
        %1073 = vmatprep.subr.bf16.mxu0 0
        %1074 = vmatpush2.bf16.msra.mxu0 0
        %1075 = vmatprep.subr.bf16.mxu0 0
        %1076 = vmatpush2.bf16.msra.mxu0 0
        %1077 = vmatprep.subr.bf16.mxu0 0
        %1078 = vmatpush2.bf16.msra.mxu0 0
        %1079 = vmatprep.subr.bf16.mxu0 0
        %1080 = vmatpush2.bf16.msra.mxu0 0
        %1081 = vmatprep.subr.bf16.mxu0 0
        %1082 = vmatpush2.bf16.msra.mxu0 0
        %1083 = vmatprep.subr.bf16.mxu0 0
        %1084 = vmatpush2.bf16.msra.mxu0 0
        %1085 = vmatprep.mubr.bf16.mxu0 0
        %1086 = vmatmul.mubr.bf16.gmra.mxu0 %v1051
        %v1087 = vpop.f32.mrf.mxu0
        %v1088 = vadd.f32 0.0, %v1087
        %v1089 = vpop.f32.mrf.mxu0
        %v1090 = vpop.f32.mrf.mxu0
        %v1091 = vpop.f32.mrf.mxu0
        %1092 = vdwg.mxu0
        %v1093 = vld [vmem:[%s955] sm:$0xf]
        %v1094 = vld [vmem:[%s955 + $0x4] sm:$0xf]
        %v1095 = vld [vmem:[%s955 + $0x8] sm:$0xf]
        %v1096 = vld [vmem:[%s955 + $0xc] sm:$0xf]
        %v1101 = vunpack.c.l.b16 %v1093
        %v1102 = vunpack.c.l.b16 %v1094
        %v1103 = vunpack.c.l.b16 %v1095
        %v1104 = vunpack.c.l.b16 %v1096
        %v1105 = vpack.c.b16 %v1102, %v1101
        %v1106 = vpack.c.b16 %v1104, %v1103
        %1109 = vmatprep.subr.bf16.mxu0 0
        %1110 = vmatpush1.bf16.msra.mxu0 0
        %1111 = vmatprep.subr.bf16.mxu0 0
        %1112 = vmatpush1.bf16.msra.mxu0 0
        %1113 = vmatprep.subr.bf16.mxu0 0
        %1114 = vmatpush1.bf16.msra.mxu0 0
        %1115 = vmatprep.subr.bf16.mxu0 0
        %1116 = vmatpush1.bf16.msra.mxu0 0
        %1117 = vmatprep.subr.bf16.mxu0 0
        %1118 = vmatpush1.bf16.msra.mxu0 0
        %1119 = vmatprep.subr.bf16.mxu0 0
        %1120 = vmatpush1.bf16.msra.mxu0 0
        %1121 = vmatprep.subr.bf16.mxu0 0
        %1122 = vmatpush1.bf16.msra.mxu0 %v1106
        %1123 = vmatprep.subr.bf16.mxu0 0
        %1124 = vmatpush1.bf16.msra.mxu0 %v1105
        %1125 = vmatprep.subr.bf16.mxu0 0
        %1126 = vmatpush2.bf16.msra.mxu0 0
        %1127 = vmatprep.subr.bf16.mxu0 0
        %1128 = vmatpush2.bf16.msra.mxu0 0
        %1129 = vmatprep.subr.bf16.mxu0 0
        %1130 = vmatpush2.bf16.msra.mxu0 0
        %1131 = vmatprep.subr.bf16.mxu0 0
        %1132 = vmatpush2.bf16.msra.mxu0 0
        %1133 = vmatprep.subr.bf16.mxu0 0
        %1134 = vmatpush2.bf16.msra.mxu0 0
        %1135 = vmatprep.subr.bf16.mxu0 0
        %1136 = vmatpush2.bf16.msra.mxu0 0
        %1137 = vmatprep.subr.bf16.mxu0 0
        %1138 = vmatpush2.bf16.msra.mxu0 0
        %1139 = vmatprep.subr.bf16.mxu0 0
        %1140 = vmatpush2.bf16.msra.mxu0 0
        %1141 = vmatprep.mubr.bf16.mxu0 0
        %1142 = vmatmul.mubr.bf16.gmra.mxu0 %v1051
        %v1143 = vpop.f32.mrf.mxu0
        %v1144 = vadd.f32 0.0, %v1143
        %v1145 = vpop.f32.mrf.mxu0
        %v1146 = vpop.f32.mrf.mxu0
        %v1147 = vpop.f32.mrf.mxu0
        %1148 = vdwg.mxu0
        %v1149 = vld [vmem:[%s960] sm:$0xf]
        %v1150 = vld [vmem:[%s960 + $0x4] sm:$0xf]
        %v1151 = vld [vmem:[%s960 + $0x8] sm:$0xf]
        %v1152 = vld [vmem:[%s960 + $0xc] sm:$0xf]
        %v1157 = vunpack.c.l.b16 %v1149
        %v1158 = vunpack.c.l.b16 %v1150
        %v1159 = vunpack.c.l.b16 %v1151
        %v1160 = vunpack.c.l.b16 %v1152
        %v1161 = vpack.c.b16 %v1158, %v1157
        %v1162 = vpack.c.b16 %v1160, %v1159
        %1165 = vmatprep.subr.bf16.mxu0 0
        %1166 = vmatpush1.bf16.msra.mxu0 0
        %1167 = vmatprep.subr.bf16.mxu0 0
        %1168 = vmatpush1.bf16.msra.mxu0 0
        %1169 = vmatprep.subr.bf16.mxu0 0
        %1170 = vmatpush1.bf16.msra.mxu0 0
        %1171 = vmatprep.subr.bf16.mxu0 0
        %1172 = vmatpush1.bf16.msra.mxu0 0
        %1173 = vmatprep.subr.bf16.mxu0 0
        %1174 = vmatpush1.bf16.msra.mxu0 0
        %1175 = vmatprep.subr.bf16.mxu0 0
        %1176 = vmatpush1.bf16.msra.mxu0 0
        %1177 = vmatprep.subr.bf16.mxu0 0
        %1178 = vmatpush1.bf16.msra.mxu0 %v1162
        %1179 = vmatprep.subr.bf16.mxu0 0
        %1180 = vmatpush1.bf16.msra.mxu0 %v1161
        %1181 = vmatprep.subr.bf16.mxu0 0
        %1182 = vmatpush2.bf16.msra.mxu0 0
        %1183 = vmatprep.subr.bf16.mxu0 0
        %1184 = vmatpush2.bf16.msra.mxu0 0
        %1185 = vmatprep.subr.bf16.mxu0 0
        %1186 = vmatpush2.bf16.msra.mxu0 0
        %1187 = vmatprep.subr.bf16.mxu0 0
        %1188 = vmatpush2.bf16.msra.mxu0 0
        %1189 = vmatprep.subr.bf16.mxu0 0
        %1190 = vmatpush2.bf16.msra.mxu0 0
        %1191 = vmatprep.subr.bf16.mxu0 0
        %1192 = vmatpush2.bf16.msra.mxu0 0
        %1193 = vmatprep.subr.bf16.mxu0 0
        %1194 = vmatpush2.bf16.msra.mxu0 0
        %1195 = vmatprep.subr.bf16.mxu0 0
        %1196 = vmatpush2.bf16.msra.mxu0 0
        %1197 = vmatprep.mubr.bf16.mxu0 0
        %1198 = vmatmul.mubr.bf16.gmra.mxu0 %v1051
        %v1199 = vpop.f32.mrf.mxu0
        %v1200 = vadd.f32 0.0, %v1199
        %v1201 = vpop.f32.mrf.mxu0
        %v1202 = vpop.f32.mrf.mxu0
        %v1203 = vpop.f32.mrf.mxu0
        %1204 = vdwg.mxu0
        %1206 = vrot.lane.b32.xlu0 %v1088, 120
        %v1207 = vpop.permute.xlu0 %1206
        %1209 = vrot.lane.b32.xlu0 %v1088, 112
        %v1210 = vpop.permute.xlu0 %1209
        %1212 = vrot.lane.b32.xlu0 %v1088, 104
        %v1213 = vpop.permute.xlu0 %1212
        %v1215 = vpack.c.bf16 %v1088, %v1088
        %v1216 = vpack.c.bf16 %v1207, %v1207
        %v1217 = vpack.c.bf16 %v1210, %v1210
        %v1218 = vpack.c.bf16 %v1213, %v1213
        %1220 = vrot.lane.b32.xlu0 %v1144, 120
        %v1221 = vpop.permute.xlu0 %1220
        %1223 = vrot.lane.b32.xlu0 %v1144, 112
        %v1224 = vpop.permute.xlu0 %1223
        %1226 = vrot.lane.b32.xlu0 %v1144, 104
        %v1227 = vpop.permute.xlu0 %1226
        %v1229 = vpack.c.bf16 %v1144, %v1144
        %v1230 = vpack.c.bf16 %v1221, %v1221
        %v1231 = vpack.c.bf16 %v1224, %v1224
        %v1232 = vpack.c.bf16 %v1227, %v1227
        %1234 = vrot.lane.b32.xlu0 %v1200, 120
        %v1235 = vpop.permute.xlu0 %1234
        %1237 = vrot.lane.b32.xlu0 %v1200, 112
        %v1238 = vpop.permute.xlu0 %1237
        %1240 = vrot.lane.b32.xlu0 %v1200, 104
        %v1241 = vpop.permute.xlu0 %1240
        %v1243 = vpack.c.bf16 %v1200, %v1200
        %v1244 = vpack.c.bf16 %v1235, %v1235
        %v1245 = vpack.c.bf16 %v1238, %v1238
        %v1246 = vpack.c.bf16 %v1241, %v1241
        %vm1247 = vcmask 64512
        %v1249 = vsel %vm1247, %v1215, 0
        %v1252 = vsel %vm1247, %v1229, 0
        %1254 = vmatprep.subr.bf16.mxu0 0
        %1255 = vmatpush1.bf16.xpose.msra.mxu0 0
        %1256 = vmatprep.subr.bf16.mxu0 0
        %1257 = vmatpush1.bf16.xpose.msra.mxu0 0
        %1258 = vmatprep.subr.bf16.mxu0 0
        %1259 = vmatpush1.bf16.xpose.msra.mxu0 0
        %1260 = vmatprep.subr.bf16.mxu0 0
        %1261 = vmatpush1.bf16.xpose.msra.mxu0 0
        %1262 = vmatprep.subr.bf16.mxu0 0
        %1263 = vmatpush1.bf16.xpose.msra.mxu0 0
        %1264 = vmatprep.subr.bf16.mxu0 0
        %1265 = vmatpush1.bf16.xpose.msra.mxu0 0
        %1266 = vmatprep.subr.bf16.mxu0 0
        %1267 = vmatpush1.bf16.xpose.msra.mxu0 0
        %1268 = vmatprep.subr.bf16.mxu0 0
        %1269 = vmatpush1.bf16.xpose.msra.mxu0 %v1252
        %1270 = vmatprep.subr.bf16.mxu0 0
        %1271 = vmatpush2.bf16.xpose.msra.mxu0 0
        %1272 = vmatprep.subr.bf16.mxu0 0
        %1273 = vmatpush2.bf16.xpose.msra.mxu0 0
        %1274 = vmatprep.subr.bf16.mxu0 0
        %1275 = vmatpush2.bf16.xpose.msra.mxu0 0
        %1276 = vmatprep.subr.bf16.mxu0 0
        %1277 = vmatpush2.bf16.xpose.msra.mxu0 0
        %1278 = vmatprep.subr.bf16.mxu0 0
        %1279 = vmatpush2.bf16.xpose.msra.mxu0 0
        %1280 = vmatprep.subr.bf16.mxu0 0
        %1281 = vmatpush2.bf16.xpose.msra.mxu0 0
        %1282 = vmatprep.subr.bf16.mxu0 0
        %1283 = vmatpush2.bf16.xpose.msra.mxu0 0
        %1284 = vmatprep.subr.bf16.mxu0 0
        %1285 = vmatpush2.bf16.xpose.msra.mxu0 0
        %1286 = vmatprep.mubr.bf16.mxu0 0
        %1287 = vmatmul.mubr.bf16.gmra.mxu0 %v1249
        %v1288 = vpop.f32.mrf.mxu0
        %v1289 = vadd.f32 0.0, %v1288
        %v1290 = vpop.f32.mrf.mxu0
        %v1291 = vpop.f32.mrf.mxu0
        %v1292 = vpop.f32.mrf.mxu0
        %1293 = vdwg.mxu0
        %v1295 = vsel %vm1247, %v1216, 0
        %v1298 = vsel %vm1247, %v1230, 0
        %1300 = vmatprep.subr.bf16.mxu0 0
        %1301 = vmatpush1.bf16.xpose.msra.mxu0 0
        %1302 = vmatprep.subr.bf16.mxu0 0
        %1303 = vmatpush1.bf16.xpose.msra.mxu0 0
        %1304 = vmatprep.subr.bf16.mxu0 0
        %1305 = vmatpush1.bf16.xpose.msra.mxu0 0
        %1306 = vmatprep.subr.bf16.mxu0 0
        %1307 = vmatpush1.bf16.xpose.msra.mxu0 0
        %1308 = vmatprep.subr.bf16.mxu0 0
        %1309 = vmatpush1.bf16.xpose.msra.mxu0 0
        %1310 = vmatprep.subr.bf16.mxu0 0
        %1311 = vmatpush1.bf16.xpose.msra.mxu0 0
        %1312 = vmatprep.subr.bf16.mxu0 0
        %1313 = vmatpush1.bf16.xpose.msra.mxu0 0
        %1314 = vmatprep.subr.bf16.mxu0 0
        %1315 = vmatpush1.bf16.xpose.msra.mxu0 %v1298
        %1316 = vmatprep.subr.bf16.mxu0 0
        %1317 = vmatpush2.bf16.xpose.msra.mxu0 0
        %1318 = vmatprep.subr.bf16.mxu0 0
        %1319 = vmatpush2.bf16.xpose.msra.mxu0 0
        %1320 = vmatprep.subr.bf16.mxu0 0
        %1321 = vmatpush2.bf16.xpose.msra.mxu0 0
        %1322 = vmatprep.subr.bf16.mxu0 0
        %1323 = vmatpush2.bf16.xpose.msra.mxu0 0
        %1324 = vmatprep.subr.bf16.mxu0 0
        %1325 = vmatpush2.bf16.xpose.msra.mxu0 0
        %1326 = vmatprep.subr.bf16.mxu0 0
        %1327 = vmatpush2.bf16.xpose.msra.mxu0 0
        %1328 = vmatprep.subr.bf16.mxu0 0
        %1329 = vmatpush2.bf16.xpose.msra.mxu0 0
        %1330 = vmatprep.subr.bf16.mxu0 0
        %1331 = vmatpush2.bf16.xpose.msra.mxu0 0
        %1332 = vmatprep.mubr.bf16.mxu0 0
        %1333 = vmatmul.mubr.bf16.gmra.mxu0 %v1295
        %v1334 = vpop.f32.mrf.mxu0
        %v1335 = vadd.f32 0.0, %v1334
        %v1336 = vpop.f32.mrf.mxu0
        %v1337 = vpop.f32.mrf.mxu0
        %v1338 = vpop.f32.mrf.mxu0
        %1339 = vdwg.mxu0
        %v1341 = vsel %vm1247, %v1217, 0
        %v1344 = vsel %vm1247, %v1231, 0
        %1346 = vmatprep.subr.bf16.mxu0 0
        %1347 = vmatpush1.bf16.xpose.msra.mxu0 0
        %1348 = vmatprep.subr.bf16.mxu0 0
        %1349 = vmatpush1.bf16.xpose.msra.mxu0 0
        %1350 = vmatprep.subr.bf16.mxu0 0
        %1351 = vmatpush1.bf16.xpose.msra.mxu0 0
        %1352 = vmatprep.subr.bf16.mxu0 0
        %1353 = vmatpush1.bf16.xpose.msra.mxu0 0
        %1354 = vmatprep.subr.bf16.mxu0 0
        %1355 = vmatpush1.bf16.xpose.msra.mxu0 0
        %1356 = vmatprep.subr.bf16.mxu0 0
        %1357 = vmatpush1.bf16.xpose.msra.mxu0 0
        %1358 = vmatprep.subr.bf16.mxu0 0
        %1359 = vmatpush1.bf16.xpose.msra.mxu0 0
        %1360 = vmatprep.subr.bf16.mxu0 0
        %1361 = vmatpush1.bf16.xpose.msra.mxu0 %v1344
        %1362 = vmatprep.subr.bf16.mxu0 0
        %1363 = vmatpush2.bf16.xpose.msra.mxu0 0
        %1364 = vmatprep.subr.bf16.mxu0 0
        %1365 = vmatpush2.bf16.xpose.msra.mxu0 0
        %1366 = vmatprep.subr.bf16.mxu0 0
        %1367 = vmatpush2.bf16.xpose.msra.mxu0 0
        %1368 = vmatprep.subr.bf16.mxu0 0
        %1369 = vmatpush2.bf16.xpose.msra.mxu0 0
        %1370 = vmatprep.subr.bf16.mxu0 0
        %1371 = vmatpush2.bf16.xpose.msra.mxu0 0
        %1372 = vmatprep.subr.bf16.mxu0 0
        %1373 = vmatpush2.bf16.xpose.msra.mxu0 0
        %1374 = vmatprep.subr.bf16.mxu0 0
        %1375 = vmatpush2.bf16.xpose.msra.mxu0 0
        %1376 = vmatprep.subr.bf16.mxu0 0
        %1377 = vmatpush2.bf16.xpose.msra.mxu0 0
        %1378 = vmatprep.mubr.bf16.mxu0 0
        %1379 = vmatmul.mubr.bf16.gmra.mxu0 %v1341
        %v1380 = vpop.f32.mrf.mxu0
        %v1381 = vadd.f32 0.0, %v1380
        %v1382 = vpop.f32.mrf.mxu0
        %v1383 = vpop.f32.mrf.mxu0
        %v1384 = vpop.f32.mrf.mxu0
        %1385 = vdwg.mxu0
        %v1387 = vsel %vm1247, %v1218, 0
        %v1390 = vsel %vm1247, %v1232, 0
        %1392 = vmatprep.subr.bf16.mxu0 0
        %1393 = vmatpush1.bf16.xpose.msra.mxu0 0
        %1394 = vmatprep.subr.bf16.mxu0 0
        %1395 = vmatpush1.bf16.xpose.msra.mxu0 0
        %1396 = vmatprep.subr.bf16.mxu0 0
        %1397 = vmatpush1.bf16.xpose.msra.mxu0 0
        %1398 = vmatprep.subr.bf16.mxu0 0
        %1399 = vmatpush1.bf16.xpose.msra.mxu0 0
        %1400 = vmatprep.subr.bf16.mxu0 0
        %1401 = vmatpush1.bf16.xpose.msra.mxu0 0
        %1402 = vmatprep.subr.bf16.mxu0 0
        %1403 = vmatpush1.bf16.xpose.msra.mxu0 0
        %1404 = vmatprep.subr.bf16.mxu0 0
        %1405 = vmatpush1.bf16.xpose.msra.mxu0 0
        %1406 = vmatprep.subr.bf16.mxu0 0
        %1407 = vmatpush1.bf16.xpose.msra.mxu0 %v1390
        %1408 = vmatprep.subr.bf16.mxu0 0
        %1409 = vmatpush2.bf16.xpose.msra.mxu0 0
        %1410 = vmatprep.subr.bf16.mxu0 0
        %1411 = vmatpush2.bf16.xpose.msra.mxu0 0
        %1412 = vmatprep.subr.bf16.mxu0 0
        %1413 = vmatpush2.bf16.xpose.msra.mxu0 0
        %1414 = vmatprep.subr.bf16.mxu0 0
        %1415 = vmatpush2.bf16.xpose.msra.mxu0 0
        %1416 = vmatprep.subr.bf16.mxu0 0
        %1417 = vmatpush2.bf16.xpose.msra.mxu0 0
        %1418 = vmatprep.subr.bf16.mxu0 0
        %1419 = vmatpush2.bf16.xpose.msra.mxu0 0
        %1420 = vmatprep.subr.bf16.mxu0 0
        %1421 = vmatpush2.bf16.xpose.msra.mxu0 0
        %1422 = vmatprep.subr.bf16.mxu0 0
        %1423 = vmatpush2.bf16.xpose.msra.mxu0 0
        %1424 = vmatprep.mubr.bf16.mxu0 0
        %1425 = vmatmul.mubr.bf16.gmra.mxu0 %v1387
        %v1426 = vpop.f32.mrf.mxu0
        %v1427 = vadd.f32 0.0, %v1426
        %v1428 = vpop.f32.mrf.mxu0
        %v1429 = vpop.f32.mrf.mxu0
        %v1430 = vpop.f32.mrf.mxu0
        %1431 = vdwg.mxu0
        %v1432 = vmul.f32 %v1289, 0.35355338
        %v1433 = vmul.f32 %v1335, 0.35355338
        %v1434 = vmul.f32 %v1381, 0.35355338
        %v1435 = vmul.f32 %v1427, 0.35355338
        %v1436 = vadd.f32 %v1432, %v1030
        %v1437 = vadd.f32 %v1433, %v1030
        %v1438 = vadd.f32 %v1434, %v1030
        %v1439 = vadd.f32 %v1435, %v1030
        %v1440 = vsel %vm1247, %v1436, -inf
        %1441 = vmax.xlane.f32.xlu0 %v1440
        %v1442 = vpop.xlane.xlu0 %1441
        %v1443 = vsel %vm1247, %v1437, -inf
        %1444 = vmax.xlane.f32.xlu0 %v1443
        %v1445 = vpop.xlane.xlu0 %1444
        %v1446 = vsel %vm1247, %v1438, -inf
        %1447 = vmax.xlane.f32.xlu0 %v1446
        %v1448 = vpop.xlane.xlu0 %1447
        %v1449 = vsel %vm1247, %v1439, -inf
        %1450 = vmax.xlane.f32.xlu0 %v1449
        %v1451 = vpop.xlane.xlu0 %1450
        %v1452 = vsub.f32 %v1436, %v1442
        %v1453 = vsub.f32 %v1437, %v1445
        %v1454 = vsub.f32 %v1438, %v1448
        %v1455 = vsub.f32 %v1439, %v1451
        %v1456 = vmul.f32 %v1452, 1.442695
        %v1457 = vpow.pop %v1456
        %v1458 = vmul.f32 %v1453, 1.442695
        %v1459 = vpow.pop %v1458
        %v1460 = vmul.f32 %v1454, 1.442695
        %v1461 = vpow.pop %v1460
        %v1462 = vmul.f32 %v1455, 1.442695
        %v1463 = vpow.pop %v1462
        %v1464 = vsel %vm1247, %v1457, 0.0
        %1465 = vadd.xlane.f32.xlu0 %v1464
        %v1466 = vpop.xlane.xlu0 %1465
        %v1467 = vsel %vm1247, %v1459, 0.0
        %1468 = vadd.xlane.f32.xlu0 %v1467
        %v1469 = vpop.xlane.xlu0 %1468
        %v1470 = vsel %vm1247, %v1461, 0.0
        %1471 = vadd.xlane.f32.xlu0 %v1470
        %v1472 = vpop.xlane.xlu0 %1471
        %v1473 = vsel %vm1247, %v1463, 0.0
        %1474 = vadd.xlane.f32.xlu0 %v1473
        %v1475 = vpop.xlane.xlu0 %1474
        %v1476 = vrcp.pop %v1466
        %v1477 = vrcp.pop %v1469
        %v1478 = vrcp.pop %v1472
        %v1479 = vrcp.pop %v1475
        %v1480 = vmul.f32 %v1457, %v1476
        %v1481 = vmul.f32 %v1459, %v1477
        %v1482 = vmul.f32 %v1461, %v1478
        %v1483 = vmul.f32 %v1463, %v1479
        %v1484 = vpack.c.bf16 %v1480, %v1480
        %v1485 = vpack.c.bf16 %v1481, %v1481
        %v1486 = vpack.c.bf16 %v1482, %v1482
        %v1487 = vpack.c.bf16 %v1483, %v1483
        %v1489 = vsel %vm1247, %v1484, 0
        %vm1491 = vcmask 1043456
        %v1493 = vsel %vm1491, %v1243, 0
        %1495 = vmatprep.subr.bf16.mxu0 0
        %1496 = vmatpush1.bf16.msra.mxu0 0
        %1497 = vmatprep.subr.bf16.mxu0 0
        %1498 = vmatpush1.bf16.msra.mxu0 0
        %1499 = vmatprep.subr.bf16.mxu0 0
        %1500 = vmatpush1.bf16.msra.mxu0 0
        %1501 = vmatprep.subr.bf16.mxu0 0
        %1502 = vmatpush1.bf16.msra.mxu0 0
        %1503 = vmatprep.subr.bf16.mxu0 0
        %1504 = vmatpush1.bf16.msra.mxu0 0
        %1505 = vmatprep.subr.bf16.mxu0 0
        %1506 = vmatpush1.bf16.msra.mxu0 0
        %1507 = vmatprep.subr.bf16.mxu0 0
        %1508 = vmatpush1.bf16.msra.mxu0 0
        %1509 = vmatprep.subr.bf16.mxu0 0
        %1510 = vmatpush1.bf16.msra.mxu0 %v1493
        %1511 = vmatprep.subr.bf16.mxu0 0
        %1512 = vmatpush2.bf16.msra.mxu0 0
        %1513 = vmatprep.subr.bf16.mxu0 0
        %1514 = vmatpush2.bf16.msra.mxu0 0
        %1515 = vmatprep.subr.bf16.mxu0 0
        %1516 = vmatpush2.bf16.msra.mxu0 0
        %1517 = vmatprep.subr.bf16.mxu0 0
        %1518 = vmatpush2.bf16.msra.mxu0 0
        %1519 = vmatprep.subr.bf16.mxu0 0
        %1520 = vmatpush2.bf16.msra.mxu0 0
        %1521 = vmatprep.subr.bf16.mxu0 0
        %1522 = vmatpush2.bf16.msra.mxu0 0
        %1523 = vmatprep.subr.bf16.mxu0 0
        %1524 = vmatpush2.bf16.msra.mxu0 0
        %1525 = vmatprep.subr.bf16.mxu0 0
        %1526 = vmatpush2.bf16.msra.mxu0 0
        %1527 = vmatprep.mubr.bf16.mxu0 0
        %1528 = vmatmul.mubr.bf16.gmra.mxu0 %v1489
        %v1529 = vpop.f32.mrf.mxu0
        %v1530 = vadd.f32 0.0, %v1529
        %v1531 = vpop.f32.mrf.mxu0
        %v1532 = vpop.f32.mrf.mxu0
        %v1533 = vpop.f32.mrf.mxu0
        %1534 = vdwg.mxu0
        %v1536 = vsel %vm1247, %v1485, 0
        %v1539 = vsel %vm1491, %v1244, 0
        %1541 = vmatprep.subr.bf16.mxu0 0
        %1542 = vmatpush1.bf16.msra.mxu0 0
        %1543 = vmatprep.subr.bf16.mxu0 0
        %1544 = vmatpush1.bf16.msra.mxu0 0
        %1545 = vmatprep.subr.bf16.mxu0 0
        %1546 = vmatpush1.bf16.msra.mxu0 0
        %1547 = vmatprep.subr.bf16.mxu0 0
        %1548 = vmatpush1.bf16.msra.mxu0 0
        %1549 = vmatprep.subr.bf16.mxu0 0
        %1550 = vmatpush1.bf16.msra.mxu0 0
        %1551 = vmatprep.subr.bf16.mxu0 0
        %1552 = vmatpush1.bf16.msra.mxu0 0
        %1553 = vmatprep.subr.bf16.mxu0 0
        %1554 = vmatpush1.bf16.msra.mxu0 0
        %1555 = vmatprep.subr.bf16.mxu0 0
        %1556 = vmatpush1.bf16.msra.mxu0 %v1539
        %1557 = vmatprep.subr.bf16.mxu0 0
        %1558 = vmatpush2.bf16.msra.mxu0 0
        %1559 = vmatprep.subr.bf16.mxu0 0
        %1560 = vmatpush2.bf16.msra.mxu0 0
        %1561 = vmatprep.subr.bf16.mxu0 0
        %1562 = vmatpush2.bf16.msra.mxu0 0
        %1563 = vmatprep.subr.bf16.mxu0 0
        %1564 = vmatpush2.bf16.msra.mxu0 0
        %1565 = vmatprep.subr.bf16.mxu0 0
        %1566 = vmatpush2.bf16.msra.mxu0 0
        %1567 = vmatprep.subr.bf16.mxu0 0
        %1568 = vmatpush2.bf16.msra.mxu0 0
        %1569 = vmatprep.subr.bf16.mxu0 0
        %1570 = vmatpush2.bf16.msra.mxu0 0
        %1571 = vmatprep.subr.bf16.mxu0 0
        %1572 = vmatpush2.bf16.msra.mxu0 0
        %1573 = vmatprep.mubr.bf16.mxu0 0
        %1574 = vmatmul.mubr.bf16.gmra.mxu0 %v1536
        %v1575 = vpop.f32.mrf.mxu0
        %v1576 = vadd.f32 0.0, %v1575
        %v1577 = vpop.f32.mrf.mxu0
        %v1578 = vpop.f32.mrf.mxu0
        %v1579 = vpop.f32.mrf.mxu0
        %1580 = vdwg.mxu0
        %v1582 = vsel %vm1247, %v1486, 0
        %v1585 = vsel %vm1491, %v1245, 0
        %1587 = vmatprep.subr.bf16.mxu0 0
        %1588 = vmatpush1.bf16.msra.mxu0 0
        %1589 = vmatprep.subr.bf16.mxu0 0
        %1590 = vmatpush1.bf16.msra.mxu0 0
        %1591 = vmatprep.subr.bf16.mxu0 0
        %1592 = vmatpush1.bf16.msra.mxu0 0
        %1593 = vmatprep.subr.bf16.mxu0 0
        %1594 = vmatpush1.bf16.msra.mxu0 0
        %1595 = vmatprep.subr.bf16.mxu0 0
        %1596 = vmatpush1.bf16.msra.mxu0 0
        %1597 = vmatprep.subr.bf16.mxu0 0
        %1598 = vmatpush1.bf16.msra.mxu0 0
        %1599 = vmatprep.subr.bf16.mxu0 0
        %1600 = vmatpush1.bf16.msra.mxu0 0
        %1601 = vmatprep.subr.bf16.mxu0 0
        %1602 = vmatpush1.bf16.msra.mxu0 %v1585
        %1603 = vmatprep.subr.bf16.mxu0 0
        %1604 = vmatpush2.bf16.msra.mxu0 0
        %1605 = vmatprep.subr.bf16.mxu0 0
        %1606 = vmatpush2.bf16.msra.mxu0 0
        %1607 = vmatprep.subr.bf16.mxu0 0
        %1608 = vmatpush2.bf16.msra.mxu0 0
        %1609 = vmatprep.subr.bf16.mxu0 0
        %1610 = vmatpush2.bf16.msra.mxu0 0
        %1611 = vmatprep.subr.bf16.mxu0 0
        %1612 = vmatpush2.bf16.msra.mxu0 0
        %1613 = vmatprep.subr.bf16.mxu0 0
        %1614 = vmatpush2.bf16.msra.mxu0 0
        %1615 = vmatprep.subr.bf16.mxu0 0
        %1616 = vmatpush2.bf16.msra.mxu0 0
        %1617 = vmatprep.subr.bf16.mxu0 0
        %1618 = vmatpush2.bf16.msra.mxu0 0
        %1619 = vmatprep.mubr.bf16.mxu0 0
        %1620 = vmatmul.mubr.bf16.gmra.mxu0 %v1582
        %v1621 = vpop.f32.mrf.mxu0
        %v1622 = vadd.f32 0.0, %v1621
        %v1623 = vpop.f32.mrf.mxu0
        %v1624 = vpop.f32.mrf.mxu0
        %v1625 = vpop.f32.mrf.mxu0
        %1626 = vdwg.mxu0
        %v1628 = vsel %vm1247, %v1487, 0
        %v1631 = vsel %vm1491, %v1246, 0
        %1633 = vmatprep.subr.bf16.mxu0 0
        %1634 = vmatpush1.bf16.msra.mxu0 0
        %1635 = vmatprep.subr.bf16.mxu0 0
        %1636 = vmatpush1.bf16.msra.mxu0 0
        %1637 = vmatprep.subr.bf16.mxu0 0
        %1638 = vmatpush1.bf16.msra.mxu0 0
        %1639 = vmatprep.subr.bf16.mxu0 0
        %1640 = vmatpush1.bf16.msra.mxu0 0
        %1641 = vmatprep.subr.bf16.mxu0 0
        %1642 = vmatpush1.bf16.msra.mxu0 0
        %1643 = vmatprep.subr.bf16.mxu0 0
        %1644 = vmatpush1.bf16.msra.mxu0 0
        %1645 = vmatprep.subr.bf16.mxu0 0
        %1646 = vmatpush1.bf16.msra.mxu0 0
        %1647 = vmatprep.subr.bf16.mxu0 0
        %1648 = vmatpush1.bf16.msra.mxu0 %v1631
        %1649 = vmatprep.subr.bf16.mxu0 0
        %1650 = vmatpush2.bf16.msra.mxu0 0
        %1651 = vmatprep.subr.bf16.mxu0 0
        %1652 = vmatpush2.bf16.msra.mxu0 0
        %1653 = vmatprep.subr.bf16.mxu0 0
        %1654 = vmatpush2.bf16.msra.mxu0 0
        %1655 = vmatprep.subr.bf16.mxu0 0
        %1656 = vmatpush2.bf16.msra.mxu0 0
        %1657 = vmatprep.subr.bf16.mxu0 0
        %1658 = vmatpush2.bf16.msra.mxu0 0
        %1659 = vmatprep.subr.bf16.mxu0 0
        %1660 = vmatpush2.bf16.msra.mxu0 0
        %1661 = vmatprep.subr.bf16.mxu0 0
        %1662 = vmatpush2.bf16.msra.mxu0 0
        %1663 = vmatprep.subr.bf16.mxu0 0
        %1664 = vmatpush2.bf16.msra.mxu0 0
        %1665 = vmatprep.mubr.bf16.mxu0 0
        %1666 = vmatmul.mubr.bf16.gmra.mxu0 %v1628
        %v1667 = vpop.f32.mrf.mxu0
        %v1668 = vadd.f32 0.0, %v1667
        %v1669 = vpop.f32.mrf.mxu0
        %v1670 = vpop.f32.mrf.mxu0
        %v1671 = vpop.f32.mrf.mxu0
        %1672 = vdwg.mxu0
        %1674 = vrot.lane.b32.xlu0 %v1576, 8
        %v1675 = vpop.permute.xlu0 %1674
        %1678 = vrot.lane.b32.xlu0 %v1622, 16
        %v1679 = vpop.permute.xlu0 %1678
        %1682 = vrot.lane.b32.xlu0 %v1668, 24
        %v1683 = vpop.permute.xlu0 %1682
        %v1685 = vsel %vm1247, %v1530, %v1675
        %vm1686 = vcmask 130048
        %v1687 = vsel %vm1686, %v1685, %v1679
        %vm1688 = vcmask 195584
        %v1689 = vsel %vm1688, %v1687, %v1683
        %v1690 = vpack.c.bf16 %v1689, %v1689
        %v1691 = vld [vmem:[%s965] sm:$0xf]
        %v1692 = vld [vmem:[%s965 + $0x4] sm:$0xf]
        %v1693 = vld [vmem:[%s965 + $0x8] sm:$0xf]
        %v1694 = vld [vmem:[%s965 + $0xc] sm:$0xf]
        %v1699 = vunpack.c.l.b16 %v1691
        %v1700 = vunpack.c.l.b16 %v1692
        %v1701 = vunpack.c.l.b16 %v1693
        %v1702 = vunpack.c.l.b16 %v1694
        %v1703 = vpack.c.b16 %v1700, %v1699
        %v1704 = vpack.c.b16 %v1702, %v1701
        %v1708 = vsel %vm1049, %v1690, 0
        %1710 = vmatprep.subr.bf16.mxu0 0
        %1711 = vmatpush1.bf16.msra.mxu0 0
        %1712 = vmatprep.subr.bf16.mxu0 0
        %1713 = vmatpush1.bf16.msra.mxu0 0
        %1714 = vmatprep.subr.bf16.mxu0 0
        %1715 = vmatpush1.bf16.msra.mxu0 0
        %1716 = vmatprep.subr.bf16.mxu0 0
        %1717 = vmatpush1.bf16.msra.mxu0 0
        %1718 = vmatprep.subr.bf16.mxu0 0
        %1719 = vmatpush1.bf16.msra.mxu0 0
        %1720 = vmatprep.subr.bf16.mxu0 0
        %1721 = vmatpush1.bf16.msra.mxu0 0
        %1722 = vmatprep.subr.bf16.mxu0 0
        %1723 = vmatpush1.bf16.msra.mxu0 %v1704
        %1724 = vmatprep.subr.bf16.mxu0 0
        %1725 = vmatpush1.bf16.msra.mxu0 %v1703
        %1726 = vmatprep.subr.bf16.mxu0 0
        %1727 = vmatpush2.bf16.msra.mxu0 0
        %1728 = vmatprep.subr.bf16.mxu0 0
        %1729 = vmatpush2.bf16.msra.mxu0 0
        %1730 = vmatprep.subr.bf16.mxu0 0
        %1731 = vmatpush2.bf16.msra.mxu0 0
        %1732 = vmatprep.subr.bf16.mxu0 0
        %1733 = vmatpush2.bf16.msra.mxu0 0
        %1734 = vmatprep.subr.bf16.mxu0 0
        %1735 = vmatpush2.bf16.msra.mxu0 0
        %1736 = vmatprep.subr.bf16.mxu0 0
        %1737 = vmatpush2.bf16.msra.mxu0 0
        %1738 = vmatprep.subr.bf16.mxu0 0
        %1739 = vmatpush2.bf16.msra.mxu0 0
        %1740 = vmatprep.subr.bf16.mxu0 0
        %1741 = vmatpush2.bf16.msra.mxu0 0
        %1742 = vmatprep.mubr.bf16.mxu0 0
        %1743 = vmatmul.mubr.bf16.gmra.mxu0 %v1708
        %v1744 = vpop.f32.mrf.mxu0
        %v1745 = vadd.f32 0.0, %v1744
        %v1746 = vpop.f32.mrf.mxu0
        %v1747 = vpop.f32.mrf.mxu0
        %v1748 = vpop.f32.mrf.mxu0
        %1749 = vdwg.mxu0
        %v1750 = vadd.f32 %v1028, %v1745
        %v1751 = vsel %vm1049, %v1750, 0.0
        %1752 = vadd.xlane.f32.xlu0 %v1751
        %v1753 = vpop.xlane.xlu0 %1752
        %v1754 = vrcp.pop 32.0
        %v1755 = vmul.f32 %v1753, %v1754
        %v1756 = vsub.f32 %v1750, %v1755
        %v1757 = vmul.f32 %v1756, %v1756
        %v1758 = vsel %vm1049, %v1757, 0.0
        %1759 = vadd.xlane.f32.xlu0 %v1758
        %v1760 = vpop.xlane.xlu0 %1759
        %v1761 = vmul.f32 %v1760, %v1754
        %v1762 = vadd.f32 %v1761, 1e-05
        %v1763 = vrsqrt.pop %v1762
        %v1764 = vmul.f32 %v1756, %v1763
        %v1765 = vld [vmem:[%s1004] sm:$0x1]
        %v1767 = vlaneseq
        %v1768 = vshrl.u32 %v1767, 7
        %v1769 = vsub.s32 0, %v1768
        %v1770 = vrot.slane %v1765, %v1769
        %v1772 = vmul.f32 %v1764, %v1770
        %v1773 = vld [vmem:[%s1007] sm:$0x1]
        %v1775 = vlaneseq
        %v1776 = vshrl.u32 %v1775, 7
        %v1777 = vsub.s32 0, %v1776
        %v1778 = vrot.slane %v1773, %v1777
        %v1780 = vadd.f32 %v1772, %v1778
        %v1781 = vpack.c.bf16 %v1780, %v1780
        %v1782 = vpack.c.bf16 %v1029, %v1029
        %v1783 = vld [vmem:[%s970] sm:$0xf]
        %v1784 = vld [vmem:[%s970 + $0x4] sm:$0xf]
        %v1785 = vld [vmem:[%s970 + $0x8] sm:$0xf]
        %v1786 = vld [vmem:[%s970 + $0xc] sm:$0xf]
        %v1791 = vunpack.c.l.b16 %v1783
        %v1792 = vunpack.c.l.b16 %v1784
        %v1793 = vunpack.c.l.b16 %v1785
        %v1794 = vunpack.c.l.b16 %v1786
        %v1795 = vpack.c.b16 %v1792, %v1791
        %v1796 = vpack.c.b16 %v1794, %v1793
        %v1800 = vsel %vm1049, %v1781, 0
        %1802 = vmatprep.subr.bf16.mxu0 0
        %1803 = vmatpush1.bf16.msra.mxu0 0
        %1804 = vmatprep.subr.bf16.mxu0 0
        %1805 = vmatpush1.bf16.msra.mxu0 0
        %1806 = vmatprep.subr.bf16.mxu0 0
        %1807 = vmatpush1.bf16.msra.mxu0 0
        %1808 = vmatprep.subr.bf16.mxu0 0
        %1809 = vmatpush1.bf16.msra.mxu0 0
        %1810 = vmatprep.subr.bf16.mxu0 0
        %1811 = vmatpush1.bf16.msra.mxu0 0
        %1812 = vmatprep.subr.bf16.mxu0 0
        %1813 = vmatpush1.bf16.msra.mxu0 0
        %1814 = vmatprep.subr.bf16.mxu0 0
        %1815 = vmatpush1.bf16.msra.mxu0 %v1796
        %1816 = vmatprep.subr.bf16.mxu0 0
        %1817 = vmatpush1.bf16.msra.mxu0 %v1795
        %1818 = vmatprep.subr.bf16.mxu0 0
        %1819 = vmatpush2.bf16.msra.mxu0 0
        %1820 = vmatprep.subr.bf16.mxu0 0
        %1821 = vmatpush2.bf16.msra.mxu0 0
        %1822 = vmatprep.subr.bf16.mxu0 0
        %1823 = vmatpush2.bf16.msra.mxu0 0
        %1824 = vmatprep.subr.bf16.mxu0 0
        %1825 = vmatpush2.bf16.msra.mxu0 0
        %1826 = vmatprep.subr.bf16.mxu0 0
        %1827 = vmatpush2.bf16.msra.mxu0 0
        %1828 = vmatprep.subr.bf16.mxu0 0
        %1829 = vmatpush2.bf16.msra.mxu0 0
        %1830 = vmatprep.subr.bf16.mxu0 0
        %1831 = vmatpush2.bf16.msra.mxu0 0
        %1832 = vmatprep.subr.bf16.mxu0 0
        %1833 = vmatpush2.bf16.msra.mxu0 0
        %1834 = vmatprep.mubr.bf16.mxu0 0
        %1835 = vmatmul.mubr.bf16.gmra.mxu0 %v1800
        %v1836 = vpop.f32.mrf.mxu0
        %v1837 = vadd.f32 0.0, %v1836
        %v1838 = vpop.f32.mrf.mxu0
        %v1839 = vpop.f32.mrf.mxu0
        %v1840 = vpop.f32.mrf.mxu0
        %1841 = vdwg.mxu0
        %v1842 = vld [vmem:[%s975] sm:$0xf]
        %v1843 = vld [vmem:[%s975 + $0x4] sm:$0xf]
        %v1844 = vld [vmem:[%s975 + $0x8] sm:$0xf]
        %v1845 = vld [vmem:[%s975 + $0xc] sm:$0xf]
        %v1850 = vunpack.c.l.b16 %v1842
        %v1851 = vunpack.c.l.b16 %v1843
        %v1852 = vunpack.c.l.b16 %v1844
        %v1853 = vunpack.c.l.b16 %v1845
        %v1854 = vpack.c.b16 %v1851, %v1850
        %v1855 = vpack.c.b16 %v1853, %v1852
        %v1859 = vsel %vm1049, %v1782, 0
        %1861 = vmatprep.subr.bf16.mxu0 0
        %1862 = vmatpush1.bf16.msra.mxu0 0
        %1863 = vmatprep.subr.bf16.mxu0 0
        %1864 = vmatpush1.bf16.msra.mxu0 0
        %1865 = vmatprep.subr.bf16.mxu0 0
        %1866 = vmatpush1.bf16.msra.mxu0 0
        %1867 = vmatprep.subr.bf16.mxu0 0
        %1868 = vmatpush1.bf16.msra.mxu0 0
        %1869 = vmatprep.subr.bf16.mxu0 0
        %1870 = vmatpush1.bf16.msra.mxu0 0
        %1871 = vmatprep.subr.bf16.mxu0 0
        %1872 = vmatpush1.bf16.msra.mxu0 0
        %1873 = vmatprep.subr.bf16.mxu0 0
        %1874 = vmatpush1.bf16.msra.mxu0 %v1855
        %1875 = vmatprep.subr.bf16.mxu0 0
        %1876 = vmatpush1.bf16.msra.mxu0 %v1854
        %1877 = vmatprep.subr.bf16.mxu0 0
        %1878 = vmatpush2.bf16.msra.mxu0 0
        %1879 = vmatprep.subr.bf16.mxu0 0
        %1880 = vmatpush2.bf16.msra.mxu0 0
        %1881 = vmatprep.subr.bf16.mxu0 0
        %1882 = vmatpush2.bf16.msra.mxu0 0
        %1883 = vmatprep.subr.bf16.mxu0 0
        %1884 = vmatpush2.bf16.msra.mxu0 0
        %1885 = vmatprep.subr.bf16.mxu0 0
        %1886 = vmatpush2.bf16.msra.mxu0 0
        %1887 = vmatprep.subr.bf16.mxu0 0
        %1888 = vmatpush2.bf16.msra.mxu0 0
        %1889 = vmatprep.subr.bf16.mxu0 0
        %1890 = vmatpush2.bf16.msra.mxu0 0
        %1891 = vmatprep.subr.bf16.mxu0 0
        %1892 = vmatpush2.bf16.msra.mxu0 0
        %1893 = vmatprep.mubr.bf16.mxu0 0
        %1894 = vmatmul.mubr.bf16.gmra.mxu0 %v1859
        %v1895 = vpop.f32.mrf.mxu0
        %v1896 = vadd.f32 0.0, %v1895
        %v1897 = vpop.f32.mrf.mxu0
        %v1898 = vpop.f32.mrf.mxu0
        %v1899 = vpop.f32.mrf.mxu0
        %1900 = vdwg.mxu0
        %v1901 = vld [vmem:[%s980] sm:$0xf]
        %v1902 = vld [vmem:[%s980 + $0x4] sm:$0xf]
        %v1903 = vld [vmem:[%s980 + $0x8] sm:$0xf]
        %v1904 = vld [vmem:[%s980 + $0xc] sm:$0xf]
        %v1909 = vunpack.c.l.b16 %v1901
        %v1910 = vunpack.c.l.b16 %v1902
        %v1911 = vunpack.c.l.b16 %v1903
        %v1912 = vunpack.c.l.b16 %v1904
        %v1913 = vpack.c.b16 %v1910, %v1909
        %v1914 = vpack.c.b16 %v1912, %v1911
        %1917 = vmatprep.subr.bf16.mxu0 0
        %1918 = vmatpush1.bf16.msra.mxu0 0
        %1919 = vmatprep.subr.bf16.mxu0 0
        %1920 = vmatpush1.bf16.msra.mxu0 0
        %1921 = vmatprep.subr.bf16.mxu0 0
        %1922 = vmatpush1.bf16.msra.mxu0 0
        %1923 = vmatprep.subr.bf16.mxu0 0
        %1924 = vmatpush1.bf16.msra.mxu0 0
        %1925 = vmatprep.subr.bf16.mxu0 0
        %1926 = vmatpush1.bf16.msra.mxu0 0
        %1927 = vmatprep.subr.bf16.mxu0 0
        %1928 = vmatpush1.bf16.msra.mxu0 0
        %1929 = vmatprep.subr.bf16.mxu0 0
        %1930 = vmatpush1.bf16.msra.mxu0 %v1914
        %1931 = vmatprep.subr.bf16.mxu0 0
        %1932 = vmatpush1.bf16.msra.mxu0 %v1913
        %1933 = vmatprep.subr.bf16.mxu0 0
        %1934 = vmatpush2.bf16.msra.mxu0 0
        %1935 = vmatprep.subr.bf16.mxu0 0
        %1936 = vmatpush2.bf16.msra.mxu0 0
        %1937 = vmatprep.subr.bf16.mxu0 0
        %1938 = vmatpush2.bf16.msra.mxu0 0
        %1939 = vmatprep.subr.bf16.mxu0 0
        %1940 = vmatpush2.bf16.msra.mxu0 0
        %1941 = vmatprep.subr.bf16.mxu0 0
        %1942 = vmatpush2.bf16.msra.mxu0 0
        %1943 = vmatprep.subr.bf16.mxu0 0
        %1944 = vmatpush2.bf16.msra.mxu0 0
        %1945 = vmatprep.subr.bf16.mxu0 0
        %1946 = vmatpush2.bf16.msra.mxu0 0
        %1947 = vmatprep.subr.bf16.mxu0 0
        %1948 = vmatpush2.bf16.msra.mxu0 0
        %1949 = vmatprep.mubr.bf16.mxu0 0
        %1950 = vmatmul.mubr.bf16.gmra.mxu0 %v1859
        %v1951 = vpop.f32.mrf.mxu0
        %v1952 = vadd.f32 0.0, %v1951
        %v1953 = vpop.f32.mrf.mxu0
        %v1954 = vpop.f32.mrf.mxu0
        %v1955 = vpop.f32.mrf.mxu0
        %1956 = vdwg.mxu0
        %1958 = vrot.lane.b32.xlu0 %v1837, 120
        %v1959 = vpop.permute.xlu0 %1958
        %1961 = vrot.lane.b32.xlu0 %v1837, 112
        %v1962 = vpop.permute.xlu0 %1961
        %1964 = vrot.lane.b32.xlu0 %v1837, 104
        %v1965 = vpop.permute.xlu0 %1964
        %v1967 = vpack.c.bf16 %v1837, %v1837
        %v1968 = vpack.c.bf16 %v1959, %v1959
        %v1969 = vpack.c.bf16 %v1962, %v1962
        %v1970 = vpack.c.bf16 %v1965, %v1965
        %1972 = vrot.lane.b32.xlu0 %v1896, 120
        %v1973 = vpop.permute.xlu0 %1972
        %1975 = vrot.lane.b32.xlu0 %v1896, 112
        %v1976 = vpop.permute.xlu0 %1975
        %1978 = vrot.lane.b32.xlu0 %v1896, 104
        %v1979 = vpop.permute.xlu0 %1978
        %v1981 = vpack.c.bf16 %v1896, %v1896
        %v1982 = vpack.c.bf16 %v1973, %v1973
        %v1983 = vpack.c.bf16 %v1976, %v1976
        %v1984 = vpack.c.bf16 %v1979, %v1979
        %1986 = vrot.lane.b32.xlu0 %v1952, 120
        %v1987 = vpop.permute.xlu0 %1986
        %1989 = vrot.lane.b32.xlu0 %v1952, 112
        %v1990 = vpop.permute.xlu0 %1989
        %1992 = vrot.lane.b32.xlu0 %v1952, 104
        %v1993 = vpop.permute.xlu0 %1992
        %v1995 = vpack.c.bf16 %v1952, %v1952
        %v1996 = vpack.c.bf16 %v1987, %v1987
        %v1997 = vpack.c.bf16 %v1990, %v1990
        %v1998 = vpack.c.bf16 %v1993, %v1993
        %v2000 = vsel %vm1247, %v1967, 0
        %v2003 = vsel %vm1247, %v1981, 0
        %2005 = vmatprep.subr.bf16.mxu0 0
        %2006 = vmatpush1.bf16.xpose.msra.mxu0 0
        %2007 = vmatprep.subr.bf16.mxu0 0
        %2008 = vmatpush1.bf16.xpose.msra.mxu0 0
        %2009 = vmatprep.subr.bf16.mxu0 0
        %2010 = vmatpush1.bf16.xpose.msra.mxu0 0
        %2011 = vmatprep.subr.bf16.mxu0 0
        %2012 = vmatpush1.bf16.xpose.msra.mxu0 0
        %2013 = vmatprep.subr.bf16.mxu0 0
        %2014 = vmatpush1.bf16.xpose.msra.mxu0 0
        %2015 = vmatprep.subr.bf16.mxu0 0
        %2016 = vmatpush1.bf16.xpose.msra.mxu0 0
        %2017 = vmatprep.subr.bf16.mxu0 0
        %2018 = vmatpush1.bf16.xpose.msra.mxu0 0
        %2019 = vmatprep.subr.bf16.mxu0 0
        %2020 = vmatpush1.bf16.xpose.msra.mxu0 %v2003
        %2021 = vmatprep.subr.bf16.mxu0 0
        %2022 = vmatpush2.bf16.xpose.msra.mxu0 0
        %2023 = vmatprep.subr.bf16.mxu0 0
        %2024 = vmatpush2.bf16.xpose.msra.mxu0 0
        %2025 = vmatprep.subr.bf16.mxu0 0
        %2026 = vmatpush2.bf16.xpose.msra.mxu0 0
        %2027 = vmatprep.subr.bf16.mxu0 0
        %2028 = vmatpush2.bf16.xpose.msra.mxu0 0
        %2029 = vmatprep.subr.bf16.mxu0 0
        %2030 = vmatpush2.bf16.xpose.msra.mxu0 0
        %2031 = vmatprep.subr.bf16.mxu0 0
        %2032 = vmatpush2.bf16.xpose.msra.mxu0 0
        %2033 = vmatprep.subr.bf16.mxu0 0
        %2034 = vmatpush2.bf16.xpose.msra.mxu0 0
        %2035 = vmatprep.subr.bf16.mxu0 0
        %2036 = vmatpush2.bf16.xpose.msra.mxu0 0
        %2037 = vmatprep.mubr.bf16.mxu0 0
        %2038 = vmatmul.mubr.bf16.gmra.mxu0 %v2000
        %v2039 = vpop.f32.mrf.mxu0
        %v2040 = vadd.f32 0.0, %v2039
        %v2041 = vpop.f32.mrf.mxu0
        %v2042 = vpop.f32.mrf.mxu0
        %v2043 = vpop.f32.mrf.mxu0
        %2044 = vdwg.mxu0
        %v2046 = vsel %vm1247, %v1968, 0
        %v2049 = vsel %vm1247, %v1982, 0
        %2051 = vmatprep.subr.bf16.mxu0 0
        %2052 = vmatpush1.bf16.xpose.msra.mxu0 0
        %2053 = vmatprep.subr.bf16.mxu0 0
        %2054 = vmatpush1.bf16.xpose.msra.mxu0 0
        %2055 = vmatprep.subr.bf16.mxu0 0
        %2056 = vmatpush1.bf16.xpose.msra.mxu0 0
        %2057 = vmatprep.subr.bf16.mxu0 0
        %2058 = vmatpush1.bf16.xpose.msra.mxu0 0
        %2059 = vmatprep.subr.bf16.mxu0 0
        %2060 = vmatpush1.bf16.xpose.msra.mxu0 0
        %2061 = vmatprep.subr.bf16.mxu0 0
        %2062 = vmatpush1.bf16.xpose.msra.mxu0 0
        %2063 = vmatprep.subr.bf16.mxu0 0
        %2064 = vmatpush1.bf16.xpose.msra.mxu0 0
        %2065 = vmatprep.subr.bf16.mxu0 0
        %2066 = vmatpush1.bf16.xpose.msra.mxu0 %v2049
        %2067 = vmatprep.subr.bf16.mxu0 0
        %2068 = vmatpush2.bf16.xpose.msra.mxu0 0
        %2069 = vmatprep.subr.bf16.mxu0 0
        %2070 = vmatpush2.bf16.xpose.msra.mxu0 0
        %2071 = vmatprep.subr.bf16.mxu0 0
        %2072 = vmatpush2.bf16.xpose.msra.mxu0 0
        %2073 = vmatprep.subr.bf16.mxu0 0
        %2074 = vmatpush2.bf16.xpose.msra.mxu0 0
        %2075 = vmatprep.subr.bf16.mxu0 0
        %2076 = vmatpush2.bf16.xpose.msra.mxu0 0
        %2077 = vmatprep.subr.bf16.mxu0 0
        %2078 = vmatpush2.bf16.xpose.msra.mxu0 0
        %2079 = vmatprep.subr.bf16.mxu0 0
        %2080 = vmatpush2.bf16.xpose.msra.mxu0 0
        %2081 = vmatprep.subr.bf16.mxu0 0
        %2082 = vmatpush2.bf16.xpose.msra.mxu0 0
        %2083 = vmatprep.mubr.bf16.mxu0 0
        %2084 = vmatmul.mubr.bf16.gmra.mxu0 %v2046
        %v2085 = vpop.f32.mrf.mxu0
        %v2086 = vadd.f32 0.0, %v2085
        %v2087 = vpop.f32.mrf.mxu0
        %v2088 = vpop.f32.mrf.mxu0
        %v2089 = vpop.f32.mrf.mxu0
        %2090 = vdwg.mxu0
        %v2092 = vsel %vm1247, %v1969, 0
        %v2095 = vsel %vm1247, %v1983, 0
        %2097 = vmatprep.subr.bf16.mxu0 0
        %2098 = vmatpush1.bf16.xpose.msra.mxu0 0
        %2099 = vmatprep.subr.bf16.mxu0 0
        %2100 = vmatpush1.bf16.xpose.msra.mxu0 0
        %2101 = vmatprep.subr.bf16.mxu0 0
        %2102 = vmatpush1.bf16.xpose.msra.mxu0 0
        %2103 = vmatprep.subr.bf16.mxu0 0
        %2104 = vmatpush1.bf16.xpose.msra.mxu0 0
        %2105 = vmatprep.subr.bf16.mxu0 0
        %2106 = vmatpush1.bf16.xpose.msra.mxu0 0
        %2107 = vmatprep.subr.bf16.mxu0 0
        %2108 = vmatpush1.bf16.xpose.msra.mxu0 0
        %2109 = vmatprep.subr.bf16.mxu0 0
        %2110 = vmatpush1.bf16.xpose.msra.mxu0 0
        %2111 = vmatprep.subr.bf16.mxu0 0
        %2112 = vmatpush1.bf16.xpose.msra.mxu0 %v2095
        %2113 = vmatprep.subr.bf16.mxu0 0
        %2114 = vmatpush2.bf16.xpose.msra.mxu0 0
        %2115 = vmatprep.subr.bf16.mxu0 0
        %2116 = vmatpush2.bf16.xpose.msra.mxu0 0
        %2117 = vmatprep.subr.bf16.mxu0 0
        %2118 = vmatpush2.bf16.xpose.msra.mxu0 0
        %2119 = vmatprep.subr.bf16.mxu0 0
        %2120 = vmatpush2.bf16.xpose.msra.mxu0 0
        %2121 = vmatprep.subr.bf16.mxu0 0
        %2122 = vmatpush2.bf16.xpose.msra.mxu0 0
        %2123 = vmatprep.subr.bf16.mxu0 0
        %2124 = vmatpush2.bf16.xpose.msra.mxu0 0
        %2125 = vmatprep.subr.bf16.mxu0 0
        %2126 = vmatpush2.bf16.xpose.msra.mxu0 0
        %2127 = vmatprep.subr.bf16.mxu0 0
        %2128 = vmatpush2.bf16.xpose.msra.mxu0 0
        %2129 = vmatprep.mubr.bf16.mxu0 0
        %2130 = vmatmul.mubr.bf16.gmra.mxu0 %v2092
        %v2131 = vpop.f32.mrf.mxu0
        %v2132 = vadd.f32 0.0, %v2131
        %v2133 = vpop.f32.mrf.mxu0
        %v2134 = vpop.f32.mrf.mxu0
        %v2135 = vpop.f32.mrf.mxu0
        %2136 = vdwg.mxu0
        %v2138 = vsel %vm1247, %v1970, 0
        %v2141 = vsel %vm1247, %v1984, 0
        %2143 = vmatprep.subr.bf16.mxu0 0
        %2144 = vmatpush1.bf16.xpose.msra.mxu0 0
        %2145 = vmatprep.subr.bf16.mxu0 0
        %2146 = vmatpush1.bf16.xpose.msra.mxu0 0
        %2147 = vmatprep.subr.bf16.mxu0 0
        %2148 = vmatpush1.bf16.xpose.msra.mxu0 0
        %2149 = vmatprep.subr.bf16.mxu0 0
        %2150 = vmatpush1.bf16.xpose.msra.mxu0 0
        %2151 = vmatprep.subr.bf16.mxu0 0
        %2152 = vmatpush1.bf16.xpose.msra.mxu0 0
        %2153 = vmatprep.subr.bf16.mxu0 0
        %2154 = vmatpush1.bf16.xpose.msra.mxu0 0
        %2155 = vmatprep.subr.bf16.mxu0 0
        %2156 = vmatpush1.bf16.xpose.msra.mxu0 0
        %2157 = vmatprep.subr.bf16.mxu0 0
        %2158 = vmatpush1.bf16.xpose.msra.mxu0 %v2141
        %2159 = vmatprep.subr.bf16.mxu0 0
        %2160 = vmatpush2.bf16.xpose.msra.mxu0 0
        %2161 = vmatprep.subr.bf16.mxu0 0
        %2162 = vmatpush2.bf16.xpose.msra.mxu0 0
        %2163 = vmatprep.subr.bf16.mxu0 0
        %2164 = vmatpush2.bf16.xpose.msra.mxu0 0
        %2165 = vmatprep.subr.bf16.mxu0 0
        %2166 = vmatpush2.bf16.xpose.msra.mxu0 0
        %2167 = vmatprep.subr.bf16.mxu0 0
        %2168 = vmatpush2.bf16.xpose.msra.mxu0 0
        %2169 = vmatprep.subr.bf16.mxu0 0
        %2170 = vmatpush2.bf16.xpose.msra.mxu0 0
        %2171 = vmatprep.subr.bf16.mxu0 0
        %2172 = vmatpush2.bf16.xpose.msra.mxu0 0
        %2173 = vmatprep.subr.bf16.mxu0 0
        %2174 = vmatpush2.bf16.xpose.msra.mxu0 0
        %2175 = vmatprep.mubr.bf16.mxu0 0
        %2176 = vmatmul.mubr.bf16.gmra.mxu0 %v2138
        %v2177 = vpop.f32.mrf.mxu0
        %v2178 = vadd.f32 0.0, %v2177
        %v2179 = vpop.f32.mrf.mxu0
        %v2180 = vpop.f32.mrf.mxu0
        %v2181 = vpop.f32.mrf.mxu0
        %2182 = vdwg.mxu0
        %v2183 = vmul.f32 %v2040, 0.35355338
        %v2184 = vmul.f32 %v2086, 0.35355338
        %v2185 = vmul.f32 %v2132, 0.35355338
        %v2186 = vmul.f32 %v2178, 0.35355338
        %v2187 = vadd.f32 %v2183, %v1031
        %v2188 = vadd.f32 %v2184, %v1031
        %v2189 = vadd.f32 %v2185, %v1031
        %v2190 = vadd.f32 %v2186, %v1031
        %v2191 = vsel %vm1247, %v2187, -inf
        %2192 = vmax.xlane.f32.xlu0 %v2191
        %v2193 = vpop.xlane.xlu0 %2192
        %v2194 = vsel %vm1247, %v2188, -inf
        %2195 = vmax.xlane.f32.xlu0 %v2194
        %v2196 = vpop.xlane.xlu0 %2195
        %v2197 = vsel %vm1247, %v2189, -inf
        %2198 = vmax.xlane.f32.xlu0 %v2197
        %v2199 = vpop.xlane.xlu0 %2198
        %v2200 = vsel %vm1247, %v2190, -inf
        %2201 = vmax.xlane.f32.xlu0 %v2200
        %v2202 = vpop.xlane.xlu0 %2201
        %v2203 = vsub.f32 %v2187, %v2193
        %v2204 = vsub.f32 %v2188, %v2196
        %v2205 = vsub.f32 %v2189, %v2199
        %v2206 = vsub.f32 %v2190, %v2202
        %v2207 = vmul.f32 %v2203, 1.442695
        %v2208 = vpow.pop %v2207
        %v2209 = vmul.f32 %v2204, 1.442695
        %v2210 = vpow.pop %v2209
        %v2211 = vmul.f32 %v2205, 1.442695
        %v2212 = vpow.pop %v2211
        %v2213 = vmul.f32 %v2206, 1.442695
        %v2214 = vpow.pop %v2213
        %v2215 = vsel %vm1247, %v2208, 0.0
        %2216 = vadd.xlane.f32.xlu0 %v2215
        %v2217 = vpop.xlane.xlu0 %2216
        %v2218 = vsel %vm1247, %v2210, 0.0
        %2219 = vadd.xlane.f32.xlu0 %v2218
        %v2220 = vpop.xlane.xlu0 %2219
        %v2221 = vsel %vm1247, %v2212, 0.0
        %2222 = vadd.xlane.f32.xlu0 %v2221
        %v2223 = vpop.xlane.xlu0 %2222
        %v2224 = vsel %vm1247, %v2214, 0.0
        %2225 = vadd.xlane.f32.xlu0 %v2224
        %v2226 = vpop.xlane.xlu0 %2225
        %v2227 = vrcp.pop %v2217
        %v2228 = vrcp.pop %v2220
        %v2229 = vrcp.pop %v2223
        %v2230 = vrcp.pop %v2226
        %v2231 = vmul.f32 %v2208, %v2227
        %v2232 = vmul.f32 %v2210, %v2228
        %v2233 = vmul.f32 %v2212, %v2229
        %v2234 = vmul.f32 %v2214, %v2230
        %v2235 = vpack.c.bf16 %v2231, %v2231
        %v2236 = vpack.c.bf16 %v2232, %v2232
        %v2237 = vpack.c.bf16 %v2233, %v2233
        %v2238 = vpack.c.bf16 %v2234, %v2234
        %v2240 = vsel %vm1247, %v2235, 0
        %v2243 = vsel %vm1491, %v1995, 0
        %2245 = vmatprep.subr.bf16.mxu0 0
        %2246 = vmatpush1.bf16.msra.mxu0 0
        %2247 = vmatprep.subr.bf16.mxu0 0
        %2248 = vmatpush1.bf16.msra.mxu0 0
        %2249 = vmatprep.subr.bf16.mxu0 0
        %2250 = vmatpush1.bf16.msra.mxu0 0
        %2251 = vmatprep.subr.bf16.mxu0 0
        %2252 = vmatpush1.bf16.msra.mxu0 0
        %2253 = vmatprep.subr.bf16.mxu0 0
        %2254 = vmatpush1.bf16.msra.mxu0 0
        %2255 = vmatprep.subr.bf16.mxu0 0
        %2256 = vmatpush1.bf16.msra.mxu0 0
        %2257 = vmatprep.subr.bf16.mxu0 0
        %2258 = vmatpush1.bf16.msra.mxu0 0
        %2259 = vmatprep.subr.bf16.mxu0 0
        %2260 = vmatpush1.bf16.msra.mxu0 %v2243
        %2261 = vmatprep.subr.bf16.mxu0 0
        %2262 = vmatpush2.bf16.msra.mxu0 0
        %2263 = vmatprep.subr.bf16.mxu0 0
        %2264 = vmatpush2.bf16.msra.mxu0 0
        %2265 = vmatprep.subr.bf16.mxu0 0
        %2266 = vmatpush2.bf16.msra.mxu0 0
        %2267 = vmatprep.subr.bf16.mxu0 0
        %2268 = vmatpush2.bf16.msra.mxu0 0
        %2269 = vmatprep.subr.bf16.mxu0 0
        %2270 = vmatpush2.bf16.msra.mxu0 0
        %2271 = vmatprep.subr.bf16.mxu0 0
        %2272 = vmatpush2.bf16.msra.mxu0 0
        %2273 = vmatprep.subr.bf16.mxu0 0
        %2274 = vmatpush2.bf16.msra.mxu0 0
        %2275 = vmatprep.subr.bf16.mxu0 0
        %2276 = vmatpush2.bf16.msra.mxu0 0
        %2277 = vmatprep.mubr.bf16.mxu0 0
        %2278 = vmatmul.mubr.bf16.gmra.mxu0 %v2240
        %v2279 = vpop.f32.mrf.mxu0
        %v2280 = vadd.f32 0.0, %v2279
        %v2281 = vpop.f32.mrf.mxu0
        %v2282 = vpop.f32.mrf.mxu0
        %v2283 = vpop.f32.mrf.mxu0
        %2284 = vdwg.mxu0
        %v2286 = vsel %vm1247, %v2236, 0
        %v2289 = vsel %vm1491, %v1996, 0
        %2291 = vmatprep.subr.bf16.mxu0 0
        %2292 = vmatpush1.bf16.msra.mxu0 0
        %2293 = vmatprep.subr.bf16.mxu0 0
        %2294 = vmatpush1.bf16.msra.mxu0 0
        %2295 = vmatprep.subr.bf16.mxu0 0
        %2296 = vmatpush1.bf16.msra.mxu0 0
        %2297 = vmatprep.subr.bf16.mxu0 0
        %2298 = vmatpush1.bf16.msra.mxu0 0
        %2299 = vmatprep.subr.bf16.mxu0 0
        %2300 = vmatpush1.bf16.msra.mxu0 0
        %2301 = vmatprep.subr.bf16.mxu0 0
        %2302 = vmatpush1.bf16.msra.mxu0 0
        %2303 = vmatprep.subr.bf16.mxu0 0
        %2304 = vmatpush1.bf16.msra.mxu0 0
        %2305 = vmatprep.subr.bf16.mxu0 0
        %2306 = vmatpush1.bf16.msra.mxu0 %v2289
        %2307 = vmatprep.subr.bf16.mxu0 0
        %2308 = vmatpush2.bf16.msra.mxu0 0
        %2309 = vmatprep.subr.bf16.mxu0 0
        %2310 = vmatpush2.bf16.msra.mxu0 0
        %2311 = vmatprep.subr.bf16.mxu0 0
        %2312 = vmatpush2.bf16.msra.mxu0 0
        %2313 = vmatprep.subr.bf16.mxu0 0
        %2314 = vmatpush2.bf16.msra.mxu0 0
        %2315 = vmatprep.subr.bf16.mxu0 0
        %2316 = vmatpush2.bf16.msra.mxu0 0
        %2317 = vmatprep.subr.bf16.mxu0 0
        %2318 = vmatpush2.bf16.msra.mxu0 0
        %2319 = vmatprep.subr.bf16.mxu0 0
        %2320 = vmatpush2.bf16.msra.mxu0 0
        %2321 = vmatprep.subr.bf16.mxu0 0
        %2322 = vmatpush2.bf16.msra.mxu0 0
        %2323 = vmatprep.mubr.bf16.mxu0 0
        %2324 = vmatmul.mubr.bf16.gmra.mxu0 %v2286
        %v2325 = vpop.f32.mrf.mxu0
        %v2326 = vadd.f32 0.0, %v2325
        %v2327 = vpop.f32.mrf.mxu0
        %v2328 = vpop.f32.mrf.mxu0
        %v2329 = vpop.f32.mrf.mxu0
        %2330 = vdwg.mxu0
        %v2332 = vsel %vm1247, %v2237, 0
        %v2335 = vsel %vm1491, %v1997, 0
        %2337 = vmatprep.subr.bf16.mxu0 0
        %2338 = vmatpush1.bf16.msra.mxu0 0
        %2339 = vmatprep.subr.bf16.mxu0 0
        %2340 = vmatpush1.bf16.msra.mxu0 0
        %2341 = vmatprep.subr.bf16.mxu0 0
        %2342 = vmatpush1.bf16.msra.mxu0 0
        %2343 = vmatprep.subr.bf16.mxu0 0
        %2344 = vmatpush1.bf16.msra.mxu0 0
        %2345 = vmatprep.subr.bf16.mxu0 0
        %2346 = vmatpush1.bf16.msra.mxu0 0
        %2347 = vmatprep.subr.bf16.mxu0 0
        %2348 = vmatpush1.bf16.msra.mxu0 0
        %2349 = vmatprep.subr.bf16.mxu0 0
        %2350 = vmatpush1.bf16.msra.mxu0 0
        %2351 = vmatprep.subr.bf16.mxu0 0
        %2352 = vmatpush1.bf16.msra.mxu0 %v2335
        %2353 = vmatprep.subr.bf16.mxu0 0
        %2354 = vmatpush2.bf16.msra.mxu0 0
        %2355 = vmatprep.subr.bf16.mxu0 0
        %2356 = vmatpush2.bf16.msra.mxu0 0
        %2357 = vmatprep.subr.bf16.mxu0 0
        %2358 = vmatpush2.bf16.msra.mxu0 0
        %2359 = vmatprep.subr.bf16.mxu0 0
        %2360 = vmatpush2.bf16.msra.mxu0 0
        %2361 = vmatprep.subr.bf16.mxu0 0
        %2362 = vmatpush2.bf16.msra.mxu0 0
        %2363 = vmatprep.subr.bf16.mxu0 0
        %2364 = vmatpush2.bf16.msra.mxu0 0
        %2365 = vmatprep.subr.bf16.mxu0 0
        %2366 = vmatpush2.bf16.msra.mxu0 0
        %2367 = vmatprep.subr.bf16.mxu0 0
        %2368 = vmatpush2.bf16.msra.mxu0 0
        %2369 = vmatprep.mubr.bf16.mxu0 0
        %2370 = vmatmul.mubr.bf16.gmra.mxu0 %v2332
        %v2371 = vpop.f32.mrf.mxu0
        %v2372 = vadd.f32 0.0, %v2371
        %v2373 = vpop.f32.mrf.mxu0
        %v2374 = vpop.f32.mrf.mxu0
        %v2375 = vpop.f32.mrf.mxu0
        %2376 = vdwg.mxu0
        %v2378 = vsel %vm1247, %v2238, 0
        %v2381 = vsel %vm1491, %v1998, 0
        %2383 = vmatprep.subr.bf16.mxu0 0
        %2384 = vmatpush1.bf16.msra.mxu0 0
        %2385 = vmatprep.subr.bf16.mxu0 0
        %2386 = vmatpush1.bf16.msra.mxu0 0
        %2387 = vmatprep.subr.bf16.mxu0 0
        %2388 = vmatpush1.bf16.msra.mxu0 0
        %2389 = vmatprep.subr.bf16.mxu0 0
        %2390 = vmatpush1.bf16.msra.mxu0 0
        %2391 = vmatprep.subr.bf16.mxu0 0
        %2392 = vmatpush1.bf16.msra.mxu0 0
        %2393 = vmatprep.subr.bf16.mxu0 0
        %2394 = vmatpush1.bf16.msra.mxu0 0
        %2395 = vmatprep.subr.bf16.mxu0 0
        %2396 = vmatpush1.bf16.msra.mxu0 0
        %2397 = vmatprep.subr.bf16.mxu0 0
        %2398 = vmatpush1.bf16.msra.mxu0 %v2381
        %2399 = vmatprep.subr.bf16.mxu0 0
        %2400 = vmatpush2.bf16.msra.mxu0 0
        %2401 = vmatprep.subr.bf16.mxu0 0
        %2402 = vmatpush2.bf16.msra.mxu0 0
        %2403 = vmatprep.subr.bf16.mxu0 0
        %2404 = vmatpush2.bf16.msra.mxu0 0
        %2405 = vmatprep.subr.bf16.mxu0 0
        %2406 = vmatpush2.bf16.msra.mxu0 0
        %2407 = vmatprep.subr.bf16.mxu0 0
        %2408 = vmatpush2.bf16.msra.mxu0 0
        %2409 = vmatprep.subr.bf16.mxu0 0
        %2410 = vmatpush2.bf16.msra.mxu0 0
        %2411 = vmatprep.subr.bf16.mxu0 0
        %2412 = vmatpush2.bf16.msra.mxu0 0
        %2413 = vmatprep.subr.bf16.mxu0 0
        %2414 = vmatpush2.bf16.msra.mxu0 0
        %2415 = vmatprep.mubr.bf16.mxu0 0
        %2416 = vmatmul.mubr.bf16.gmra.mxu0 %v2378
        %v2417 = vpop.f32.mrf.mxu0
        %v2418 = vadd.f32 0.0, %v2417
        %v2419 = vpop.f32.mrf.mxu0
        %v2420 = vpop.f32.mrf.mxu0
        %v2421 = vpop.f32.mrf.mxu0
        %2422 = vdwg.mxu0
        %2424 = vrot.lane.b32.xlu0 %v2326, 8
        %v2425 = vpop.permute.xlu0 %2424
        %2428 = vrot.lane.b32.xlu0 %v2372, 16
        %v2429 = vpop.permute.xlu0 %2428
        %2432 = vrot.lane.b32.xlu0 %v2418, 24
        %v2433 = vpop.permute.xlu0 %2432
        %v2435 = vsel %vm1247, %v2280, %v2425
        %v2436 = vsel %vm1686, %v2435, %v2429
        %v2437 = vsel %vm1688, %v2436, %v2433
        %v2438 = vpack.c.bf16 %v2437, %v2437
        %v2439 = vld [vmem:[%s985] sm:$0xf]
        %v2440 = vld [vmem:[%s985 + $0x4] sm:$0xf]
        %v2441 = vld [vmem:[%s985 + $0x8] sm:$0xf]
        %v2442 = vld [vmem:[%s985 + $0xc] sm:$0xf]
        %v2447 = vunpack.c.l.b16 %v2439
        %v2448 = vunpack.c.l.b16 %v2440
        %v2449 = vunpack.c.l.b16 %v2441
        %v2450 = vunpack.c.l.b16 %v2442
        %v2451 = vpack.c.b16 %v2448, %v2447
        %v2452 = vpack.c.b16 %v2450, %v2449
        %v2456 = vsel %vm1049, %v2438, 0
        %2458 = vmatprep.subr.bf16.mxu0 0
        %2459 = vmatpush1.bf16.msra.mxu0 0
        %2460 = vmatprep.subr.bf16.mxu0 0
        %2461 = vmatpush1.bf16.msra.mxu0 0
        %2462 = vmatprep.subr.bf16.mxu0 0
        %2463 = vmatpush1.bf16.msra.mxu0 0
        %2464 = vmatprep.subr.bf16.mxu0 0
        %2465 = vmatpush1.bf16.msra.mxu0 0
        %2466 = vmatprep.subr.bf16.mxu0 0
        %2467 = vmatpush1.bf16.msra.mxu0 0
        %2468 = vmatprep.subr.bf16.mxu0 0
        %2469 = vmatpush1.bf16.msra.mxu0 0
        %2470 = vmatprep.subr.bf16.mxu0 0
        %2471 = vmatpush1.bf16.msra.mxu0 %v2452
        %2472 = vmatprep.subr.bf16.mxu0 0
        %2473 = vmatpush1.bf16.msra.mxu0 %v2451
        %2474 = vmatprep.subr.bf16.mxu0 0
        %2475 = vmatpush2.bf16.msra.mxu0 0
        %2476 = vmatprep.subr.bf16.mxu0 0
        %2477 = vmatpush2.bf16.msra.mxu0 0
        %2478 = vmatprep.subr.bf16.mxu0 0
        %2479 = vmatpush2.bf16.msra.mxu0 0
        %2480 = vmatprep.subr.bf16.mxu0 0
        %2481 = vmatpush2.bf16.msra.mxu0 0
        %2482 = vmatprep.subr.bf16.mxu0 0
        %2483 = vmatpush2.bf16.msra.mxu0 0
        %2484 = vmatprep.subr.bf16.mxu0 0
        %2485 = vmatpush2.bf16.msra.mxu0 0
        %2486 = vmatprep.subr.bf16.mxu0 0
        %2487 = vmatpush2.bf16.msra.mxu0 0
        %2488 = vmatprep.subr.bf16.mxu0 0
        %2489 = vmatpush2.bf16.msra.mxu0 0
        %2490 = vmatprep.mubr.bf16.mxu0 0
        %2491 = vmatmul.mubr.bf16.gmra.mxu0 %v2456
        %v2492 = vpop.f32.mrf.mxu0
        %v2493 = vadd.f32 0.0, %v2492
        %v2494 = vpop.f32.mrf.mxu0
        %v2495 = vpop.f32.mrf.mxu0
        %v2496 = vpop.f32.mrf.mxu0
        %2497 = vdwg.mxu0
        %v2498 = vadd.f32 %v1780, %v2493
        %v2499 = vsel %vm1049, %v2498, 0.0
        %2500 = vadd.xlane.f32.xlu0 %v2499
        %v2501 = vpop.xlane.xlu0 %2500
        %v2502 = vmul.f32 %v2501, %v1754
        %v2503 = vsub.f32 %v2498, %v2502
        %v2504 = vmul.f32 %v2503, %v2503
        %v2505 = vsel %vm1049, %v2504, 0.0
        %2506 = vadd.xlane.f32.xlu0 %v2505
        %v2507 = vpop.xlane.xlu0 %2506
        %v2508 = vmul.f32 %v2507, %v1754
        %v2509 = vadd.f32 %v2508, 1e-05
        %v2510 = vrsqrt.pop %v2509
        %v2511 = vmul.f32 %v2503, %v2510
        %v2512 = vld [vmem:[%s1010] sm:$0x1]
        %v2514 = vlaneseq
        %v2515 = vshrl.u32 %v2514, 7
        %v2516 = vsub.s32 0, %v2515
        %v2517 = vrot.slane %v2512, %v2516
        %v2519 = vmul.f32 %v2511, %v2517
        %v2520 = vld [vmem:[%s1013] sm:$0x1]
        %v2522 = vlaneseq
        %v2523 = vshrl.u32 %v2522, 7
        %v2524 = vsub.s32 0, %v2523
        %v2525 = vrot.slane %v2520, %v2524
        %v2527 = vadd.f32 %v2519, %v2525
        %v2528 = vpack.c.bf16 %v2527, %v2527
        %v2529 = vld [vmem:[%s990] sm:$0xf]
        %v2530 = vld [vmem:[%s990 + $0x4] sm:$0xf]
        %v2531 = vld [vmem:[%s990 + $0x8] sm:$0xf]
        %v2532 = vld [vmem:[%s990 + $0xc] sm:$0xf]
        %v2533 = vld [vmem:[%s993] sm:$0x1]
        %v2535 = vlaneseq
        %v2536 = vshrl.u32 %v2535, 7
        %v2537 = vsub.s32 0, %v2536
        %v2538 = vrot.slane %v2533, %v2537
        %v2544 = vunpack.c.l.b16 %v2529
        %v2545 = vunpack.c.l.b16 %v2530
        %v2546 = vunpack.c.l.b16 %v2531
        %v2547 = vunpack.c.l.b16 %v2532
        %v2548 = vpack.c.b16 %v2545, %v2544
        %v2549 = vpack.c.b16 %v2547, %v2546
        %v2553 = vsel %vm1049, %v2528, 0
        %2555 = vmatprep.subr.bf16.mxu0 0
        %2556 = vmatpush1.bf16.msra.mxu0 0
        %2557 = vmatprep.subr.bf16.mxu0 0
        %2558 = vmatpush1.bf16.msra.mxu0 0
        %2559 = vmatprep.subr.bf16.mxu0 0
        %2560 = vmatpush1.bf16.msra.mxu0 0
        %2561 = vmatprep.subr.bf16.mxu0 0
        %2562 = vmatpush1.bf16.msra.mxu0 0
        %2563 = vmatprep.subr.bf16.mxu0 0
        %2564 = vmatpush1.bf16.msra.mxu0 0
        %2565 = vmatprep.subr.bf16.mxu0 0
        %2566 = vmatpush1.bf16.msra.mxu0 0
        %2567 = vmatprep.subr.bf16.mxu0 0
        %2568 = vmatpush1.bf16.msra.mxu0 %v2549
        %2569 = vmatprep.subr.bf16.mxu0 0
        %2570 = vmatpush1.bf16.msra.mxu0 %v2548
        %2571 = vmatprep.subr.bf16.mxu0 0
        %2572 = vmatpush2.bf16.msra.mxu0 0
        %2573 = vmatprep.subr.bf16.mxu0 0
        %2574 = vmatpush2.bf16.msra.mxu0 0
        %2575 = vmatprep.subr.bf16.mxu0 0
        %2576 = vmatpush2.bf16.msra.mxu0 0
        %2577 = vmatprep.subr.bf16.mxu0 0
        %2578 = vmatpush2.bf16.msra.mxu0 0
        %2579 = vmatprep.subr.bf16.mxu0 0
        %2580 = vmatpush2.bf16.msra.mxu0 0
        %2581 = vmatprep.subr.bf16.mxu0 0
        %2582 = vmatpush2.bf16.msra.mxu0 0
        %2583 = vmatprep.subr.bf16.mxu0 0
        %2584 = vmatpush2.bf16.msra.mxu0 0
        %2585 = vmatprep.subr.bf16.mxu0 0
        %2586 = vmatpush2.bf16.msra.mxu0 0
        %2587 = vmatprep.mubr.bf16.mxu0 0
        %2588 = vmatmul.mubr.bf16.gmra.mxu0 %v2553
        %v2589 = vpop.f32.mrf.mxu0
        %v2590 = vadd.f32 %v2538, %v2589
        %v2591 = vpop.f32.mrf.mxu0
        %v2592 = vpop.f32.mrf.mxu0
        %v2593 = vpop.f32.mrf.mxu0
        %2594 = vdwg.mxu0
        %v2595 = vmax.f32 %v2590, 0.0
        %v2596 = vpack.c.bf16 %v2595, %v2595
        %v2597 = vld [vmem:[%s998] sm:$0xf]
        %v2598 = vld [vmem:[%s998 + $0x4] sm:$0xf]
        %v2599 = vld [vmem:[%s998 + $0x8] sm:$0xf]
        %v2600 = vld [vmem:[%s998 + $0xc] sm:$0xf]
        %v2601 = vld [vmem:[%s998 + $0x10] sm:$0xf]
        %v2602 = vld [vmem:[%s998 + $0x14] sm:$0xf]
        %v2603 = vld [vmem:[%s998 + $0x18] sm:$0xf]
        %v2604 = vld [vmem:[%s998 + $0x1c] sm:$0xf]
        %v2605 = vld [vmem:[%s1001] sm:$0x1]
        %v2607 = vlaneseq
        %v2608 = vshrl.u32 %v2607, 7
        %v2609 = vsub.s32 0, %v2608
        %v2610 = vrot.slane %v2605, %v2609
        %v2620 = vunpack.c.l.b16 %v2597
        %v2621 = vunpack.c.l.b16 %v2598
        %v2622 = vunpack.c.l.b16 %v2599
        %v2623 = vunpack.c.l.b16 %v2600
        %v2624 = vunpack.c.l.b16 %v2601
        %v2625 = vunpack.c.l.b16 %v2602
        %v2626 = vunpack.c.l.b16 %v2603
        %v2627 = vunpack.c.l.b16 %v2604
        %v2628 = vpack.c.b16 %v2621, %v2620
        %v2629 = vpack.c.b16 %v2623, %v2622
        %v2630 = vpack.c.b16 %v2625, %v2624
        %v2631 = vpack.c.b16 %v2627, %v2626
        %vm2636 = vcmask 523264
        %v2638 = vsel %vm2636, %v2596, 0
        %2640 = vmatprep.subr.bf16.mxu0 0
        %2641 = vmatpush1.bf16.msra.mxu0 0
        %2642 = vmatprep.subr.bf16.mxu0 0
        %2643 = vmatpush1.bf16.msra.mxu0 0
        %2644 = vmatprep.subr.bf16.mxu0 0
        %2645 = vmatpush1.bf16.msra.mxu0 0
        %2646 = vmatprep.subr.bf16.mxu0 0
        %2647 = vmatpush1.bf16.msra.mxu0 0
        %2648 = vmatprep.subr.bf16.mxu0 0
        %2649 = vmatpush1.bf16.msra.mxu0 %v2631
        %2650 = vmatprep.subr.bf16.mxu0 0
        %2651 = vmatpush1.bf16.msra.mxu0 %v2630
        %2652 = vmatprep.subr.bf16.mxu0 0
        %2653 = vmatpush1.bf16.msra.mxu0 %v2629
        %2654 = vmatprep.subr.bf16.mxu0 0
        %2655 = vmatpush1.bf16.msra.mxu0 %v2628
        %2656 = vmatprep.subr.bf16.mxu0 0
        %2657 = vmatpush2.bf16.msra.mxu0 0
        %2658 = vmatprep.subr.bf16.mxu0 0
        %2659 = vmatpush2.bf16.msra.mxu0 0
        %2660 = vmatprep.subr.bf16.mxu0 0
        %2661 = vmatpush2.bf16.msra.mxu0 0
        %2662 = vmatprep.subr.bf16.mxu0 0
        %2663 = vmatpush2.bf16.msra.mxu0 0
        %2664 = vmatprep.subr.bf16.mxu0 0
        %2665 = vmatpush2.bf16.msra.mxu0 0
        %2666 = vmatprep.subr.bf16.mxu0 0
        %2667 = vmatpush2.bf16.msra.mxu0 0
        %2668 = vmatprep.subr.bf16.mxu0 0
        %2669 = vmatpush2.bf16.msra.mxu0 0
        %2670 = vmatprep.subr.bf16.mxu0 0
        %2671 = vmatpush2.bf16.msra.mxu0 0
        %2672 = vmatprep.mubr.bf16.mxu0 0
        %2673 = vmatmul.mubr.bf16.gmra.mxu0 %v2638
        %v2674 = vpop.f32.mrf.mxu0
        %v2675 = vadd.f32 %v2610, %v2674
        %v2676 = vpop.f32.mrf.mxu0
        %v2677 = vpop.f32.mrf.mxu0
        %v2678 = vpop.f32.mrf.mxu0
        %2679 = vdwg.mxu0
        %v2680 = vadd.f32 %v2527, %v2675
        %v2681 = vsel %vm1049, %v2680, 0.0
        %2682 = vadd.xlane.f32.xlu0 %v2681
        %v2683 = vpop.xlane.xlu0 %2682
        %v2684 = vmul.f32 %v2683, %v1754
        %v2685 = vsub.f32 %v2680, %v2684
        %v2686 = vmul.f32 %v2685, %v2685
        %v2687 = vsel %vm1049, %v2686, 0.0
        %2688 = vadd.xlane.f32.xlu0 %v2687
        %v2689 = vpop.xlane.xlu0 %2688
        %v2690 = vmul.f32 %v2689, %v1754
        %v2691 = vadd.f32 %v2690, 1e-05
        %v2692 = vrsqrt.pop %v2691
        %v2693 = vmul.f32 %v2685, %v2692
        %v2694 = vld [vmem:[%s1016] sm:$0x1]
        %v2696 = vlaneseq
        %v2697 = vshrl.u32 %v2696, 7
        %v2698 = vsub.s32 0, %v2697
        %v2699 = vrot.slane %v2694, %v2698
        %v2701 = vmul.f32 %v2693, %v2699
        %v2702 = vld [vmem:[%s1019] sm:$0x1]
        %v2704 = vlaneseq
        %v2705 = vshrl.u32 %v2704, 7
        %v2706 = vsub.s32 0, %v2705
        %v2707 = vrot.slane %v2702, %v2706
        %v2709 = vadd.f32 %v2701, %v2707
        %2710 = vst.msk [vmem:[%s937] sm:$0xff] %vm1049, %v2709
        %s2711 = sand.u32 %s618, 1
        %s2712 = scalar_lea.sflag [#allocation3], %s2711
        %s2713 = sand.u32 %s618, 1
        %s2714 = smul.addr %s2713, 8
        %s2715 = scalar_lea.vmem [#allocation2], %s2714
        // Predicated region
        $region113: #{decoder_forward.1} parent=107 // pred_check
          %p2716 = pneg %p628
        $region114: #{decoder_forward.1} parent=107 // pred_check_branch
          %2718 = sbr.rel (%p2716) target = $region116
        $region115: #{decoder_forward.1} parent=107 // pred_region
          %s2720 = ssub.s32 128, 128
          %2721 = vsyncadd %s2712, %s2720
          %s2722 = smul.addr %s40, 128
          %s2723 = scalar_lea.hbm %s22, %s2722
          %s2725 = sshll.u32 %s2715, 4
          %s2726 = int_to_ptr.vmem [resolvable:$true] %s2725
          %2728 = dma.vmem_to_hbm [thread:$0]  %s2726, 128, %s2723, %s2712
        $region116: #{decoder_forward.1} parent=107 // pred_fallthru
          _
      $region108: #{decoder_forward.1} parent=5 // pred_fallthru
        _
      %p2729 = scmp.le.s32.totalorder 2, %s31
      // Predicated region
      $region117: #{decoder_forward.1} parent=5 // pred_check
        %p2730 = pneg %p2729
      $region118: #{decoder_forward.1} parent=5 // pred_check_branch
        %2732 = sbr.rel (%p2730) target = $region120
      $region119: #{decoder_forward.1} parent=5 // pred_region
        %s2733 = ssub.s32 %s31, 2
        // Predicated region
        $region121: #{decoder_forward.1} parent=119 // pred_check
          %p2734 = pneg %p634
        $region122: #{decoder_forward.1} parent=119 // pred_check_branch
          %2736 = sbr.rel (%p2734) target = $region124
        $region123: #{decoder_forward.1} parent=119 // pred_region
          %s2737 = sand.u32 %s619, 1
          %s2738 = scalar_lea.sflag [#allocation3], %s2737
          %s2739 = sand.u32 %s619, 1
          %s2740 = smul.addr %s2739, 8
          %s2741 = scalar_lea.vmem [#allocation2], %s2740
          %2742 = dma.done %s2738, 128
        $region124: #{decoder_forward.1} parent=119 // pred_fallthru
          _
      $region120: #{decoder_forward.1} parent=5 // pred_fallthru
        _
    $region6: #{decoder_forward.1} parent=1 // loop_footer
      %s35 = sadd.s32 1, %s31
    $region7: #{decoder_forward.1} parent=1 // loop_footer_branch
      %30 = sbr.rel target = $region3
    $region8: #{decoder_forward.1} parent=1 // loop_exit
      _
    %2743 = vsyncpa [#allocation3], 1
    %s2744 = scalar_lea.sflag [#allocation3], 1
    %2745 = vsyncpa %s2744, 1

</llo_original>
